<compile_context>
chip_gen: v7x
topology: tpu7x:2x2x1
jax: 0.10.0
libtpu: 0.0.40
codegen_flags: <defaults>
</compile_context>

<pallas_src>
import math

import jax
import jax.numpy as jnp
import numpy as np
from jax.experimental import pallas as pl
from jax.experimental.pallas import tpu as pltpu

EPS = 1e-5


def hlayer_kernel(xg_ref, xf_ref, w1g_ref, w1f_ref, b1_ref, w2_ref, b2_ref,
                  out_ref, pad_ref):
    """Fused HLayer forward for one batch image (one grid step).

    xg_ref : (H, W, Cg)        prev_g activations (NHWC, N squeezed)
    xf_ref : (H, W, Cf)        f activations
    w1g    : (Cg, Cout)        1x1 conv weight rows for prev_g (BN1 folded in)
    w1f    : (Cf, Cout)        1x1 conv weight rows for f      (BN1 folded in)
    b1     : (1, Cout)  f32    folded conv1 bias + BN1 shift
    w2     : (9, Cout, Cout)   3x3 conv weight, k = ky*3+kx, (Cin, Cout) per tap,
                               BN2 scale folded in
    b2     : (1, Cout)  f32    folded conv2 bias + BN2 shift
    out_ref: (H, W, Cout)
    pad_ref: (H+2, W+2, Cout)  persistent VMEM scratch (zero border + conv1 out)
    """
    H, W, Cg = xg_ref.shape
    Cf = xf_ref.shape[-1]
    Cout = out_ref.shape[-1]
    M = H * W
    mxu_dt = w1g_ref.dtype

    # ---- conv1 (1x1) as two matmuls (split = no concat), f32 accumulate,
    #      bias (BN folded) + ReLU in f32.
    xg = xg_ref[...].reshape(M, Cg).astype(mxu_dt)
    xf = xf_ref[...].reshape(M, Cf).astype(mxu_dt)
    y = jnp.dot(xg, w1g_ref[...], preferred_element_type=jnp.float32)
    y = y + jnp.dot(xf, w1f_ref[...], preferred_element_type=jnp.float32)
    y = jnp.maximum(y + b1_ref[...], 0.0)

    # ---- refresh only the 1-px zero border of the persistent scratch (cheap),
    #      then overwrite the interior with the conv1 output.
    zrow = jnp.zeros((1, W + 2, Cout), pad_ref.dtype)
    zcol = jnp.zeros((H + 2, 1, Cout), pad_ref.dtype)
    pad_ref[0:1, :, :] = zrow
    pad_ref[H + 1:H + 2, :, :] = zrow
    pad_ref[:, 0:1, :] = zcol
    pad_ref[:, W + 1:W + 2, :] = zcol
    pad_ref[1:H + 1, 1:W + 1, :] = y.reshape(H, W, Cout).astype(pad_ref.dtype)

    # ---- conv2 (3x3, pad=1): 9 shifted matmuls accumulated in f32,
    #      folded bias + ReLU.
    acc = jnp.zeros((M, Cout), jnp.float32)
    for k in range(9):
        dy, dx = k // 3, k % 3
        patch = pad_ref[dy:dy + H, dx:dx + W, :].reshape(M, Cout)
        acc = acc + jnp.dot(patch, w2_ref[k], preferred_element_type=jnp.float32)
    z = jnp.maximum(acc + b2_ref[...], 0.0)
    out_ref[...] = z.reshape(H, W, Cout).astype(out_ref.dtype)


@jax.jit
def hlayer_forward(prev_g, f, folded):
    """prev_g, f: NCHW float32. Returns NCHW float32 (like the PyTorch module)."""
    mxu_dtype = folded["w1"].dtype
    # NCHW -> NHWC; also cast activations to the MXU dtype here so the kernel's
    # HBM->VMEM traffic is halved when using bf16.
    xg = jnp.transpose(prev_g, (0, 2, 3, 1)).astype(mxu_dtype)
    xf = jnp.transpose(f, (0, 2, 3, 1)).astype(mxu_dtype)
    N, H, W, Cg = xg.shape
    Cf = xf.shape[-1]
    Cout = folded["w1"].shape[1]
    w1g = folded["w1"][:Cg]
    w1f = folded["w1"][Cg:]

    # VMEM budget: 2x (double-buffered) activation in/out blocks + resident
    # weights + pad scratch, with generous headroom; capped at 32 MiB so it is
    # safe on v7x (64 MiB physical) as well as v5e/v6e.
    bpe = jnp.dtype(mxu_dtype).itemsize
    need = (2 * H * W * (Cg + Cf) * bpe            # input blocks (x2 buffers)
            + 2 * H * W * Cout * 4                 # output blocks (x2 buffers)
            + (H + 2) * (W + 2) * Cout * bpe       # pad scratch
            + ((Cg + Cf) * Cout + 9 * Cout * Cout) * bpe
            + 2 * Cout * 4)
    vmem_limit = int(min(max(4 * need, 4 << 20), 32 << 20))

    out = pl.pallas_call(
        hlayer_kernel,
        out_shape=jax.ShapeDtypeStruct((N, H, W, Cout), jnp.float32),
        grid=(N,),
        in_specs=[
            pl.BlockSpec((None, H, W, Cg), lambda n: (n, 0, 0, 0)),
            pl.BlockSpec((None, H, W, Cf), lambda n: (n, 0, 0, 0)),
            pl.BlockSpec((Cg, Cout), lambda n: (0, 0)),
            pl.BlockSpec((Cf, Cout), lambda n: (0, 0)),
            pl.BlockSpec((1, Cout), lambda n: (0, 0)),
            pl.BlockSpec((9, Cout, Cout), lambda n: (0, 0, 0)),
            pl.BlockSpec((1, Cout), lambda n: (0, 0)),
        ],
        out_specs=pl.BlockSpec((None, H, W, Cout), lambda n: (n, 0, 0, 0)),
        scratch_shapes=[pltpu.VMEM((H + 2, W + 2, Cout), mxu_dtype)],
        compiler_params=pltpu.CompilerParams(
            dimension_semantics=("parallel",),
            vmem_limit_bytes=vmem_limit),
    )(xg, xf, w1g, w1f, folded["b1"], folded["w2"], folded["b2"])

    return jnp.transpose(out, (0, 3, 1, 2))       # back to NCHW


# ---------------------------------------------------------------------------
# Deterministic PyTorch-shaped parameters, BN folding, pure-JAX reference.
# ---------------------------------------------------------------------------
def init_torch_params(key, in_ch, out_ch):
    ks = jax.random.split(key, 12)
    w1 = jax.random.normal(ks[0], (out_ch, in_ch, 1, 1), jnp.float32) / math.sqrt(in_ch)
    b1 = 0.1 * jax.random.normal(ks[1], (out_ch,), jnp.float32)
    w2 = jax.random.normal(ks[2], (out_ch, out_ch, 3, 3), jnp.float32) / math.sqrt(out_ch * 9)
    b2 = 0.1 * jax.random.normal(ks[3], (out_ch,), jnp.float32)
    g1 = 1.0 + 0.1 * jax.random.normal(ks[4], (out_ch,), jnp.float32)
    be1 = 0.1 * jax.random.normal(ks[5], (out_ch,), jnp.float32)
    m1 = 0.1 * jax.random.normal(ks[6], (out_ch,), jnp.float32)
    v1 = 0.5 + jnp.abs(jax.random.normal(ks[7], (out_ch,), jnp.float32))
    g2 = 1.0 + 0.1 * jax.random.normal(ks[8], (out_ch,), jnp.float32)
    be2 = 0.1 * jax.random.normal(ks[9], (out_ch,), jnp.float32)
    m2 = 0.1 * jax.random.normal(ks[10], (out_ch,), jnp.float32)
    v2 = 0.5 + jnp.abs(jax.random.normal(ks[11], (out_ch,), jnp.float32))
    return dict(w1=w1, b1=b1, g1=g1, be1=be1, m1=m1, v1=v1,
                w2=w2, b2=b2, g2=g2, be2=be2, m2=m2, v2=v2)


def fold_params(p, mxu_dtype=jnp.bfloat16):
    """Fold conv bias + eval-mode BatchNorm into per-conv (weight, bias) pairs."""
    out_ch = p["w1"].shape[0]
    s1 = p["g1"] / jnp.sqrt(p["v1"] + EPS)
    t1 = p["be1"] - p["m1"] * s1
    s2 = p["g2"] / jnp.sqrt(p["v2"] + EPS)
    t2 = p["be2"] - p["m2"] * s2
    # conv1: (O, I, 1, 1) -> (I, O); BN1 scale folded into the output columns.
    w1 = jnp.transpose(p["w1"][:, :, 0, 0], (1, 0)) * s1[None, :]
    b1 = p["b1"] * s1 + t1
    # conv2: (O, I, 3, 3) -> (9, I, O), k = ky*3+kx; BN2 scale folded in.
    w2 = (jnp.transpose(p["w2"], (2, 3, 1, 0)).reshape(9, out_ch, out_ch)
          * s2[None, None, :])
    b2 = p["b2"] * s2 + t2
    row = lambda v: v.reshape(1, out_ch).astype(jnp.float32)
    return dict(w1=w1.astype(mxu_dtype), b1=row(b1),
                w2=w2.astype(mxu_dtype), b2=row(b2))


def reference_forward(prev_g, f, p):
    """Pure-JAX reference mirroring the PyTorch forward (eval-mode BN)."""
    dn = ("NCHW", "OIHW", "NCHW")
    x = jnp.concatenate([prev_g, f], axis=1)
    y = jax.lax.conv_general_dilated(x, p["w1"], (1, 1), "VALID",
                                     dimension_numbers=dn) + p["b1"][None, :, None, None]
    y = (y - p["m1"][None, :, None, None]) / jnp.sqrt(p["v1"] + EPS)[None, :, None, None]
    y = y * p["g1"][None, :, None, None] + p["be1"][None, :, None, None]
    y = jnp.maximum(y, 0.0)
    z = jax.lax.conv_general_dilated(y, p["w2"], (1, 1), ((1, 1), (1, 1)),
                                     dimension_numbers=dn) + p["b2"][None, :, None, None]
    z = (z - p["m2"][None, :, None, None]) / jnp.sqrt(p["v2"] + EPS)[None, :, None, None]
    z = z * p["g2"][None, :, None, None] + p["be2"][None, :, None, None]
    return jnp.maximum(z, 0.0)


if __name__ == "__main__":
    N, Cg, Cf, H, W = 2, 4, 4, 16, 16
    in_ch, out_ch = Cg + Cf, 8

    key = jax.random.PRNGKey(0)
    kx, kf, kp = jax.random.split(key, 3)
    prev_g = jax.random.normal(kx, (N, Cg, H, W), jnp.float32)
    f_in = jax.random.normal(kf, (N, Cf, H, W), jnp.float32)

    torch_params = init_torch_params(kp, in_ch, out_ch)
    ref = jax.block_until_ready(reference_forward(prev_g, f_in, torch_params))

    # Default path: bf16 MXU inputs, f32 accumulate + f32 elementwise math.
    out_bf16 = jax.block_until_ready(
        hlayer_forward(prev_g, f_in, fold_params(torch_params, jnp.bfloat16)))
    np.testing.assert_allclose(np.asarray(out_bf16), np.asarray(ref),
                               rtol=2e-2, atol=5e-2)

    # Exact path: f32 everywhere (matches eval-mode PyTorch numerics closely).
    out_f32 = jax.block_until_ready(
        hlayer_forward(prev_g, f_in, fold_params(torch_params, jnp.float32)))
    np.testing.assert_allclose(np.asarray(out_f32), np.asarray(ref),
                               rtol=2e-3, atol=2e-3)

    print("KERNEL_OK")
</pallas_src>

<mosaic_0001>
module attributes {stable_mosaic.version = 11 : i64} {
  func.func @hlayer_kernel(%arg0: i32, %arg1: memref<1x16x16x4xbf16, #tpu.memory_space<vmem>>, %arg2: memref<1x16x16x4xbf16, #tpu.memory_space<vmem>>, %arg3: memref<4x8xbf16, #tpu.memory_space<vmem>>, %arg4: memref<4x8xbf16, #tpu.memory_space<vmem>>, %arg5: memref<1x8xf32, #tpu.memory_space<vmem>>, %arg6: memref<9x8x8xbf16, #tpu.memory_space<vmem>>, %arg7: memref<1x8xf32, #tpu.memory_space<vmem>>, %arg8: memref<1x16x16x8xf32, #tpu.memory_space<vmem>>, %arg9: memref<18x18x8xbf16, #tpu.memory_space<vmem>>) attributes {dimension_semantics = [#tpu.dimension_semantics<parallel>], iteration_bounds = array<i64: 2>, scalar_prefetch = 0 : i64, scratch_operands = 1 : i64, tpu.core_type = #tpu.core_type<tc>, window_params = [{transform_indices = @transform_0, window_bounds = array<i64: 1, 16, 16, 4>}, {transform_indices = @transform_1, window_bounds = array<i64: 1, 16, 16, 4>}, {pipeline_mode = #tpu.pipeline_mode<synchronous>, transform_indices = @transform_2, window_bounds = array<i64: 4, 8>}, {pipeline_mode = #tpu.pipeline_mode<synchronous>, transform_indices = @transform_3, window_bounds = array<i64: 4, 8>}, {pipeline_mode = #tpu.pipeline_mode<synchronous>, transform_indices = @transform_4, window_bounds = array<i64: 1, 8>}, {pipeline_mode = #tpu.pipeline_mode<synchronous>, transform_indices = @transform_5, window_bounds = array<i64: 9, 8, 8>}, {pipeline_mode = #tpu.pipeline_mode<synchronous>, transform_indices = @transform_6, window_bounds = array<i64: 1, 8>}, {transform_indices = @transform_7, window_bounds = array<i64: 1, 16, 16, 8>}]} {
    %c0 = arith.constant 0 : index
    %c0_0 = arith.constant 0 : index
    %c0_1 = arith.constant 0 : index
    %c0_2 = arith.constant 0 : index
    %0 = vector.load %arg1[%c0, %c0_0, %c0_1, %c0_2] : memref<1x16x16x4xbf16, #tpu.memory_space<vmem>>, vector<1x16x16x4xbf16>
    %1 = vector.shape_cast %0 : vector<1x16x16x4xbf16> to vector<16x16x4xbf16>
    %2 = vector.shape_cast %1 : vector<16x16x4xbf16> to vector<256x4xbf16>
    %c0_3 = arith.constant 0 : index
    %c0_4 = arith.constant 0 : index
    %c0_5 = arith.constant 0 : index
    %c0_6 = arith.constant 0 : index
    %3 = vector.load %arg2[%c0_3, %c0_4, %c0_5, %c0_6] : memref<1x16x16x4xbf16, #tpu.memory_space<vmem>>, vector<1x16x16x4xbf16>
    %4 = vector.shape_cast %3 : vector<1x16x16x4xbf16> to vector<16x16x4xbf16>
    %5 = vector.shape_cast %4 : vector<16x16x4xbf16> to vector<256x4xbf16>
    %c0_7 = arith.constant 0 : index
    %c0_8 = arith.constant 0 : index
    %6 = vector.load %arg3[%c0_7, %c0_8] : memref<4x8xbf16, #tpu.memory_space<vmem>>, vector<4x8xbf16>
    %cst = arith.constant dense<0.000000e+00> : vector<256x8xf32>
    %7 = tpu.matmul %2, %6, %cst {dimension_numbers = #tpu.dot_dimension_numbers<[1], [0], [0], [1], [0, 0, 1, 1], [], []>} : vector<256x4xbf16>, vector<4x8xbf16>, vector<256x8xf32> -> vector<256x8xf32>
    %c0_9 = arith.constant 0 : index
    %c0_10 = arith.constant 0 : index
    %8 = vector.load %arg4[%c0_9, %c0_10] : memref<4x8xbf16, #tpu.memory_space<vmem>>, vector<4x8xbf16>
    %cst_11 = arith.constant dense<0.000000e+00> : vector<256x8xf32>
    %9 = tpu.matmul %5, %8, %cst_11 {dimension_numbers = #tpu.dot_dimension_numbers<[1], [0], [0], [1], [0, 0, 1, 1], [], []>} : vector<256x4xbf16>, vector<4x8xbf16>, vector<256x8xf32> -> vector<256x8xf32>
    %10 = arith.addf %7, %9 : vector<256x8xf32>
    %c0_12 = arith.constant 0 : index
    %c0_13 = arith.constant 0 : index
    %11 = vector.load %arg5[%c0_12, %c0_13] : memref<1x8xf32, #tpu.memory_space<vmem>>, vector<1x8xf32>
    %12 = vector.broadcast %11 : vector<1x8xf32> to vector<256x8xf32>
    %13 = arith.addf %10, %12 : vector<256x8xf32>
    %cst_14 = arith.constant 0.000000e+00 : f32
    %14 = vector.broadcast %cst_14 : f32 to vector<256x8xf32>
    %15 = arith.maximumf %13, %14 : vector<256x8xf32>
    %cst_15 = arith.constant 0.000000e+00 : bf16
    %16 = vector.broadcast %cst_15 : bf16 to vector<1x18x8xbf16>
    %cst_16 = arith.constant 0.000000e+00 : bf16
    %17 = vector.broadcast %cst_16 : bf16 to vector<18x1x8xbf16>
    %c0_17 = arith.constant 0 : index
    %c0_18 = arith.constant 0 : index
    %c0_19 = arith.constant 0 : index
    %18 = vector.load %arg9[%c0_17, %c0_18, %c0_19] : memref<18x18x8xbf16, #tpu.memory_space<vmem>>, vector<1x18x8xbf16>
    tpu.vector_store %arg9[%c0_17, %c0_18, %c0_19], %16 {strides = array<i32>} : memref<18x18x8xbf16, #tpu.memory_space<vmem>>, vector<1x18x8xbf16>,
    %c17 = arith.constant 17 : index
    %c0_20 = arith.constant 0 : index
    %c0_21 = arith.constant 0 : index
    %19 = vector.load %arg9[%c17, %c0_20, %c0_21] : memref<18x18x8xbf16, #tpu.memory_space<vmem>>, vector<1x18x8xbf16>
    tpu.vector_store %arg9[%c17, %c0_20, %c0_21], %16 {strides = array<i32>} : memref<18x18x8xbf16, #tpu.memory_space<vmem>>, vector<1x18x8xbf16>,
    %c0_22 = arith.constant 0 : index
    %c0_23 = arith.constant 0 : index
    %c0_24 = arith.constant 0 : index
    %20 = vector.load %arg9[%c0_22, %c0_23, %c0_24] : memref<18x18x8xbf16, #tpu.memory_space<vmem>>, vector<18x1x8xbf16>
    tpu.vector_store %arg9[%c0_22, %c0_23, %c0_24], %17 {strides = array<i32>} : memref<18x18x8xbf16, #tpu.memory_space<vmem>>, vector<18x1x8xbf16>,
    %c0_25 = arith.constant 0 : index
    %c17_26 = arith.constant 17 : index
    %c0_27 = arith.constant 0 : index
    %21 = vector.load %arg9[%c0_25, %c17_26, %c0_27] : memref<18x18x8xbf16, #tpu.memory_space<vmem>>, vector<18x1x8xbf16>
    tpu.vector_store %arg9[%c0_25, %c17_26, %c0_27], %17 {strides = array<i32>} : memref<18x18x8xbf16, #tpu.memory_space<vmem>>, vector<18x1x8xbf16>,
    %22 = vector.shape_cast %15 : vector<256x8xf32> to vector<16x16x8xf32>
    %23 = arith.truncf %22 : vector<16x16x8xf32> to vector<16x16x8xbf16>
    %c1 = arith.constant 1 : index
    %c1_28 = arith.constant 1 : index
    %c0_29 = arith.constant 0 : index
    %24 = vector.load %arg9[%c1, %c1_28, %c0_29] : memref<18x18x8xbf16, #tpu.memory_space<vmem>>, vector<16x16x8xbf16>
    tpu.vector_store %arg9[%c1, %c1_28, %c0_29], %23 {strides = array<i32>} : memref<18x18x8xbf16, #tpu.memory_space<vmem>>, vector<16x16x8xbf16>,
    %cst_30 = arith.constant 0.000000e+00 : f32
    %25 = vector.broadcast %cst_30 : f32 to vector<256x8xf32>
    %c0_31 = arith.constant 0 : index
    %c0_32 = arith.constant 0 : index
    %c0_33 = arith.constant 0 : index
    %26 = vector.load %arg9[%c0_31, %c0_32, %c0_33] : memref<18x18x8xbf16, #tpu.memory_space<vmem>>, vector<16x16x8xbf16>
    %27 = vector.shape_cast %26 : vector<16x16x8xbf16> to vector<256x8xbf16>
    %c0_34 = arith.constant 0 : index
    %c0_35 = arith.constant 0 : index
    %c0_36 = arith.constant 0 : index
    %28 = vector.load %arg6[%c0_34, %c0_35, %c0_36] : memref<9x8x8xbf16, #tpu.memory_space<vmem>>, vector<1x8x8xbf16>
    %29 = vector.shape_cast %28 : vector<1x8x8xbf16> to vector<8x8xbf16>
    %cst_37 = arith.constant dense<0.000000e+00> : vector<256x8xf32>
    %30 = tpu.matmul %27, %29, %cst_37 {dimension_numbers = #tpu.dot_dimension_numbers<[1], [0], [0], [1], [0, 0, 1, 1], [], []>} : vector<256x8xbf16>, vector<8x8xbf16>, vector<256x8xf32> -> vector<256x8xf32>
    %31 = arith.addf %25, %30 : vector<256x8xf32>
    %c0_38 = arith.constant 0 : index
    %c1_39 = arith.constant 1 : index
    %c0_40 = arith.constant 0 : index
    %32 = vector.load %arg9[%c0_38, %c1_39, %c0_40] : memref<18x18x8xbf16, #tpu.memory_space<vmem>>, vector<16x16x8xbf16>
    %33 = vector.shape_cast %32 : vector<16x16x8xbf16> to vector<256x8xbf16>
    %c1_41 = arith.constant 1 : index
    %c0_42 = arith.constant 0 : index
    %c0_43 = arith.constant 0 : index
    %34 = vector.load %arg6[%c1_41, %c0_42, %c0_43] : memref<9x8x8xbf16, #tpu.memory_space<vmem>>, vector<1x8x8xbf16>
    %35 = vector.shape_cast %34 : vector<1x8x8xbf16> to vector<8x8xbf16>
    %cst_44 = arith.constant dense<0.000000e+00> : vector<256x8xf32>
    %36 = tpu.matmul %33, %35, %cst_44 {dimension_numbers = #tpu.dot_dimension_numbers<[1], [0], [0], [1], [0, 0, 1, 1], [], []>} : vector<256x8xbf16>, vector<8x8xbf16>, vector<256x8xf32> -> vector<256x8xf32>
    %37 = arith.addf %31, %36 : vector<256x8xf32>
    %c0_45 = arith.constant 0 : index
    %c2 = arith.constant 2 : index
    %c0_46 = arith.constant 0 : index
    %38 = vector.load %arg9[%c0_45, %c2, %c0_46] : memref<18x18x8xbf16, #tpu.memory_space<vmem>>, vector<16x16x8xbf16>
    %39 = vector.shape_cast %38 : vector<16x16x8xbf16> to vector<256x8xbf16>
    %c2_47 = arith.constant 2 : index
    %c0_48 = arith.constant 0 : index
    %c0_49 = arith.constant 0 : index
    %40 = vector.load %arg6[%c2_47, %c0_48, %c0_49] : memref<9x8x8xbf16, #tpu.memory_space<vmem>>, vector<1x8x8xbf16>
    %41 = vector.shape_cast %40 : vector<1x8x8xbf16> to vector<8x8xbf16>
    %cst_50 = arith.constant dense<0.000000e+00> : vector<256x8xf32>
    %42 = tpu.matmul %39, %41, %cst_50 {dimension_numbers = #tpu.dot_dimension_numbers<[1], [0], [0], [1], [0, 0, 1, 1], [], []>} : vector<256x8xbf16>, vector<8x8xbf16>, vector<256x8xf32> -> vector<256x8xf32>
    %43 = arith.addf %37, %42 : vector<256x8xf32>
    %c1_51 = arith.constant 1 : index
    %c0_52 = arith.constant 0 : index
    %c0_53 = arith.constant 0 : index
    %44 = vector.load %arg9[%c1_51, %c0_52, %c0_53] : memref<18x18x8xbf16, #tpu.memory_space<vmem>>, vector<16x16x8xbf16>
    %45 = vector.shape_cast %44 : vector<16x16x8xbf16> to vector<256x8xbf16>
    %c3 = arith.constant 3 : index
    %c0_54 = arith.constant 0 : index
    %c0_55 = arith.constant 0 : index
    %46 = vector.load %arg6[%c3, %c0_54, %c0_55] : memref<9x8x8xbf16, #tpu.memory_space<vmem>>, vector<1x8x8xbf16>
    %47 = vector.shape_cast %46 : vector<1x8x8xbf16> to vector<8x8xbf16>
    %cst_56 = arith.constant dense<0.000000e+00> : vector<256x8xf32>
    %48 = tpu.matmul %45, %47, %cst_56 {dimension_numbers = #tpu.dot_dimension_numbers<[1], [0], [0], [1], [0, 0, 1, 1], [], []>} : vector<256x8xbf16>, vector<8x8xbf16>, vector<256x8xf32> -> vector<256x8xf32>
    %49 = arith.addf %43, %48 : vector<256x8xf32>
    %c1_57 = arith.constant 1 : index
    %c1_58 = arith.constant 1 : index
    %c0_59 = arith.constant 0 : index
    %50 = vector.load %arg9[%c1_57, %c1_58, %c0_59] : memref<18x18x8xbf16, #tpu.memory_space<vmem>>, vector<16x16x8xbf16>
    %51 = vector.shape_cast %50 : vector<16x16x8xbf16> to vector<256x8xbf16>
    %c4 = arith.constant 4 : index
    %c0_60 = arith.constant 0 : index
    %c0_61 = arith.constant 0 : index
    %52 = vector.load %arg6[%c4, %c0_60, %c0_61] : memref<9x8x8xbf16, #tpu.memory_space<vmem>>, vector<1x8x8xbf16>
    %53 = vector.shape_cast %52 : vector<1x8x8xbf16> to vector<8x8xbf16>
    %cst_62 = arith.constant dense<0.000000e+00> : vector<256x8xf32>
    %54 = tpu.matmul %51, %53, %cst_62 {dimension_numbers = #tpu.dot_dimension_numbers<[1], [0], [0], [1], [0, 0, 1, 1], [], []>} : vector<256x8xbf16>, vector<8x8xbf16>, vector<256x8xf32> -> vector<256x8xf32>
    %55 = arith.addf %49, %54 : vector<256x8xf32>
    %c1_63 = arith.constant 1 : index
    %c2_64 = arith.constant 2 : index
    %c0_65 = arith.constant 0 : index
    %56 = vector.load %arg9[%c1_63, %c2_64, %c0_65] : memref<18x18x8xbf16, #tpu.memory_space<vmem>>, vector<16x16x8xbf16>
    %57 = vector.shape_cast %56 : vector<16x16x8xbf16> to vector<256x8xbf16>
    %c5 = arith.constant 5 : index
    %c0_66 = arith.constant 0 : index
    %c0_67 = arith.constant 0 : index
    %58 = vector.load %arg6[%c5, %c0_66, %c0_67] : memref<9x8x8xbf16, #tpu.memory_space<vmem>>, vector<1x8x8xbf16>
    %59 = vector.shape_cast %58 : vector<1x8x8xbf16> to vector<8x8xbf16>
    %cst_68 = arith.constant dense<0.000000e+00> : vector<256x8xf32>
    %60 = tpu.matmul %57, %59, %cst_68 {dimension_numbers = #tpu.dot_dimension_numbers<[1], [0], [0], [1], [0, 0, 1, 1], [], []>} : vector<256x8xbf16>, vector<8x8xbf16>, vector<256x8xf32> -> vector<256x8xf32>
    %61 = arith.addf %55, %60 : vector<256x8xf32>
    %c2_69 = arith.constant 2 : index
    %c0_70 = arith.constant 0 : index
    %c0_71 = arith.constant 0 : index
    %62 = vector.load %arg9[%c2_69, %c0_70, %c0_71] : memref<18x18x8xbf16, #tpu.memory_space<vmem>>, vector<16x16x8xbf16>
    %63 = vector.shape_cast %62 : vector<16x16x8xbf16> to vector<256x8xbf16>
    %c6 = arith.constant 6 : index
    %c0_72 = arith.constant 0 : index
    %c0_73 = arith.constant 0 : index
    %64 = vector.load %arg6[%c6, %c0_72, %c0_73] : memref<9x8x8xbf16, #tpu.memory_space<vmem>>, vector<1x8x8xbf16>
    %65 = vector.shape_cast %64 : vector<1x8x8xbf16> to vector<8x8xbf16>
    %cst_74 = arith.constant dense<0.000000e+00> : vector<256x8xf32>
    %66 = tpu.matmul %63, %65, %cst_74 {dimension_numbers = #tpu.dot_dimension_numbers<[1], [0], [0], [1], [0, 0, 1, 1], [], []>} : vector<256x8xbf16>, vector<8x8xbf16>, vector<256x8xf32> -> vector<256x8xf32>
    %67 = arith.addf %61, %66 : vector<256x8xf32>
    %c2_75 = arith.constant 2 : index
    %c1_76 = arith.constant 1 : index
    %c0_77 = arith.constant 0 : index
    %68 = vector.load %arg9[%c2_75, %c1_76, %c0_77] : memref<18x18x8xbf16, #tpu.memory_space<vmem>>, vector<16x16x8xbf16>
    %69 = vector.shape_cast %68 : vector<16x16x8xbf16> to vector<256x8xbf16>
    %c7 = arith.constant 7 : index
    %c0_78 = arith.constant 0 : index
    %c0_79 = arith.constant 0 : index
    %70 = vector.load %arg6[%c7, %c0_78, %c0_79] : memref<9x8x8xbf16, #tpu.memory_space<vmem>>, vector<1x8x8xbf16>
    %71 = vector.shape_cast %70 : vector<1x8x8xbf16> to vector<8x8xbf16>
    %cst_80 = arith.constant dense<0.000000e+00> : vector<256x8xf32>
    %72 = tpu.matmul %69, %71, %cst_80 {dimension_numbers = #tpu.dot_dimension_numbers<[1], [0], [0], [1], [0, 0, 1, 1], [], []>} : vector<256x8xbf16>, vector<8x8xbf16>, vector<256x8xf32> -> vector<256x8xf32>
    %73 = arith.addf %67, %72 : vector<256x8xf32>
    %c2_81 = arith.constant 2 : index
    %c2_82 = arith.constant 2 : index
    %c0_83 = arith.constant 0 : index
    %74 = vector.load %arg9[%c2_81, %c2_82, %c0_83] : memref<18x18x8xbf16, #tpu.memory_space<vmem>>, vector<16x16x8xbf16>
    %75 = vector.shape_cast %74 : vector<16x16x8xbf16> to vector<256x8xbf16>
    %c8 = arith.constant 8 : index
    %c0_84 = arith.constant 0 : index
    %c0_85 = arith.constant 0 : index
    %76 = vector.load %arg6[%c8, %c0_84, %c0_85] : memref<9x8x8xbf16, #tpu.memory_space<vmem>>, vector<1x8x8xbf16>
    %77 = vector.shape_cast %76 : vector<1x8x8xbf16> to vector<8x8xbf16>
    %cst_86 = arith.constant dense<0.000000e+00> : vector<256x8xf32>
    %78 = tpu.matmul %75, %77, %cst_86 {dimension_numbers = #tpu.dot_dimension_numbers<[1], [0], [0], [1], [0, 0, 1, 1], [], []>} : vector<256x8xbf16>, vector<8x8xbf16>, vector<256x8xf32> -> vector<256x8xf32>
    %79 = arith.addf %73, %78 : vector<256x8xf32>
    %c0_87 = arith.constant 0 : index
    %c0_88 = arith.constant 0 : index
    %80 = vector.load %arg7[%c0_87, %c0_88] : memref<1x8xf32, #tpu.memory_space<vmem>>, vector<1x8xf32>
    %81 = vector.broadcast %80 : vector<1x8xf32> to vector<256x8xf32>
    %82 = arith.addf %79, %81 : vector<256x8xf32>
    %cst_89 = arith.constant 0.000000e+00 : f32
    %83 = vector.broadcast %cst_89 : f32 to vector<256x8xf32>
    %84 = arith.maximumf %82, %83 : vector<256x8xf32>
    %85 = vector.shape_cast %84 : vector<256x8xf32> to vector<16x16x8xf32>
    %c0_90 = arith.constant 0 : index
    %c0_91 = arith.constant 0 : index
    %c0_92 = arith.constant 0 : index
    %c0_93 = arith.constant 0 : index
    %86 = vector.load %arg8[%c0_90, %c0_91, %c0_92, %c0_93] : memref<1x16x16x8xf32, #tpu.memory_space<vmem>>, vector<1x16x16x8xf32>
    %87 = vector.shape_cast %86 : vector<1x16x16x8xf32> to vector<16x16x8xf32>
    %88 = vector.shape_cast %85 : vector<16x16x8xf32> to vector<1x16x16x8xf32>
    tpu.vector_store %arg8[%c0_90, %c0_91, %c0_92, %c0_93], %88 {strides = array<i32>} : memref<1x16x16x8xf32, #tpu.memory_space<vmem>>, vector<1x16x16x8xf32>,
    return
  }
  func.func @transform_0(%arg0: i32) -> (i32, i32, i32, i32) {
    %c0_i32 = arith.constant 0 : i32
    %c0_i32_0 = arith.constant 0 : i32
    %c0_i32_1 = arith.constant 0 : i32
    %c0_i32_2 = arith.constant 0 : i32
    return %arg0, %c0_i32, %c0_i32_0, %c0_i32_1 : i32, i32, i32, i32
  }
  func.func @transform_1(%arg0: i32) -> (i32, i32, i32, i32) {
    %c0_i32 = arith.constant 0 : i32
    %c0_i32_0 = arith.constant 0 : i32
    %c0_i32_1 = arith.constant 0 : i32
    %c0_i32_2 = arith.constant 0 : i32
    return %arg0, %c0_i32, %c0_i32_0, %c0_i32_1 : i32, i32, i32, i32
  }
  func.func @transform_2(%arg0: i32) -> (i32, i32) {
    %c0_i32 = arith.constant 0 : i32
    %c0_i32_0 = arith.constant 0 : i32
    %c0_i32_1 = arith.constant 0 : i32
    return %c0_i32, %c0_i32_0 : i32, i32
  }
  func.func @transform_3(%arg0: i32) -> (i32, i32) {
    %c0_i32 = arith.constant 0 : i32
    %c0_i32_0 = arith.constant 0 : i32
    %c0_i32_1 = arith.constant 0 : i32
    return %c0_i32, %c0_i32_0 : i32, i32
  }
  func.func @transform_4(%arg0: i32) -> (i32, i32) {
    %c0_i32 = arith.constant 0 : i32
    %c0_i32_0 = arith.constant 0 : i32
    %c0_i32_1 = arith.constant 0 : i32
    return %c0_i32, %c0_i32_0 : i32, i32
  }
  func.func @transform_5(%arg0: i32) -> (i32, i32, i32) {
    %c0_i32 = arith.constant 0 : i32
    %c0_i32_0 = arith.constant 0 : i32
    %c0_i32_1 = arith.constant 0 : i32
    %c0_i32_2 = arith.constant 0 : i32
    return %c0_i32, %c0_i32_0, %c0_i32_1 : i32, i32, i32
  }
  func.func @transform_6(%arg0: i32) -> (i32, i32) {
    %c0_i32 = arith.constant 0 : i32
    %c0_i32_0 = arith.constant 0 : i32
    %c0_i32_1 = arith.constant 0 : i32
    return %c0_i32, %c0_i32_0 : i32, i32
  }
  func.func @transform_7(%arg0: i32) -> (i32, i32, i32, i32) {
    %c0_i32 = arith.constant 0 : i32
    %c0_i32_0 = arith.constant 0 : i32
    %c0_i32_1 = arith.constant 0 : i32
    %c0_i32_2 = arith.constant 0 : i32
    return %arg0, %c0_i32, %c0_i32_0, %c0_i32_1 : i32, i32, i32, i32
  }
}

</mosaic_0001>

<llo_original>
// kernel: hlayer_forward.1
$region0: #{hlayer_forward.1}
  #allocation0 [shape = 'u32[]', space=smem, size = 0x4, offset = 0x4, fixed_abs, tag = 'smem constant byte address 0x4 - core index']
  #allocation1 [shape = 'u32[144,128]{1,0:T(1,128)}', space=vmem, size = 0x12000, scoped, tag = 'internal scratch']
  #allocation2 [shape = 'bf16[18,18,8]{2,1,0:T(8,128)(2,1)}', space=vmem, size = 0x1b000, scoped, tag = 'scratch operand']
  %s0 = inlined_call_operand.vmem [shape: bf16[2,16,16,4], index: 0, kind: input, shape index: {}]
  %s1 = inlined_call_operand.vmem [shape: bf16[2,16,16,4], index: 1, kind: input, shape index: {}]
  %s2 = inlined_call_operand.vmem [shape: bf16[4,8], index: 2, kind: input, shape index: {}]
  %s3 = inlined_call_operand.vmem [shape: bf16[4,8], index: 3, kind: input, shape index: {}]
  %s4 = inlined_call_operand.vmem [shape: f32[1,8], index: 4, kind: input, shape index: {}]
  %s5 = inlined_call_operand.vmem [shape: bf16[9,8,8], index: 5, kind: input, shape index: {}]
  %s6 = inlined_call_operand.vmem [shape: f32[1,8], index: 6, kind: input, shape index: {}]
  %s7 = inlined_call_operand.vmem [shape: f32[2,16,16,8], index: 7, kind: output, shape index: {}]
  %s8 = sld [smem:[#allocation0]]
  $region61: #{hlayer_forward.1} parent=0
    _
  %s10 = ssub.s32 1, %s8
  %s11 = scalar_select 0, %s10, %s8
  loop: start=0, step=1, limit=4
  $region2: #{hlayer_forward.1} parent=0 // loop_pre_header
    _
  $region3: #{hlayer_forward.1} parent=0 // loop_header
    %s13 = sphi 0, %s17
    %p14 = scmp.ge.s32.totalorder %s13, 4
    %s23 = sphi 0, %s25
    %s26 = sphi 0, %s23
    %s27 = sphi 0, %s26
    %s43 = sphi 0, %s27
    %s49 = sphi 0, %s51
    %s52 = sphi 0, %s49
    %s53 = sphi 0, %s52
    %s69 = sphi 0, %s53
    %s73 = sphi 0, %s73
    %s75 = sphi 0, %s73
    %s76 = sphi 0, %s75
    %s90 = sphi 0, %s76
    %s94 = sphi 0, %s94
    %s96 = sphi 0, %s94
    %s97 = sphi 0, %s96
    %s111 = sphi 0, %s97
    %s115 = sphi 0, %s115
    %s117 = sphi 0, %s115
    %s118 = sphi 0, %s117
    %s132 = sphi 0, %s118
    %s136 = sphi 0, %s136
    %s138 = sphi 0, %s136
    %s139 = sphi 0, %s138
    %s153 = sphi 0, %s139
    %s157 = sphi 0, %s157
    %s159 = sphi 0, %s157
    %s160 = sphi 0, %s159
    %s174 = sphi 0, %s160
    %s180 = sphi 0, %s182
    %s183 = sphi 0, %s180
    %s184 = sphi 0, %s183
    %s200 = sphi 0, %s184
  $region4: #{hlayer_forward.1} parent=0 // loop_header_branch
    %16 = sbr.rel (%p14) target = $region8
  $region5: #{hlayer_forward.1} parent=0 // loop_body
    %s18 = ssub.s32 %s13, 1
    %s19 = ssub.s32 %s13, 2
    %s20 = sadd.s32 %s13, 1
    %s21 = ssub.s32 %s13, %s20
    %p22 = scmp.eq.s32.totalorder %s21, 0
    %s24 = sadd.s32 %s23, 1
    %s25 = scalar_select %p22, %s23, %s24
    %p28 = pneg %p22
    %p29 = scmp.eq.s32.totalorder %s13, 1
    %p30 = por %p28, %p29
    %p31 = scmp.ne.s32.totalorder %s23, %s26
    %p32 = scmp.eq.s32.totalorder %s13, 0
    %p33 = por %p31, %p32
    %p34 = scmp.ne.s32.totalorder %s23, %s26
    %p35 = scmp.eq.s32.totalorder %s18, 1
    %p36 = por %p34, %p35
    %p37 = scmp.ne.s32.totalorder %s26, %s27
    %p38 = scmp.eq.s32.totalorder %s18, 0
    %p39 = por %p37, %p38
    %p40 = scmp.ne.s32.totalorder %s26, %s27
    %p41 = scmp.eq.s32.totalorder %s19, 1
    %p42 = por %p40, %p41
    %p44 = scmp.ne.s32.totalorder %s27, %s43
    %p45 = scmp.eq.s32.totalorder %s19, 0
    %p46 = por %p44, %p45
    %s47 = ssub.s32 %s13, %s20
    %p48 = scmp.eq.s32.totalorder %s47, 0
    %s50 = sadd.s32 %s49, 1
    %s51 = scalar_select %p48, %s49, %s50
    %p54 = pneg %p48
    %p55 = scmp.eq.s32.totalorder %s13, 1
    %p56 = por %p54, %p55
    %p57 = scmp.ne.s32.totalorder %s49, %s52
    %p58 = scmp.eq.s32.totalorder %s13, 0
    %p59 = por %p57, %p58
    %p60 = scmp.ne.s32.totalorder %s49, %s52
    %p61 = scmp.eq.s32.totalorder %s18, 1
    %p62 = por %p60, %p61
    %p63 = scmp.ne.s32.totalorder %s52, %s53
    %p64 = scmp.eq.s32.totalorder %s18, 0
    %p65 = por %p63, %p64
    %p66 = scmp.ne.s32.totalorder %s52, %s53
    %p67 = scmp.eq.s32.totalorder %s19, 1
    %p68 = por %p66, %p67
    %p70 = scmp.ne.s32.totalorder %s53, %s69
    %p71 = scmp.eq.s32.totalorder %s19, 0
    %p72 = por %p70, %p71
    %s74 = sadd.s32 %s73, 1
    %p77 = scmp.eq.s32.totalorder %s13, 1
    %p78 = scmp.ne.s32.totalorder %s73, %s75
    %p79 = scmp.eq.s32.totalorder %s13, 0
    %p80 = por %p78, %p79
    %p81 = scmp.ne.s32.totalorder %s73, %s75
    %p82 = scmp.eq.s32.totalorder %s18, 1
    %p83 = por %p81, %p82
    %p84 = scmp.ne.s32.totalorder %s75, %s76
    %p85 = scmp.eq.s32.totalorder %s18, 0
    %p86 = por %p84, %p85
    %p87 = scmp.ne.s32.totalorder %s75, %s76
    %p88 = scmp.eq.s32.totalorder %s19, 1
    %p89 = por %p87, %p88
    %p91 = scmp.ne.s32.totalorder %s76, %s90
    %p92 = scmp.eq.s32.totalorder %s19, 0
    %p93 = por %p91, %p92
    %s95 = sadd.s32 %s94, 1
    %p98 = scmp.eq.s32.totalorder %s13, 1
    %p99 = scmp.ne.s32.totalorder %s94, %s96
    %p100 = scmp.eq.s32.totalorder %s13, 0
    %p101 = por %p99, %p100
    %p102 = scmp.ne.s32.totalorder %s94, %s96
    %p103 = scmp.eq.s32.totalorder %s18, 1
    %p104 = por %p102, %p103
    %p105 = scmp.ne.s32.totalorder %s96, %s97
    %p106 = scmp.eq.s32.totalorder %s18, 0
    %p107 = por %p105, %p106
    %p108 = scmp.ne.s32.totalorder %s96, %s97
    %p109 = scmp.eq.s32.totalorder %s19, 1
    %p110 = por %p108, %p109
    %p112 = scmp.ne.s32.totalorder %s97, %s111
    %p113 = scmp.eq.s32.totalorder %s19, 0
    %p114 = por %p112, %p113
    %s116 = sadd.s32 %s115, 1
    %p119 = scmp.eq.s32.totalorder %s13, 1
    %p120 = scmp.ne.s32.totalorder %s115, %s117
    %p121 = scmp.eq.s32.totalorder %s13, 0
    %p122 = por %p120, %p121
    %p123 = scmp.ne.s32.totalorder %s115, %s117
    %p124 = scmp.eq.s32.totalorder %s18, 1
    %p125 = por %p123, %p124
    %p126 = scmp.ne.s32.totalorder %s117, %s118
    %p127 = scmp.eq.s32.totalorder %s18, 0
    %p128 = por %p126, %p127
    %p129 = scmp.ne.s32.totalorder %s117, %s118
    %p130 = scmp.eq.s32.totalorder %s19, 1
    %p131 = por %p129, %p130
    %p133 = scmp.ne.s32.totalorder %s118, %s132
    %p134 = scmp.eq.s32.totalorder %s19, 0
    %p135 = por %p133, %p134
    %s137 = sadd.s32 %s136, 1
    %p140 = scmp.eq.s32.totalorder %s13, 1
    %p141 = scmp.ne.s32.totalorder %s136, %s138
    %p142 = scmp.eq.s32.totalorder %s13, 0
    %p143 = por %p141, %p142
    %p144 = scmp.ne.s32.totalorder %s136, %s138
    %p145 = scmp.eq.s32.totalorder %s18, 1
    %p146 = por %p144, %p145
    %p147 = scmp.ne.s32.totalorder %s138, %s139
    %p148 = scmp.eq.s32.totalorder %s18, 0
    %p149 = por %p147, %p148
    %p150 = scmp.ne.s32.totalorder %s138, %s139
    %p151 = scmp.eq.s32.totalorder %s19, 1
    %p152 = por %p150, %p151
    %p154 = scmp.ne.s32.totalorder %s139, %s153
    %p155 = scmp.eq.s32.totalorder %s19, 0
    %p156 = por %p154, %p155
    %s158 = sadd.s32 %s157, 1
    %p161 = scmp.eq.s32.totalorder %s13, 1
    %p162 = scmp.ne.s32.totalorder %s157, %s159
    %p163 = scmp.eq.s32.totalorder %s13, 0
    %p164 = por %p162, %p163
    %p165 = scmp.ne.s32.totalorder %s157, %s159
    %p166 = scmp.eq.s32.totalorder %s18, 1
    %p167 = por %p165, %p166
    %p168 = scmp.ne.s32.totalorder %s159, %s160
    %p169 = scmp.eq.s32.totalorder %s18, 0
    %p170 = por %p168, %p169
    %p171 = scmp.ne.s32.totalorder %s159, %s160
    %p172 = scmp.eq.s32.totalorder %s19, 1
    %p173 = por %p171, %p172
    %p175 = scmp.ne.s32.totalorder %s160, %s174
    %p176 = scmp.eq.s32.totalorder %s19, 0
    %p177 = por %p175, %p176
    %s178 = ssub.s32 %s13, %s20
    %p179 = scmp.eq.s32.totalorder %s178, 0
    %s181 = sadd.s32 %s180, 1
    %s182 = scalar_select %p179, %s180, %s181
    %p185 = pneg %p179
    %p186 = scmp.eq.s32.totalorder %s13, 1
    %p187 = por %p185, %p186
    %p188 = scmp.ne.s32.totalorder %s180, %s183
    %p189 = scmp.eq.s32.totalorder %s13, 0
    %p190 = por %p188, %p189
    %p191 = scmp.ne.s32.totalorder %s180, %s183
    %p192 = scmp.eq.s32.totalorder %s18, 1
    %p193 = por %p191, %p192
    %p194 = scmp.ne.s32.totalorder %s183, %s184
    %p195 = scmp.eq.s32.totalorder %s18, 0
    %p196 = por %p194, %p195
    %p197 = scmp.ne.s32.totalorder %s183, %s184
    %p198 = scmp.eq.s32.totalorder %s19, 1
    %p199 = por %p197, %p198
    %p201 = scmp.ne.s32.totalorder %s184, %s200
    %p202 = scmp.eq.s32.totalorder %s19, 0
    %p203 = por %p201, %p202
    %p204 = scmp.le.s32.totalorder 1, %s13
    %p205 = scmp.lt.s32.totalorder %s13, 3
    %p206 = pnand %p204, %p205
    %p207 = pneg %p206
    // Predicated region
    $region9: #{hlayer_forward.1} parent=5 // pred_check
      _
    $region10: #{hlayer_forward.1} parent=5 // pred_check_branch
      %209 = sbr.rel (%p206) target = $region12
    $region11: #{hlayer_forward.1} parent=5 // pred_region
      %s210 = ssub.s32 %s13, 1
      // Predicated region
      $region13: #{hlayer_forward.1} parent=11 // pred_check
        %p211 = pneg %p86
      $region14: #{hlayer_forward.1} parent=11 // pred_check_branch
        %213 = sbr.rel (%p211) target = $region16
      $region15: #{hlayer_forward.1} parent=11 // pred_region
        _
      $region16: #{hlayer_forward.1} parent=11 // pred_fallthru
        _
      // Predicated region
      $region17: #{hlayer_forward.1} parent=11 // pred_check
        %p214 = pneg %p107
      $region18: #{hlayer_forward.1} parent=11 // pred_check_branch
        %216 = sbr.rel (%p214) target = $region20
      $region19: #{hlayer_forward.1} parent=11 // pred_region
        _
      $region20: #{hlayer_forward.1} parent=11 // pred_fallthru
        _
      // Predicated region
      $region21: #{hlayer_forward.1} parent=11 // pred_check
        %p217 = pneg %p128
      $region22: #{hlayer_forward.1} parent=11 // pred_check_branch
        %219 = sbr.rel (%p217) target = $region24
      $region23: #{hlayer_forward.1} parent=11 // pred_region
        _
      $region24: #{hlayer_forward.1} parent=11 // pred_fallthru
        _
      // Predicated region
      $region25: #{hlayer_forward.1} parent=11 // pred_check
        %p220 = pneg %p149
      $region26: #{hlayer_forward.1} parent=11 // pred_check_branch
        %222 = sbr.rel (%p220) target = $region28
      $region27: #{hlayer_forward.1} parent=11 // pred_region
        _
      $region28: #{hlayer_forward.1} parent=11 // pred_fallthru
        _
      // Predicated region
      $region29: #{hlayer_forward.1} parent=11 // pred_check
        %p223 = pneg %p170
      $region30: #{hlayer_forward.1} parent=11 // pred_check_branch
        %225 = sbr.rel (%p223) target = $region32
      $region31: #{hlayer_forward.1} parent=11 // pred_region
        _
      $region32: #{hlayer_forward.1} parent=11 // pred_fallthru
        _
    $region12: #{hlayer_forward.1} parent=5 // pred_fallthru
      _
    %p226 = scmp.lt.s32.totalorder %s13, 2
    // Predicated region
    $region33: #{hlayer_forward.1} parent=5 // pred_check
      %p227 = pneg %p226
    $region34: #{hlayer_forward.1} parent=5 // pred_check_branch
      %229 = sbr.rel (%p227) target = $region36
    $region35: #{hlayer_forward.1} parent=5 // pred_region
      // Predicated region
      $region37: #{hlayer_forward.1} parent=35 // pred_check
        %p230 = pneg %p33
      $region38: #{hlayer_forward.1} parent=35 // pred_check_branch
        %232 = sbr.rel (%p230) target = $region40
      $region39: #{hlayer_forward.1} parent=35 // pred_region
        %p233 = scmp.lt.s32.totalorder %s13, 1
        %s234 = scalar_select %p233, %s13, 1
        %s235 = smul.addr %s234, 32
        %s236 = smul.addr %s235, 4
        %s237 = scalar_lea.vmem %s0, %s236
      $region40: #{hlayer_forward.1} parent=35 // pred_fallthru
        _
      // Predicated region
      $region41: #{hlayer_forward.1} parent=35 // pred_check
        %p238 = pneg %p59
      $region42: #{hlayer_forward.1} parent=35 // pred_check_branch
        %240 = sbr.rel (%p238) target = $region44
      $region43: #{hlayer_forward.1} parent=35 // pred_region
        %p241 = scmp.lt.s32.totalorder %s13, 1
        %s242 = scalar_select %p241, %s13, 1
        %s243 = smul.addr %s242, 32
        %s244 = smul.addr %s243, 4
        %s245 = scalar_lea.vmem %s1, %s244
      $region44: #{hlayer_forward.1} parent=35 // pred_fallthru
        _
    $region36: #{hlayer_forward.1} parent=5 // pred_fallthru
      _
    %p246 = scmp.le.s32.totalorder 1, %s13
    %p247 = scmp.lt.s32.totalorder %s13, 3
    %p248 = pnand %p246, %p247
    %p249 = pneg %p248
    // Predicated region
    $region45: #{hlayer_forward.1} parent=5 // pred_check
      _
    $region46: #{hlayer_forward.1} parent=5 // pred_check_branch
      %251 = sbr.rel (%p248) target = $region48
    $region47: #{hlayer_forward.1} parent=5 // pred_region
      %s252 = ssub.s32 %s13, 1
      %p253 = scmp.lt.s32.totalorder %s18, 1
      %s254 = scalar_select %p253, %s18, 1
      %s255 = smul.addr %s254, 32
      %s256 = smul.addr %s255, 4
      %s257 = scalar_lea.vmem %s0, %s256
      %p258 = pneg %p39
      %p259 = pneg %p36
      %p260 = scmp.lt.s32.totalorder %s18, 1
      %s261 = scalar_select %p260, %s18, 1
      %s262 = smul.addr %s261, 32
      %s263 = smul.addr %s262, 4
      %s264 = scalar_lea.vmem %s1, %s263
      %p265 = pneg %p65
      %p266 = pneg %p62
      %p267 = pneg %p86
      %p268 = pneg %p83
      %p269 = pneg %p107
      %p270 = pneg %p104
      %p271 = pneg %p128
      %p272 = pneg %p125
      %p273 = pneg %p149
      %p274 = pneg %p146
      %p275 = pneg %p170
      %p276 = pneg %p167
      %p277 = pneg %p196
      %p278 = pneg %p193
      %p279 = scmp.lt.s32.totalorder %s18, 1
      %s280 = scalar_select %p279, %s18, 1
      %s281 = smul.addr %s280, 32
      %s282 = smul.addr %s281, 8
      %s283 = scalar_lea.vmem %s7, %s282
      %p284 = scmp.lt.s32.totalorder %s18, 1
      %s285 = scalar_select %p284, %s18, 1
      %s286 = smul.addr %s285, 32
      %s287 = smul.addr %s286, 4
      %s288 = scalar_lea.vmem %s0, %s287
      %p289 = scmp.lt.s32.totalorder %s18, 1
      %s290 = scalar_select %p289, %s18, 1
      %s291 = smul.addr %s290, 32
      %s292 = smul.addr %s291, 4
      %s293 = scalar_lea.vmem %s1, %s292
      %p294 = scmp.lt.s32.totalorder %s18, 1
      %s295 = scalar_select %p294, %s18, 1
      %s296 = smul.addr %s295, 32
      %s297 = smul.addr %s296, 8
      %s298 = scalar_lea.vmem %s7, %s297
      %v300 = vld [vmem:[%s288] sm:$0xf]
      %v301 = vld [vmem:[%s288 + $0x4] sm:$0xf]
      %v302 = vld [vmem:[%s288 + $0x8] sm:$0xf]
      %v303 = vld [vmem:[%s288 + $0xc] sm:$0xf]
      %v304 = vld [vmem:[%s288 + $0x10] sm:$0xf]
      %v305 = vld [vmem:[%s288 + $0x14] sm:$0xf]
      %v306 = vld [vmem:[%s288 + $0x18] sm:$0xf]
      %v307 = vld [vmem:[%s288 + $0x1c] sm:$0xf]
      %v308 = vld [vmem:[%s288 + $0x20] sm:$0xf]
      %v309 = vld [vmem:[%s288 + $0x24] sm:$0xf]
      %v310 = vld [vmem:[%s288 + $0x28] sm:$0xf]
      %v311 = vld [vmem:[%s288 + $0x2c] sm:$0xf]
      %v312 = vld [vmem:[%s288 + $0x30] sm:$0xf]
      %v313 = vld [vmem:[%s288 + $0x34] sm:$0xf]
      %v314 = vld [vmem:[%s288 + $0x38] sm:$0xf]
      %v315 = vld [vmem:[%s288 + $0x3c] sm:$0xf]
      %v316 = vld [vmem:[%s288 + $0x40] sm:$0xf]
      %v317 = vld [vmem:[%s288 + $0x44] sm:$0xf]
      %v318 = vld [vmem:[%s288 + $0x48] sm:$0xf]
      %v319 = vld [vmem:[%s288 + $0x4c] sm:$0xf]
      %v320 = vld [vmem:[%s288 + $0x50] sm:$0xf]
      %v321 = vld [vmem:[%s288 + $0x54] sm:$0xf]
      %v322 = vld [vmem:[%s288 + $0x58] sm:$0xf]
      %v323 = vld [vmem:[%s288 + $0x5c] sm:$0xf]
      %v324 = vld [vmem:[%s288 + $0x60] sm:$0xf]
      %v325 = vld [vmem:[%s288 + $0x64] sm:$0xf]
      %v326 = vld [vmem:[%s288 + $0x68] sm:$0xf]
      %v327 = vld [vmem:[%s288 + $0x6c] sm:$0xf]
      %v328 = vld [vmem:[%s288 + $0x70] sm:$0xf]
      %v329 = vld [vmem:[%s288 + $0x74] sm:$0xf]
      %v330 = vld [vmem:[%s288 + $0x78] sm:$0xf]
      %v331 = vld [vmem:[%s288 + $0x7c] sm:$0xf]
      %v332 = vld [vmem:[%s293] sm:$0xf]
      %v333 = vld [vmem:[%s293 + $0x4] sm:$0xf]
      %v334 = vld [vmem:[%s293 + $0x8] sm:$0xf]
      %v335 = vld [vmem:[%s293 + $0xc] sm:$0xf]
      %v336 = vld [vmem:[%s293 + $0x10] sm:$0xf]
      %v337 = vld [vmem:[%s293 + $0x14] sm:$0xf]
      %v338 = vld [vmem:[%s293 + $0x18] sm:$0xf]
      %v339 = vld [vmem:[%s293 + $0x1c] sm:$0xf]
      %v340 = vld [vmem:[%s293 + $0x20] sm:$0xf]
      %v341 = vld [vmem:[%s293 + $0x24] sm:$0xf]
      %v342 = vld [vmem:[%s293 + $0x28] sm:$0xf]
      %v343 = vld [vmem:[%s293 + $0x2c] sm:$0xf]
      %v344 = vld [vmem:[%s293 + $0x30] sm:$0xf]
      %v345 = vld [vmem:[%s293 + $0x34] sm:$0xf]
      %v346 = vld [vmem:[%s293 + $0x38] sm:$0xf]
      %v347 = vld [vmem:[%s293 + $0x3c] sm:$0xf]
      %v348 = vld [vmem:[%s293 + $0x40] sm:$0xf]
      %v349 = vld [vmem:[%s293 + $0x44] sm:$0xf]
      %v350 = vld [vmem:[%s293 + $0x48] sm:$0xf]
      %v351 = vld [vmem:[%s293 + $0x4c] sm:$0xf]
      %v352 = vld [vmem:[%s293 + $0x50] sm:$0xf]
      %v353 = vld [vmem:[%s293 + $0x54] sm:$0xf]
      %v354 = vld [vmem:[%s293 + $0x58] sm:$0xf]
      %v355 = vld [vmem:[%s293 + $0x5c] sm:$0xf]
      %v356 = vld [vmem:[%s293 + $0x60] sm:$0xf]
      %v357 = vld [vmem:[%s293 + $0x64] sm:$0xf]
      %v358 = vld [vmem:[%s293 + $0x68] sm:$0xf]
      %v359 = vld [vmem:[%s293 + $0x6c] sm:$0xf]
      %v360 = vld [vmem:[%s293 + $0x70] sm:$0xf]
      %v361 = vld [vmem:[%s293 + $0x74] sm:$0xf]
      %v362 = vld [vmem:[%s293 + $0x78] sm:$0xf]
      %v363 = vld [vmem:[%s293 + $0x7c] sm:$0xf]
      %v364 = vld [vmem:[%s2] sm:$0x3]
      %v365 = vld [vmem:[%s3] sm:$0x3]
      %v398 = vunpack.c.l.b16 %v332
      %v399 = vunpack.c.l.b16 %v333
      %v400 = vunpack.c.l.b16 %v334
      %v401 = vunpack.c.l.b16 %v335
      %v402 = vunpack.c.l.b16 %v336
      %v403 = vunpack.c.l.b16 %v337
      %v404 = vunpack.c.l.b16 %v338
      %v405 = vunpack.c.l.b16 %v339
      %v406 = vunpack.c.l.b16 %v340
      %v407 = vunpack.c.l.b16 %v341
      %v408 = vunpack.c.l.b16 %v342
      %v409 = vunpack.c.l.b16 %v343
      %v410 = vunpack.c.l.b16 %v344
      %v411 = vunpack.c.l.b16 %v345
      %v412 = vunpack.c.l.b16 %v346
      %v413 = vunpack.c.l.b16 %v347
      %v414 = vunpack.c.l.b16 %v348
      %v415 = vunpack.c.l.b16 %v349
      %v416 = vunpack.c.l.b16 %v350
      %v417 = vunpack.c.l.b16 %v351
      %v418 = vunpack.c.l.b16 %v352
      %v419 = vunpack.c.l.b16 %v353
      %v420 = vunpack.c.l.b16 %v354
      %v421 = vunpack.c.l.b16 %v355
      %v422 = vunpack.c.l.b16 %v356
      %v423 = vunpack.c.l.b16 %v357
      %v424 = vunpack.c.l.b16 %v358
      %v425 = vunpack.c.l.b16 %v359
      %v426 = vunpack.c.l.b16 %v360
      %v427 = vunpack.c.l.b16 %v361
      %v428 = vunpack.c.l.b16 %v362
      %v429 = vunpack.c.l.b16 %v363
      %v430 = vpack.c.b16 %v399, %v398
      %v431 = vpack.c.b16 %v401, %v400
      %v432 = vpack.c.b16 %v403, %v402
      %v433 = vpack.c.b16 %v405, %v404
      %v434 = vpack.c.b16 %v407, %v406
      %v435 = vpack.c.b16 %v409, %v408
      %v436 = vpack.c.b16 %v411, %v410
      %v437 = vpack.c.b16 %v413, %v412
      %v438 = vpack.c.b16 %v415, %v414
      %v439 = vpack.c.b16 %v417, %v416
      %v440 = vpack.c.b16 %v419, %v418
      %v441 = vpack.c.b16 %v421, %v420
      %v442 = vpack.c.b16 %v423, %v422
      %v443 = vpack.c.b16 %v425, %v424
      %v444 = vpack.c.b16 %v427, %v426
      %v445 = vpack.c.b16 %v429, %v428
      %vm446 = vcmask 31744
      %v448 = vsel %vm446, %v430, 0
      %v451 = vsel %vm446, %v431, 0
      %v454 = vsel %vm446, %v432, 0
      %v457 = vsel %vm446, %v433, 0
      %v460 = vsel %vm446, %v434, 0
      %v463 = vsel %vm446, %v435, 0
      %v466 = vsel %vm446, %v436, 0
      %v469 = vsel %vm446, %v437, 0
      %v472 = vsel %vm446, %v438, 0
      %v475 = vsel %vm446, %v439, 0
      %v478 = vsel %vm446, %v440, 0
      %v481 = vsel %vm446, %v441, 0
      %v484 = vsel %vm446, %v442, 0
      %v487 = vsel %vm446, %v443, 0
      %v490 = vsel %vm446, %v444, 0
      %v493 = vsel %vm446, %v445, 0
      %vm495 = vcmask 1041408
      %v497 = vsel %vm495, %v365, 0
      %499 = vmatprep.subr.bf16.mxu0 0
      %500 = vmatpush1.bf16.msra.mxu0 %v497
      %501 = vmatprep.subr.bf16.mxu0 0
      %502 = vmatpush1.bf16.msra.mxu0 0
      %503 = vmatprep.subr.bf16.mxu0 0
      %504 = vmatpush1.bf16.msra.mxu0 0
      %505 = vmatprep.subr.bf16.mxu0 0
      %506 = vmatpush1.bf16.msra.mxu0 0
      %507 = vmatprep.subr.bf16.mxu0 0
      %508 = vmatpush1.bf16.msra.mxu0 0
      %509 = vmatprep.subr.bf16.mxu0 0
      %510 = vmatpush1.bf16.msra.mxu0 0
      %511 = vmatprep.subr.bf16.mxu0 0
      %512 = vmatpush1.bf16.msra.mxu0 0
      %513 = vmatprep.subr.bf16.mxu0 0
      %514 = vmatpush1.bf16.msra.mxu0 0
      %515 = vmatprep.subr.bf16.mxu0 0
      %516 = vmatpush1.bf16.msra.mxu0 0
      %517 = vmatprep.subr.bf16.mxu0 0
      %518 = vmatpush1.bf16.msra.mxu0 0
      %519 = vmatprep.subr.bf16.mxu0 0
      %520 = vmatpush1.bf16.msra.mxu0 0
      %521 = vmatprep.subr.bf16.mxu0 0
      %522 = vmatpush1.bf16.msra.mxu0 0
      %523 = vmatprep.subr.bf16.mxu0 0
      %524 = vmatpush1.bf16.msra.mxu0 0
      %525 = vmatprep.subr.bf16.mxu0 0
      %526 = vmatpush1.bf16.msra.mxu0 0
      %527 = vmatprep.subr.bf16.mxu0 0
      %528 = vmatpush1.bf16.msra.mxu0 0
      %529 = vmatprep.subr.bf16.mxu0 0
      %530 = vmatpush1.bf16.msra.mxu0 0
      %531 = vmatprep.mubr.bf16.mxu0 0
      %532 = vmatmul.mubr.bf16.gmra.mrb[0].mxu0 %v448
      %v533 = vpop.f32.mrb[0].mxu0
      %v534 = vadd.f32 0.0, %v533
      %v535 = vpop.f32.mrb[0].mxu0
      %v536 = vpop.f32.mrb[0].mxu0
      %v537 = vadd.f32 0.0, %v536
      %v538 = vpop.f32.mrb[0].mxu0
      %539 = vmatprep.mubr.bf16.mxu0 0
      %540 = vmatmul.mubr.bf16.gmra.mrb[0].mxu0 %v451
      %v541 = vpop.f32.mrb[0].mxu0
      %v542 = vadd.f32 0.0, %v541
      %v543 = vpop.f32.mrb[0].mxu0
      %v544 = vpop.f32.mrb[0].mxu0
      %v545 = vadd.f32 0.0, %v544
      %v546 = vpop.f32.mrb[0].mxu0
      %547 = vmatprep.mubr.bf16.mxu0 0
      %548 = vmatmul.mubr.bf16.gmra.mrb[0].mxu0 %v454
      %v549 = vpop.f32.mrb[0].mxu0
      %v550 = vadd.f32 0.0, %v549
      %v551 = vpop.f32.mrb[0].mxu0
      %v552 = vpop.f32.mrb[0].mxu0
      %v553 = vadd.f32 0.0, %v552
      %v554 = vpop.f32.mrb[0].mxu0
      %555 = vmatprep.mubr.bf16.mxu0 0
      %556 = vmatmul.mubr.bf16.gmra.mrb[0].mxu0 %v457
      %v557 = vpop.f32.mrb[0].mxu0
      %v558 = vadd.f32 0.0, %v557
      %v559 = vpop.f32.mrb[0].mxu0
      %v560 = vpop.f32.mrb[0].mxu0
      %v561 = vadd.f32 0.0, %v560
      %v562 = vpop.f32.mrb[0].mxu0
      %563 = vmatprep.mubr.bf16.mxu0 0
      %564 = vmatmul.mubr.bf16.gmra.mrb[0].mxu0 %v460
      %v565 = vpop.f32.mrb[0].mxu0
      %v566 = vadd.f32 0.0, %v565
      %v567 = vpop.f32.mrb[0].mxu0
      %v568 = vpop.f32.mrb[0].mxu0
      %v569 = vadd.f32 0.0, %v568
      %v570 = vpop.f32.mrb[0].mxu0
      %571 = vmatprep.mubr.bf16.mxu0 0
      %572 = vmatmul.mubr.bf16.gmra.mrb[0].mxu0 %v463
      %v573 = vpop.f32.mrb[0].mxu0
      %v574 = vadd.f32 0.0, %v573
      %v575 = vpop.f32.mrb[0].mxu0
      %v576 = vpop.f32.mrb[0].mxu0
      %v577 = vadd.f32 0.0, %v576
      %v578 = vpop.f32.mrb[0].mxu0
      %579 = vmatprep.mubr.bf16.mxu0 0
      %580 = vmatmul.mubr.bf16.gmra.mrb[0].mxu0 %v466
      %v581 = vpop.f32.mrb[0].mxu0
      %v582 = vadd.f32 0.0, %v581
      %v583 = vpop.f32.mrb[0].mxu0
      %v584 = vpop.f32.mrb[0].mxu0
      %v585 = vadd.f32 0.0, %v584
      %v586 = vpop.f32.mrb[0].mxu0
      %587 = vmatprep.mubr.bf16.mxu0 0
      %588 = vmatmul.mubr.bf16.gmra.mrb[0].mxu0 %v469
      %v589 = vpop.f32.mrb[0].mxu0
      %v590 = vadd.f32 0.0, %v589
      %v591 = vpop.f32.mrb[0].mxu0
      %v592 = vpop.f32.mrb[0].mxu0
      %v593 = vadd.f32 0.0, %v592
      %v594 = vpop.f32.mrb[0].mxu0
      %595 = vmatprep.mubr.bf16.mxu0 0
      %596 = vmatmul.mubr.bf16.gmra.mrb[0].mxu0 %v472
      %v597 = vpop.f32.mrb[0].mxu0
      %v598 = vadd.f32 0.0, %v597
      %v599 = vpop.f32.mrb[0].mxu0
      %v600 = vpop.f32.mrb[0].mxu0
      %v601 = vadd.f32 0.0, %v600
      %v602 = vpop.f32.mrb[0].mxu0
      %603 = vmatprep.mubr.bf16.mxu0 0
      %604 = vmatmul.mubr.bf16.gmra.mrb[0].mxu0 %v475
      %v605 = vpop.f32.mrb[0].mxu0
      %v606 = vadd.f32 0.0, %v605
      %v607 = vpop.f32.mrb[0].mxu0
      %v608 = vpop.f32.mrb[0].mxu0
      %v609 = vadd.f32 0.0, %v608
      %v610 = vpop.f32.mrb[0].mxu0
      %611 = vmatprep.mubr.bf16.mxu0 0
      %612 = vmatmul.mubr.bf16.gmra.mrb[0].mxu0 %v478
      %v613 = vpop.f32.mrb[0].mxu0
      %v614 = vadd.f32 0.0, %v613
      %v615 = vpop.f32.mrb[0].mxu0
      %v616 = vpop.f32.mrb[0].mxu0
      %v617 = vadd.f32 0.0, %v616
      %v618 = vpop.f32.mrb[0].mxu0
      %619 = vmatprep.mubr.bf16.mxu0 0
      %620 = vmatmul.mubr.bf16.gmra.mrb[0].mxu0 %v481
      %v621 = vpop.f32.mrb[0].mxu0
      %v622 = vadd.f32 0.0, %v621
      %v623 = vpop.f32.mrb[0].mxu0
      %v624 = vpop.f32.mrb[0].mxu0
      %v625 = vadd.f32 0.0, %v624
      %v626 = vpop.f32.mrb[0].mxu0
      %627 = vmatprep.mubr.bf16.mxu0 0
      %628 = vmatmul.mubr.bf16.gmra.mrb[0].mxu0 %v484
      %v629 = vpop.f32.mrb[0].mxu0
      %v630 = vadd.f32 0.0, %v629
      %v631 = vpop.f32.mrb[0].mxu0
      %v632 = vpop.f32.mrb[0].mxu0
      %v633 = vadd.f32 0.0, %v632
      %v634 = vpop.f32.mrb[0].mxu0
      %635 = vmatprep.mubr.bf16.mxu0 0
      %636 = vmatmul.mubr.bf16.gmra.mrb[0].mxu0 %v487
      %v637 = vpop.f32.mrb[0].mxu0
      %v638 = vadd.f32 0.0, %v637
      %v639 = vpop.f32.mrb[0].mxu0
      %v640 = vpop.f32.mrb[0].mxu0
      %v641 = vadd.f32 0.0, %v640
      %v642 = vpop.f32.mrb[0].mxu0
      %643 = vmatprep.mubr.bf16.mxu0 0
      %644 = vmatmul.mubr.bf16.gmra.mrb[0].mxu0 %v490
      %v645 = vpop.f32.mrb[0].mxu0
      %v646 = vadd.f32 0.0, %v645
      %v647 = vpop.f32.mrb[0].mxu0
      %v648 = vpop.f32.mrb[0].mxu0
      %v649 = vadd.f32 0.0, %v648
      %v650 = vpop.f32.mrb[0].mxu0
      %651 = vmatprep.mubr.bf16.mxu0 0
      %652 = vmatmul.mubr.bf16.gmra.mrb[0].mxu0 %v493
      %v653 = vpop.f32.mrb[0].mxu0
      %v654 = vadd.f32 0.0, %v653
      %v655 = vpop.f32.mrb[0].mxu0
      %v656 = vpop.f32.mrb[0].mxu0
      %v657 = vadd.f32 0.0, %v656
      %v658 = vpop.f32.mrb[0].mxu0
      %659 = vdwg.mxu0
      %v692 = vunpack.c.l.b16 %v300
      %v693 = vunpack.c.l.b16 %v301
      %v694 = vunpack.c.l.b16 %v302
      %v695 = vunpack.c.l.b16 %v303
      %v696 = vunpack.c.l.b16 %v304
      %v697 = vunpack.c.l.b16 %v305
      %v698 = vunpack.c.l.b16 %v306
      %v699 = vunpack.c.l.b16 %v307
      %v700 = vunpack.c.l.b16 %v308
      %v701 = vunpack.c.l.b16 %v309
      %v702 = vunpack.c.l.b16 %v310
      %v703 = vunpack.c.l.b16 %v311
      %v704 = vunpack.c.l.b16 %v312
      %v705 = vunpack.c.l.b16 %v313
      %v706 = vunpack.c.l.b16 %v314
      %v707 = vunpack.c.l.b16 %v315
      %v708 = vunpack.c.l.b16 %v316
      %v709 = vunpack.c.l.b16 %v317
      %v710 = vunpack.c.l.b16 %v318
      %v711 = vunpack.c.l.b16 %v319
      %v712 = vunpack.c.l.b16 %v320
      %v713 = vunpack.c.l.b16 %v321
      %v714 = vunpack.c.l.b16 %v322
      %v715 = vunpack.c.l.b16 %v323
      %v716 = vunpack.c.l.b16 %v324
      %v717 = vunpack.c.l.b16 %v325
      %v718 = vunpack.c.l.b16 %v326
      %v719 = vunpack.c.l.b16 %v327
      %v720 = vunpack.c.l.b16 %v328
      %v721 = vunpack.c.l.b16 %v329
      %v722 = vunpack.c.l.b16 %v330
      %v723 = vunpack.c.l.b16 %v331
      %v724 = vpack.c.b16 %v693, %v692
      %v725 = vpack.c.b16 %v695, %v694
      %v726 = vpack.c.b16 %v697, %v696
      %v727 = vpack.c.b16 %v699, %v698
      %v728 = vpack.c.b16 %v701, %v700
      %v729 = vpack.c.b16 %v703, %v702
      %v730 = vpack.c.b16 %v705, %v704
      %v731 = vpack.c.b16 %v707, %v706
      %v732 = vpack.c.b16 %v709, %v708
      %v733 = vpack.c.b16 %v711, %v710
      %v734 = vpack.c.b16 %v713, %v712
      %v735 = vpack.c.b16 %v715, %v714
      %v736 = vpack.c.b16 %v717, %v716
      %v737 = vpack.c.b16 %v719, %v718
      %v738 = vpack.c.b16 %v721, %v720
      %v739 = vpack.c.b16 %v723, %v722
      %v741 = vsel %vm446, %v724, 0
      %v744 = vsel %vm446, %v725, 0
      %v747 = vsel %vm446, %v726, 0
      %v750 = vsel %vm446, %v727, 0
      %v753 = vsel %vm446, %v728, 0
      %v756 = vsel %vm446, %v729, 0
      %v759 = vsel %vm446, %v730, 0
      %v762 = vsel %vm446, %v731, 0
      %v765 = vsel %vm446, %v732, 0
      %v768 = vsel %vm446, %v733, 0
      %v771 = vsel %vm446, %v734, 0
      %v774 = vsel %vm446, %v735, 0
      %v777 = vsel %vm446, %v736, 0
      %v780 = vsel %vm446, %v737, 0
      %v783 = vsel %vm446, %v738, 0
      %v786 = vsel %vm446, %v739, 0
      %v789 = vsel %vm495, %v364, 0
      %791 = vmatprep.subr.bf16.mxu0 0
      %792 = vmatpush1.bf16.msra.mxu0 %v789
      %793 = vmatprep.subr.bf16.mxu0 0
      %794 = vmatpush1.bf16.msra.mxu0 0
      %795 = vmatprep.subr.bf16.mxu0 0
      %796 = vmatpush1.bf16.msra.mxu0 0
      %797 = vmatprep.subr.bf16.mxu0 0
      %798 = vmatpush1.bf16.msra.mxu0 0
      %799 = vmatprep.subr.bf16.mxu0 0
      %800 = vmatpush1.bf16.msra.mxu0 0
      %801 = vmatprep.subr.bf16.mxu0 0
      %802 = vmatpush1.bf16.msra.mxu0 0
      %803 = vmatprep.subr.bf16.mxu0 0
      %804 = vmatpush1.bf16.msra.mxu0 0
      %805 = vmatprep.subr.bf16.mxu0 0
      %806 = vmatpush1.bf16.msra.mxu0 0
      %807 = vmatprep.subr.bf16.mxu0 0
      %808 = vmatpush1.bf16.msra.mxu0 0
      %809 = vmatprep.subr.bf16.mxu0 0
      %810 = vmatpush1.bf16.msra.mxu0 0
      %811 = vmatprep.subr.bf16.mxu0 0
      %812 = vmatpush1.bf16.msra.mxu0 0
      %813 = vmatprep.subr.bf16.mxu0 0
      %814 = vmatpush1.bf16.msra.mxu0 0
      %815 = vmatprep.subr.bf16.mxu0 0
      %816 = vmatpush1.bf16.msra.mxu0 0
      %817 = vmatprep.subr.bf16.mxu0 0
      %818 = vmatpush1.bf16.msra.mxu0 0
      %819 = vmatprep.subr.bf16.mxu0 0
      %820 = vmatpush1.bf16.msra.mxu0 0
      %821 = vmatprep.subr.bf16.mxu0 0
      %822 = vmatpush1.bf16.msra.mxu0 0
      %823 = vmatprep.mubr.bf16.mxu0 0
      %824 = vmatmul.mubr.bf16.gmra.mrb[0].mxu0 %v741
      %v825 = vpop.f32.mrb[0].mxu0
      %v826 = vadd.f32 %v534, %v825
      %v827 = vpop.f32.mrb[0].mxu0
      %v828 = vpop.f32.mrb[0].mxu0
      %v829 = vadd.f32 %v537, %v828
      %v830 = vpop.f32.mrb[0].mxu0
      %831 = vmatprep.mubr.bf16.mxu0 0
      %832 = vmatmul.mubr.bf16.gmra.mrb[0].mxu0 %v744
      %v833 = vpop.f32.mrb[0].mxu0
      %v834 = vadd.f32 %v542, %v833
      %v835 = vpop.f32.mrb[0].mxu0
      %v836 = vpop.f32.mrb[0].mxu0
      %v837 = vadd.f32 %v545, %v836
      %v838 = vpop.f32.mrb[0].mxu0
      %839 = vmatprep.mubr.bf16.mxu0 0
      %840 = vmatmul.mubr.bf16.gmra.mrb[0].mxu0 %v747
      %v841 = vpop.f32.mrb[0].mxu0
      %v842 = vadd.f32 %v550, %v841
      %v843 = vpop.f32.mrb[0].mxu0
      %v844 = vpop.f32.mrb[0].mxu0
      %v845 = vadd.f32 %v553, %v844
      %v846 = vpop.f32.mrb[0].mxu0
      %847 = vmatprep.mubr.bf16.mxu0 0
      %848 = vmatmul.mubr.bf16.gmra.mrb[0].mxu0 %v750
      %v849 = vpop.f32.mrb[0].mxu0
      %v850 = vadd.f32 %v558, %v849
      %v851 = vpop.f32.mrb[0].mxu0
      %v852 = vpop.f32.mrb[0].mxu0
      %v853 = vadd.f32 %v561, %v852
      %v854 = vpop.f32.mrb[0].mxu0
      %855 = vmatprep.mubr.bf16.mxu0 0
      %856 = vmatmul.mubr.bf16.gmra.mrb[0].mxu0 %v753
      %v857 = vpop.f32.mrb[0].mxu0
      %v858 = vadd.f32 %v566, %v857
      %v859 = vpop.f32.mrb[0].mxu0
      %v860 = vpop.f32.mrb[0].mxu0
      %v861 = vadd.f32 %v569, %v860
      %v862 = vpop.f32.mrb[0].mxu0
      %863 = vmatprep.mubr.bf16.mxu0 0
      %864 = vmatmul.mubr.bf16.gmra.mrb[0].mxu0 %v756
      %v865 = vpop.f32.mrb[0].mxu0
      %v866 = vadd.f32 %v574, %v865
      %v867 = vpop.f32.mrb[0].mxu0
      %v868 = vpop.f32.mrb[0].mxu0
      %v869 = vadd.f32 %v577, %v868
      %v870 = vpop.f32.mrb[0].mxu0
      %871 = vmatprep.mubr.bf16.mxu0 0
      %872 = vmatmul.mubr.bf16.gmra.mrb[0].mxu0 %v759
      %v873 = vpop.f32.mrb[0].mxu0
      %v874 = vadd.f32 %v582, %v873
      %v875 = vpop.f32.mrb[0].mxu0
      %v876 = vpop.f32.mrb[0].mxu0
      %v877 = vadd.f32 %v585, %v876
      %v878 = vpop.f32.mrb[0].mxu0
      %879 = vmatprep.mubr.bf16.mxu0 0
      %880 = vmatmul.mubr.bf16.gmra.mrb[0].mxu0 %v762
      %v881 = vpop.f32.mrb[0].mxu0
      %v882 = vadd.f32 %v590, %v881
      %v883 = vpop.f32.mrb[0].mxu0
      %v884 = vpop.f32.mrb[0].mxu0
      %v885 = vadd.f32 %v593, %v884
      %v886 = vpop.f32.mrb[0].mxu0
      %887 = vmatprep.mubr.bf16.mxu0 0
      %888 = vmatmul.mubr.bf16.gmra.mrb[0].mxu0 %v765
      %v889 = vpop.f32.mrb[0].mxu0
      %v890 = vadd.f32 %v598, %v889
      %v891 = vpop.f32.mrb[0].mxu0
      %v892 = vpop.f32.mrb[0].mxu0
      %v893 = vadd.f32 %v601, %v892
      %v894 = vpop.f32.mrb[0].mxu0
      %895 = vmatprep.mubr.bf16.mxu0 0
      %896 = vmatmul.mubr.bf16.gmra.mrb[0].mxu0 %v768
      %v897 = vpop.f32.mrb[0].mxu0
      %v898 = vadd.f32 %v606, %v897
      %v899 = vpop.f32.mrb[0].mxu0
      %v900 = vpop.f32.mrb[0].mxu0
      %v901 = vadd.f32 %v609, %v900
      %v902 = vpop.f32.mrb[0].mxu0
      %903 = vmatprep.mubr.bf16.mxu0 0
      %904 = vmatmul.mubr.bf16.gmra.mrb[0].mxu0 %v771
      %v905 = vpop.f32.mrb[0].mxu0
      %v906 = vadd.f32 %v614, %v905
      %v907 = vpop.f32.mrb[0].mxu0
      %v908 = vpop.f32.mrb[0].mxu0
      %v909 = vadd.f32 %v617, %v908
      %v910 = vpop.f32.mrb[0].mxu0
      %911 = vmatprep.mubr.bf16.mxu0 0
      %912 = vmatmul.mubr.bf16.gmra.mrb[0].mxu0 %v774
      %v913 = vpop.f32.mrb[0].mxu0
      %v914 = vadd.f32 %v622, %v913
      %v915 = vpop.f32.mrb[0].mxu0
      %v916 = vpop.f32.mrb[0].mxu0
      %v917 = vadd.f32 %v625, %v916
      %v918 = vpop.f32.mrb[0].mxu0
      %919 = vmatprep.mubr.bf16.mxu0 0
      %920 = vmatmul.mubr.bf16.gmra.mrb[0].mxu0 %v777
      %v921 = vpop.f32.mrb[0].mxu0
      %v922 = vadd.f32 %v630, %v921
      %v923 = vpop.f32.mrb[0].mxu0
      %v924 = vpop.f32.mrb[0].mxu0
      %v925 = vadd.f32 %v633, %v924
      %v926 = vpop.f32.mrb[0].mxu0
      %927 = vmatprep.mubr.bf16.mxu0 0
      %928 = vmatmul.mubr.bf16.gmra.mrb[0].mxu0 %v780
      %v929 = vpop.f32.mrb[0].mxu0
      %v930 = vadd.f32 %v638, %v929
      %v931 = vpop.f32.mrb[0].mxu0
      %v932 = vpop.f32.mrb[0].mxu0
      %v933 = vadd.f32 %v641, %v932
      %v934 = vpop.f32.mrb[0].mxu0
      %935 = vmatprep.mubr.bf16.mxu0 0
      %936 = vmatmul.mubr.bf16.gmra.mrb[0].mxu0 %v783
      %v937 = vpop.f32.mrb[0].mxu0
      %v938 = vadd.f32 %v646, %v937
      %v939 = vpop.f32.mrb[0].mxu0
      %v940 = vpop.f32.mrb[0].mxu0
      %v941 = vadd.f32 %v649, %v940
      %v942 = vpop.f32.mrb[0].mxu0
      %943 = vmatprep.mubr.bf16.mxu0 0
      %944 = vmatmul.mubr.bf16.gmra.mrb[0].mxu0 %v786
      %v945 = vpop.f32.mrb[0].mxu0
      %v946 = vadd.f32 %v654, %v945
      %v947 = vpop.f32.mrb[0].mxu0
      %v948 = vpop.f32.mrb[0].mxu0
      %v949 = vadd.f32 %v657, %v948
      %v950 = vpop.f32.mrb[0].mxu0
      %951 = vdwg.mxu0
      %v952 = vld [vmem:[%s4] sm:$0x1]
      %v954 = vlaneseq
      %v955 = vshrl.u32 %v954, 7
      %v956 = vsub.s32 0, %v955
      %v957 = vrot.slane %v952, %v956
      %v959 = vadd.f32 %v826, %v957
      %v960 = vadd.f32 %v829, %v957
      %v961 = vadd.f32 %v834, %v957
      %v962 = vadd.f32 %v837, %v957
      %v963 = vadd.f32 %v842, %v957
      %v964 = vadd.f32 %v845, %v957
      %v965 = vadd.f32 %v850, %v957
      %v966 = vadd.f32 %v853, %v957
      %v967 = vadd.f32 %v858, %v957
      %v968 = vadd.f32 %v861, %v957
      %v969 = vadd.f32 %v866, %v957
      %v970 = vadd.f32 %v869, %v957
      %v971 = vadd.f32 %v874, %v957
      %v972 = vadd.f32 %v877, %v957
      %v973 = vadd.f32 %v882, %v957
      %v974 = vadd.f32 %v885, %v957
      %v975 = vadd.f32 %v890, %v957
      %v976 = vadd.f32 %v893, %v957
      %v977 = vadd.f32 %v898, %v957
      %v978 = vadd.f32 %v901, %v957
      %v979 = vadd.f32 %v906, %v957
      %v980 = vadd.f32 %v909, %v957
      %v981 = vadd.f32 %v914, %v957
      %v982 = vadd.f32 %v917, %v957
      %v983 = vadd.f32 %v922, %v957
      %v984 = vadd.f32 %v925, %v957
      %v985 = vadd.f32 %v930, %v957
      %v986 = vadd.f32 %v933, %v957
      %v987 = vadd.f32 %v938, %v957
      %v988 = vadd.f32 %v941, %v957
      %v989 = vadd.f32 %v946, %v957
      %v990 = vadd.f32 %v949, %v957
      %v991 = vmax.f32 %v959, 0.0
      %v992 = vmax.f32 %v960, 0.0
      %v993 = vmax.f32 %v961, 0.0
      %v994 = vmax.f32 %v962, 0.0
      %v995 = vmax.f32 %v963, 0.0
      %v996 = vmax.f32 %v964, 0.0
      %v997 = vmax.f32 %v965, 0.0
      %v998 = vmax.f32 %v966, 0.0
      %v999 = vmax.f32 %v967, 0.0
      %v1000 = vmax.f32 %v968, 0.0
      %v1001 = vmax.f32 %v969, 0.0
      %v1002 = vmax.f32 %v970, 0.0
      %v1003 = vmax.f32 %v971, 0.0
      %v1004 = vmax.f32 %v972, 0.0
      %v1005 = vmax.f32 %v973, 0.0
      %v1006 = vmax.f32 %v974, 0.0
      %v1007 = vmax.f32 %v975, 0.0
      %v1008 = vmax.f32 %v976, 0.0
      %v1009 = vmax.f32 %v977, 0.0
      %v1010 = vmax.f32 %v978, 0.0
      %v1011 = vmax.f32 %v979, 0.0
      %v1012 = vmax.f32 %v980, 0.0
      %v1013 = vmax.f32 %v981, 0.0
      %v1014 = vmax.f32 %v982, 0.0
      %v1015 = vmax.f32 %v983, 0.0
      %v1016 = vmax.f32 %v984, 0.0
      %v1017 = vmax.f32 %v985, 0.0
      %v1018 = vmax.f32 %v986, 0.0
      %v1019 = vmax.f32 %v987, 0.0
      %v1020 = vmax.f32 %v988, 0.0
      %v1021 = vmax.f32 %v989, 0.0
      %v1022 = vmax.f32 %v990, 0.0
      %vm1023 = vcmask 60416
      %1024 = vst.msk [vmem:[#allocation2] sm:$0xf] %vm1023, 0
      %1025 = vst.msk [vmem:[#allocation2 + $0x4] sm:$0xf] %vm1023, 0
      %vm1026 = vcmask 57344
      %1027 = vst.msk [vmem:[#allocation2 + $0x8] sm:$0x1] %vm1026, 0
      %s1028 = scalar_lea.vmem [#allocation2], 204
      %1029 = vst.msk [vmem:[%s1028] sm:$0xf] %vm1023, 0
      %1030 = vst.msk [vmem:[%s1028 + $0x4] sm:$0xf] %vm1023, 0
      %1031 = vst.msk [vmem:[%s1028 + $0x8] sm:$0x1] %vm1026, 0
      %vm1032 = vcmask 57344
      %vm1033 = vsmask.f32 256
      %vm1034 = vmand %vm1032, %vm1033
      %v1035 = vld [vmem:[#allocation2] sm:$0x1]
      %v1036 = vsel %vm1034, 0, %v1035
      %1037 = vst [vmem:[#allocation2] sm:$0x1] %v1036
      %v1038 = vld [vmem:[#allocation2 + $0xc] sm:$0x1]
      %v1039 = vsel %vm1034, 0, %v1038
      %1040 = vst [vmem:[#allocation2 + $0xc] sm:$0x1] %v1039
      %v1041 = vld [vmem:[#allocation2 + $0x18] sm:$0x1]
      %v1042 = vsel %vm1034, 0, %v1041
      %1043 = vst [vmem:[#allocation2 + $0x18] sm:$0x1] %v1042
      %v1044 = vld [vmem:[#allocation2 + $0x24] sm:$0x1]
      %v1045 = vsel %vm1034, 0, %v1044
      %1046 = vst [vmem:[#allocation2 + $0x24] sm:$0x1] %v1045
      %v1047 = vld [vmem:[#allocation2 + $0x30] sm:$0x1]
      %v1048 = vsel %vm1034, 0, %v1047
      %1049 = vst [vmem:[#allocation2 + $0x30] sm:$0x1] %v1048
      %v1050 = vld [vmem:[#allocation2 + $0x3c] sm:$0x1]
      %v1051 = vsel %vm1034, 0, %v1050
      %1052 = vst [vmem:[#allocation2 + $0x3c] sm:$0x1] %v1051
      %v1053 = vld [vmem:[#allocation2 + $0x48] sm:$0x1]
      %v1054 = vsel %vm1034, 0, %v1053
      %1055 = vst [vmem:[#allocation2 + $0x48] sm:$0x1] %v1054
      %v1056 = vld [vmem:[#allocation2 + $0x54] sm:$0x1]
      %v1057 = vsel %vm1034, 0, %v1056
      %1058 = vst [vmem:[#allocation2 + $0x54] sm:$0x1] %v1057
      %v1059 = vld [vmem:[#allocation2 + $0x60] sm:$0x1]
      %v1060 = vsel %vm1034, 0, %v1059
      %1061 = vst [vmem:[#allocation2 + $0x60] sm:$0x1] %v1060
      %v1062 = vld [vmem:[#allocation2 + $0x6c] sm:$0x1]
      %v1063 = vsel %vm1034, 0, %v1062
      %1064 = vst [vmem:[#allocation2 + $0x6c] sm:$0x1] %v1063
      %v1065 = vld [vmem:[#allocation2 + $0x78] sm:$0x1]
      %v1066 = vsel %vm1034, 0, %v1065
      %1067 = vst [vmem:[#allocation2 + $0x78] sm:$0x1] %v1066
      %v1068 = vld [vmem:[#allocation2 + $0x84] sm:$0x1]
      %v1069 = vsel %vm1034, 0, %v1068
      %1070 = vst [vmem:[#allocation2 + $0x84] sm:$0x1] %v1069
      %v1071 = vld [vmem:[#allocation2 + $0x90] sm:$0x1]
      %v1072 = vsel %vm1034, 0, %v1071
      %1073 = vst [vmem:[#allocation2 + $0x90] sm:$0x1] %v1072
      %v1074 = vld [vmem:[#allocation2 + $0x9c] sm:$0x1]
      %v1075 = vsel %vm1034, 0, %v1074
      %1076 = vst [vmem:[#allocation2 + $0x9c] sm:$0x1] %v1075
      %v1077 = vld [vmem:[#allocation2 + $0xa8] sm:$0x1]
      %v1078 = vsel %vm1034, 0, %v1077
      %1079 = vst [vmem:[#allocation2 + $0xa8] sm:$0x1] %v1078
      %v1080 = vld [vmem:[#allocation2 + $0xb4] sm:$0x1]
      %v1081 = vsel %vm1034, 0, %v1080
      %1082 = vst [vmem:[#allocation2 + $0xb4] sm:$0x1] %v1081
      %v1083 = vld [vmem:[#allocation2 + $0xc0] sm:$0x1]
      %v1084 = vsel %vm1034, 0, %v1083
      %1085 = vst [vmem:[#allocation2 + $0xc0] sm:$0x1] %v1084
      %v1086 = vld [vmem:[#allocation2 + $0xcc] sm:$0x1]
      %v1087 = vsel %vm1034, 0, %v1086
      %1088 = vst [vmem:[#allocation2 + $0xcc] sm:$0x1] %v1087
      %vm1089 = vsmask.f32 7938
      %vm1090 = vmand %vm1032, %vm1089
      %v1091 = vld [vmem:[#allocation2 + $0x8] sm:$0x1]
      %v1092 = vsel %vm1090, 0, %v1091
      %1093 = vst [vmem:[#allocation2 + $0x8] sm:$0x1] %v1092
      %v1094 = vld [vmem:[#allocation2 + $0x14] sm:$0x1]
      %v1095 = vsel %vm1090, 0, %v1094
      %1096 = vst [vmem:[#allocation2 + $0x14] sm:$0x1] %v1095
      %v1097 = vld [vmem:[#allocation2 + $0x20] sm:$0x1]
      %v1098 = vsel %vm1090, 0, %v1097
      %1099 = vst [vmem:[#allocation2 + $0x20] sm:$0x1] %v1098
      %v1100 = vld [vmem:[#allocation2 + $0x2c] sm:$0x1]
      %v1101 = vsel %vm1090, 0, %v1100
      %1102 = vst [vmem:[#allocation2 + $0x2c] sm:$0x1] %v1101
      %v1103 = vld [vmem:[#allocation2 + $0x38] sm:$0x1]
      %v1104 = vsel %vm1090, 0, %v1103
      %1105 = vst [vmem:[#allocation2 + $0x38] sm:$0x1] %v1104
      %v1106 = vld [vmem:[#allocation2 + $0x44] sm:$0x1]
      %v1107 = vsel %vm1090, 0, %v1106
      %1108 = vst [vmem:[#allocation2 + $0x44] sm:$0x1] %v1107
      %v1109 = vld [vmem:[#allocation2 + $0x50] sm:$0x1]
      %v1110 = vsel %vm1090, 0, %v1109
      %1111 = vst [vmem:[#allocation2 + $0x50] sm:$0x1] %v1110
      %v1112 = vld [vmem:[#allocation2 + $0x5c] sm:$0x1]
      %v1113 = vsel %vm1090, 0, %v1112
      %1114 = vst [vmem:[#allocation2 + $0x5c] sm:$0x1] %v1113
      %v1115 = vld [vmem:[#allocation2 + $0x68] sm:$0x1]
      %v1116 = vsel %vm1090, 0, %v1115
      %1117 = vst [vmem:[#allocation2 + $0x68] sm:$0x1] %v1116
      %v1118 = vld [vmem:[#allocation2 + $0x74] sm:$0x1]
      %v1119 = vsel %vm1090, 0, %v1118
      %1120 = vst [vmem:[#allocation2 + $0x74] sm:$0x1] %v1119
      %v1121 = vld [vmem:[#allocation2 + $0x80] sm:$0x1]
      %v1122 = vsel %vm1090, 0, %v1121
      %1123 = vst [vmem:[#allocation2 + $0x80] sm:$0x1] %v1122
      %v1124 = vld [vmem:[#allocation2 + $0x8c] sm:$0x1]
      %v1125 = vsel %vm1090, 0, %v1124
      %1126 = vst [vmem:[#allocation2 + $0x8c] sm:$0x1] %v1125
      %v1127 = vld [vmem:[#allocation2 + $0x98] sm:$0x1]
      %v1128 = vsel %vm1090, 0, %v1127
      %1129 = vst [vmem:[#allocation2 + $0x98] sm:$0x1] %v1128
      %v1130 = vld [vmem:[#allocation2 + $0xa4] sm:$0x1]
      %v1131 = vsel %vm1090, 0, %v1130
      %1132 = vst [vmem:[#allocation2 + $0xa4] sm:$0x1] %v1131
      %v1133 = vld [vmem:[#allocation2 + $0xb0] sm:$0x1]
      %v1134 = vsel %vm1090, 0, %v1133
      %1135 = vst [vmem:[#allocation2 + $0xb0] sm:$0x1] %v1134
      %v1136 = vld [vmem:[#allocation2 + $0xbc] sm:$0x1]
      %v1137 = vsel %vm1090, 0, %v1136
      %1138 = vst [vmem:[#allocation2 + $0xbc] sm:$0x1] %v1137
      %v1139 = vld [vmem:[#allocation2 + $0xc8] sm:$0x1]
      %v1140 = vsel %vm1090, 0, %v1139
      %1141 = vst [vmem:[#allocation2 + $0xc8] sm:$0x1] %v1140
      %v1142 = vld [vmem:[#allocation2 + $0xd4] sm:$0x1]
      %v1143 = vsel %vm1090, 0, %v1142
      %1144 = vst [vmem:[#allocation2 + $0xd4] sm:$0x1] %v1143
      %v1145 = vpack.c.bf16 %v992, %v991
      %v1146 = vpack.c.bf16 %v994, %v993
      %v1147 = vpack.c.bf16 %v996, %v995
      %v1148 = vpack.c.bf16 %v998, %v997
      %v1149 = vpack.c.bf16 %v1000, %v999
      %v1150 = vpack.c.bf16 %v1002, %v1001
      %v1151 = vpack.c.bf16 %v1004, %v1003
      %v1152 = vpack.c.bf16 %v1006, %v1005
      %v1153 = vpack.c.bf16 %v1008, %v1007
      %v1154 = vpack.c.bf16 %v1010, %v1009
      %v1155 = vpack.c.bf16 %v1012, %v1011
      %v1156 = vpack.c.bf16 %v1014, %v1013
      %v1157 = vpack.c.bf16 %v1016, %v1015
      %v1158 = vpack.c.bf16 %v1018, %v1017
      %v1159 = vpack.c.bf16 %v1020, %v1019
      %v1160 = vpack.c.bf16 %v1022, %v1021
      %v1177 = vunpack.c.l.b16 %v1145
      %v1178 = vunpack.c.h.b16 %v1145
      %v1179 = vunpack.c.l.b16 %v1146
      %v1180 = vunpack.c.h.b16 %v1146
      %v1181 = vunpack.c.l.b16 %v1147
      %v1182 = vunpack.c.h.b16 %v1147
      %v1183 = vunpack.c.l.b16 %v1148
      %v1184 = vunpack.c.h.b16 %v1148
      %v1185 = vunpack.c.l.b16 %v1149
      %v1186 = vunpack.c.h.b16 %v1149
      %v1187 = vunpack.c.l.b16 %v1150
      %v1188 = vunpack.c.h.b16 %v1150
      %v1189 = vunpack.c.l.b16 %v1151
      %v1190 = vunpack.c.h.b16 %v1151
      %v1191 = vunpack.c.l.b16 %v1152
      %v1192 = vunpack.c.h.b16 %v1152
      %v1193 = vunpack.c.l.b16 %v1153
      %v1194 = vunpack.c.h.b16 %v1153
      %v1195 = vunpack.c.l.b16 %v1154
      %v1196 = vunpack.c.h.b16 %v1154
      %v1197 = vunpack.c.l.b16 %v1155
      %v1198 = vunpack.c.h.b16 %v1155
      %v1199 = vunpack.c.l.b16 %v1156
      %v1200 = vunpack.c.h.b16 %v1156
      %v1201 = vunpack.c.l.b16 %v1157
      %v1202 = vunpack.c.h.b16 %v1157
      %v1203 = vunpack.c.l.b16 %v1158
      %v1204 = vunpack.c.h.b16 %v1158
      %v1205 = vunpack.c.l.b16 %v1159
      %v1206 = vunpack.c.h.b16 %v1159
      %v1207 = vunpack.c.l.b16 %v1160
      %v1208 = vunpack.c.h.b16 %v1160
      %v1209 = vpack.c.b16 %v1177, %v1177
      %v1210 = vpack.c.b16 %v1178, %v1178
      %v1211 = vpack.c.b16 %v1179, %v1179
      %v1212 = vpack.c.b16 %v1180, %v1180
      %v1213 = vpack.c.b16 %v1181, %v1181
      %v1214 = vpack.c.b16 %v1182, %v1182
      %v1215 = vpack.c.b16 %v1183, %v1183
      %v1216 = vpack.c.b16 %v1184, %v1184
      %v1217 = vpack.c.b16 %v1185, %v1185
      %v1218 = vpack.c.b16 %v1186, %v1186
      %v1219 = vpack.c.b16 %v1187, %v1187
      %v1220 = vpack.c.b16 %v1188, %v1188
      %v1221 = vpack.c.b16 %v1189, %v1189
      %v1222 = vpack.c.b16 %v1190, %v1190
      %v1223 = vpack.c.b16 %v1191, %v1191
      %v1224 = vpack.c.b16 %v1192, %v1192
      %v1225 = vpack.c.b16 %v1193, %v1193
      %v1226 = vpack.c.b16 %v1194, %v1194
      %v1227 = vpack.c.b16 %v1195, %v1195
      %v1228 = vpack.c.b16 %v1196, %v1196
      %v1229 = vpack.c.b16 %v1197, %v1197
      %v1230 = vpack.c.b16 %v1198, %v1198
      %v1231 = vpack.c.b16 %v1199, %v1199
      %v1232 = vpack.c.b16 %v1200, %v1200
      %v1233 = vpack.c.b16 %v1201, %v1201
      %v1234 = vpack.c.b16 %v1202, %v1202
      %v1235 = vpack.c.b16 %v1203, %v1203
      %v1236 = vpack.c.b16 %v1204, %v1204
      %v1237 = vpack.c.b16 %v1205, %v1205
      %v1238 = vpack.c.b16 %v1206, %v1206
      %v1239 = vpack.c.b16 %v1207, %v1207
      %v1240 = vpack.c.b16 %v1208, %v1208
      %vm1241 = vsmask.f32 4368
      %vm1242 = vmor %vm1033, %vm1241
      %v1244 = vshrl.u32 %v1209, 16
      %v1246 = vrot.slane %v1244, 7
      %v1247 = vshll.u32 %v1209, 16
      %v1249 = vor.u32 %v1246, %v1247
      %v1250 = vrot.slane %v1246, 4
      %v1252 = vshrl.u32 %v1210, 16
      %v1254 = vrot.slane %v1252, 7
      %v1255 = vshll.u32 %v1210, 16
      %v1257 = vor.u32 %v1254, %v1255
      %v1258 = vsel %vm1242, %v1250, %v1257
      %v1259 = vrot.slane %v1254, 4
      %v1261 = vshrl.u32 %v1211, 16
      %v1263 = vrot.slane %v1261, 7
      %v1264 = vshll.u32 %v1211, 16
      %v1266 = vor.u32 %v1263, %v1264
      %v1267 = vrot.slane %v1263, 4
      %v1269 = vshrl.u32 %v1212, 16
      %v1271 = vrot.slane %v1269, 7
      %v1272 = vshll.u32 %v1212, 16
      %v1274 = vor.u32 %v1271, %v1272
      %v1275 = vsel %vm1242, %v1267, %v1274
      %v1276 = vrot.slane %v1271, 4
      %v1278 = vshrl.u32 %v1213, 16
      %v1280 = vrot.slane %v1278, 7
      %v1281 = vshll.u32 %v1213, 16
      %v1283 = vor.u32 %v1280, %v1281
      %v1284 = vrot.slane %v1280, 4
      %v1286 = vshrl.u32 %v1214, 16
      %v1288 = vrot.slane %v1286, 7
      %v1289 = vshll.u32 %v1214, 16
      %v1291 = vor.u32 %v1288, %v1289
      %v1292 = vsel %vm1242, %v1284, %v1291
      %v1293 = vrot.slane %v1288, 4
      %v1295 = vshrl.u32 %v1215, 16
      %v1297 = vrot.slane %v1295, 7
      %v1298 = vshll.u32 %v1215, 16
      %v1300 = vor.u32 %v1297, %v1298
      %v1301 = vrot.slane %v1297, 4
      %v1303 = vshrl.u32 %v1216, 16
      %v1305 = vrot.slane %v1303, 7
      %v1306 = vshll.u32 %v1216, 16
      %v1308 = vor.u32 %v1305, %v1306
      %v1309 = vsel %vm1242, %v1301, %v1308
      %v1310 = vrot.slane %v1305, 4
      %v1312 = vshrl.u32 %v1217, 16
      %v1314 = vrot.slane %v1312, 7
      %v1315 = vshll.u32 %v1217, 16
      %v1317 = vor.u32 %v1314, %v1315
      %v1318 = vrot.slane %v1314, 4
      %v1320 = vshrl.u32 %v1218, 16
      %v1322 = vrot.slane %v1320, 7
      %v1323 = vshll.u32 %v1218, 16
      %v1325 = vor.u32 %v1322, %v1323
      %v1326 = vsel %vm1242, %v1318, %v1325
      %v1327 = vrot.slane %v1322, 4
      %v1329 = vshrl.u32 %v1219, 16
      %v1331 = vrot.slane %v1329, 7
      %v1332 = vshll.u32 %v1219, 16
      %v1334 = vor.u32 %v1331, %v1332
      %v1335 = vrot.slane %v1331, 4
      %v1337 = vshrl.u32 %v1220, 16
      %v1339 = vrot.slane %v1337, 7
      %v1340 = vshll.u32 %v1220, 16
      %v1342 = vor.u32 %v1339, %v1340
      %v1343 = vsel %vm1242, %v1335, %v1342
      %v1344 = vrot.slane %v1339, 4
      %v1346 = vshrl.u32 %v1221, 16
      %v1348 = vrot.slane %v1346, 7
      %v1349 = vshll.u32 %v1221, 16
      %v1351 = vor.u32 %v1348, %v1349
      %v1352 = vrot.slane %v1348, 4
      %v1354 = vshrl.u32 %v1222, 16
      %v1356 = vrot.slane %v1354, 7
      %v1357 = vshll.u32 %v1222, 16
      %v1359 = vor.u32 %v1356, %v1357
      %v1360 = vsel %vm1242, %v1352, %v1359
      %v1361 = vrot.slane %v1356, 4
      %v1363 = vshrl.u32 %v1223, 16
      %v1365 = vrot.slane %v1363, 7
      %v1366 = vshll.u32 %v1223, 16
      %v1368 = vor.u32 %v1365, %v1366
      %v1369 = vrot.slane %v1365, 4
      %v1371 = vshrl.u32 %v1224, 16
      %v1373 = vrot.slane %v1371, 7
      %v1374 = vshll.u32 %v1224, 16
      %v1376 = vor.u32 %v1373, %v1374
      %v1377 = vsel %vm1242, %v1369, %v1376
      %v1378 = vrot.slane %v1373, 4
      %v1380 = vshrl.u32 %v1225, 16
      %v1382 = vrot.slane %v1380, 7
      %v1383 = vshll.u32 %v1225, 16
      %v1385 = vor.u32 %v1382, %v1383
      %v1386 = vrot.slane %v1382, 4
      %v1388 = vshrl.u32 %v1226, 16
      %v1390 = vrot.slane %v1388, 7
      %v1391 = vshll.u32 %v1226, 16
      %v1393 = vor.u32 %v1390, %v1391
      %v1394 = vsel %vm1242, %v1386, %v1393
      %v1395 = vrot.slane %v1390, 4
      %v1397 = vshrl.u32 %v1227, 16
      %v1399 = vrot.slane %v1397, 7
      %v1400 = vshll.u32 %v1227, 16
      %v1402 = vor.u32 %v1399, %v1400
      %v1403 = vrot.slane %v1399, 4
      %v1405 = vshrl.u32 %v1228, 16
      %v1407 = vrot.slane %v1405, 7
      %v1408 = vshll.u32 %v1228, 16
      %v1410 = vor.u32 %v1407, %v1408
      %v1411 = vsel %vm1242, %v1403, %v1410
      %v1412 = vrot.slane %v1407, 4
      %v1414 = vshrl.u32 %v1229, 16
      %v1416 = vrot.slane %v1414, 7
      %v1417 = vshll.u32 %v1229, 16
      %v1419 = vor.u32 %v1416, %v1417
      %v1420 = vrot.slane %v1416, 4
      %v1422 = vshrl.u32 %v1230, 16
      %v1424 = vrot.slane %v1422, 7
      %v1425 = vshll.u32 %v1230, 16
      %v1427 = vor.u32 %v1424, %v1425
      %v1428 = vsel %vm1242, %v1420, %v1427
      %v1429 = vrot.slane %v1424, 4
      %v1431 = vshrl.u32 %v1231, 16
      %v1433 = vrot.slane %v1431, 7
      %v1434 = vshll.u32 %v1231, 16
      %v1436 = vor.u32 %v1433, %v1434
      %v1437 = vrot.slane %v1433, 4
      %v1439 = vshrl.u32 %v1232, 16
      %v1441 = vrot.slane %v1439, 7
      %v1442 = vshll.u32 %v1232, 16
      %v1444 = vor.u32 %v1441, %v1442
      %v1445 = vsel %vm1242, %v1437, %v1444
      %v1446 = vrot.slane %v1441, 4
      %v1448 = vshrl.u32 %v1233, 16
      %v1450 = vrot.slane %v1448, 7
      %v1451 = vshll.u32 %v1233, 16
      %v1453 = vor.u32 %v1450, %v1451
      %v1454 = vrot.slane %v1450, 4
      %v1456 = vshrl.u32 %v1234, 16
      %v1458 = vrot.slane %v1456, 7
      %v1459 = vshll.u32 %v1234, 16
      %v1461 = vor.u32 %v1458, %v1459
      %v1462 = vsel %vm1242, %v1454, %v1461
      %v1463 = vrot.slane %v1458, 4
      %v1465 = vshrl.u32 %v1235, 16
      %v1467 = vrot.slane %v1465, 7
      %v1468 = vshll.u32 %v1235, 16
      %v1470 = vor.u32 %v1467, %v1468
      %v1471 = vrot.slane %v1467, 4
      %v1473 = vshrl.u32 %v1236, 16
      %v1475 = vrot.slane %v1473, 7
      %v1476 = vshll.u32 %v1236, 16
      %v1478 = vor.u32 %v1475, %v1476
      %v1479 = vsel %vm1242, %v1471, %v1478
      %v1480 = vrot.slane %v1475, 4
      %v1482 = vshrl.u32 %v1237, 16
      %v1484 = vrot.slane %v1482, 7
      %v1485 = vshll.u32 %v1237, 16
      %v1487 = vor.u32 %v1484, %v1485
      %v1488 = vrot.slane %v1484, 4
      %v1490 = vshrl.u32 %v1238, 16
      %v1492 = vrot.slane %v1490, 7
      %v1493 = vshll.u32 %v1238, 16
      %v1495 = vor.u32 %v1492, %v1493
      %v1496 = vsel %vm1242, %v1488, %v1495
      %v1497 = vrot.slane %v1492, 4
      %v1499 = vshrl.u32 %v1239, 16
      %v1501 = vrot.slane %v1499, 7
      %v1502 = vshll.u32 %v1239, 16
      %v1504 = vor.u32 %v1501, %v1502
      %v1505 = vrot.slane %v1501, 4
      %v1507 = vshrl.u32 %v1240, 16
      %v1509 = vrot.slane %v1507, 7
      %v1510 = vshll.u32 %v1240, 16
      %v1512 = vor.u32 %v1509, %v1510
      %v1513 = vsel %vm1242, %v1505, %v1512
      %v1514 = vrot.slane %v1509, 4
      %s1563 = scalar_lea.vmem [#allocation2], 12
      %vm1564 = vcmask 60416
      %vm1565 = vmand %vm1564, %vm1089
      %v1566 = vld [vmem:[%s1563] sm:$0xf]
      %v1567 = vsel %vm1565, %v1249, %v1566
      %1568 = vst [vmem:[%s1563] sm:$0xf] %v1567
      %1569 = vst.msk [vmem:[%s1563 + $0x4] sm:$0xf] %vm1023, %v1258
      %v1570 = vld [vmem:[%s1563 + $0x8] sm:$0x1]
      %v1571 = vsel %vm1034, %v1259, %v1570
      %1572 = vst [vmem:[%s1563 + $0x8] sm:$0x1] %v1571
      %v1573 = vld [vmem:[%s1563 + $0xc] sm:$0xf]
      %v1574 = vsel %vm1565, %v1266, %v1573
      %1575 = vst [vmem:[%s1563 + $0xc] sm:$0xf] %v1574
      %1576 = vst.msk [vmem:[%s1563 + $0x10] sm:$0xf] %vm1023, %v1275
      %v1577 = vld [vmem:[%s1563 + $0x14] sm:$0x1]
      %v1578 = vsel %vm1034, %v1276, %v1577
      %1579 = vst [vmem:[%s1563 + $0x14] sm:$0x1] %v1578
      %v1580 = vld [vmem:[%s1563 + $0x18] sm:$0xf]
      %v1581 = vsel %vm1565, %v1283, %v1580
      %1582 = vst [vmem:[%s1563 + $0x18] sm:$0xf] %v1581
      %1583 = vst.msk [vmem:[%s1563 + $0x1c] sm:$0xf] %vm1023, %v1292
      %v1584 = vld [vmem:[%s1563 + $0x20] sm:$0x1]
      %v1585 = vsel %vm1034, %v1293, %v1584
      %1586 = vst [vmem:[%s1563 + $0x20] sm:$0x1] %v1585
      %v1587 = vld [vmem:[%s1563 + $0x24] sm:$0xf]
      %v1588 = vsel %vm1565, %v1300, %v1587
      %1589 = vst [vmem:[%s1563 + $0x24] sm:$0xf] %v1588
      %1590 = vst.msk [vmem:[%s1563 + $0x28] sm:$0xf] %vm1023, %v1309
      %v1591 = vld [vmem:[%s1563 + $0x2c] sm:$0x1]
      %v1592 = vsel %vm1034, %v1310, %v1591
      %1593 = vst [vmem:[%s1563 + $0x2c] sm:$0x1] %v1592
      %v1594 = vld [vmem:[%s1563 + $0x30] sm:$0xf]
      %v1595 = vsel %vm1565, %v1317, %v1594
      %1596 = vst [vmem:[%s1563 + $0x30] sm:$0xf] %v1595
      %1597 = vst.msk [vmem:[%s1563 + $0x34] sm:$0xf] %vm1023, %v1326
      %v1598 = vld [vmem:[%s1563 + $0x38] sm:$0x1]
      %v1599 = vsel %vm1034, %v1327, %v1598
      %1600 = vst [vmem:[%s1563 + $0x38] sm:$0x1] %v1599
      %v1601 = vld [vmem:[%s1563 + $0x3c] sm:$0xf]
      %v1602 = vsel %vm1565, %v1334, %v1601
      %1603 = vst [vmem:[%s1563 + $0x3c] sm:$0xf] %v1602
      %1604 = vst.msk [vmem:[%s1563 + $0x40] sm:$0xf] %vm1023, %v1343
      %v1605 = vld [vmem:[%s1563 + $0x44] sm:$0x1]
      %v1606 = vsel %vm1034, %v1344, %v1605
      %1607 = vst [vmem:[%s1563 + $0x44] sm:$0x1] %v1606
      %v1608 = vld [vmem:[%s1563 + $0x48] sm:$0xf]
      %v1609 = vsel %vm1565, %v1351, %v1608
      %1610 = vst [vmem:[%s1563 + $0x48] sm:$0xf] %v1609
      %1611 = vst.msk [vmem:[%s1563 + $0x4c] sm:$0xf] %vm1023, %v1360
      %v1612 = vld [vmem:[%s1563 + $0x50] sm:$0x1]
      %v1613 = vsel %vm1034, %v1361, %v1612
      %1614 = vst [vmem:[%s1563 + $0x50] sm:$0x1] %v1613
      %v1615 = vld [vmem:[%s1563 + $0x54] sm:$0xf]
      %v1616 = vsel %vm1565, %v1368, %v1615
      %1617 = vst [vmem:[%s1563 + $0x54] sm:$0xf] %v1616
      %1618 = vst.msk [vmem:[%s1563 + $0x58] sm:$0xf] %vm1023, %v1377
      %v1619 = vld [vmem:[%s1563 + $0x5c] sm:$0x1]
      %v1620 = vsel %vm1034, %v1378, %v1619
      %1621 = vst [vmem:[%s1563 + $0x5c] sm:$0x1] %v1620
      %v1622 = vld [vmem:[%s1563 + $0x60] sm:$0xf]
      %v1623 = vsel %vm1565, %v1385, %v1622
      %1624 = vst [vmem:[%s1563 + $0x60] sm:$0xf] %v1623
      %1625 = vst.msk [vmem:[%s1563 + $0x64] sm:$0xf] %vm1023, %v1394
      %v1626 = vld [vmem:[%s1563 + $0x68] sm:$0x1]
      %v1627 = vsel %vm1034, %v1395, %v1626
      %1628 = vst [vmem:[%s1563 + $0x68] sm:$0x1] %v1627
      %v1629 = vld [vmem:[%s1563 + $0x6c] sm:$0xf]
      %v1630 = vsel %vm1565, %v1402, %v1629
      %1631 = vst [vmem:[%s1563 + $0x6c] sm:$0xf] %v1630
      %1632 = vst.msk [vmem:[%s1563 + $0x70] sm:$0xf] %vm1023, %v1411
      %v1633 = vld [vmem:[%s1563 + $0x74] sm:$0x1]
      %v1634 = vsel %vm1034, %v1412, %v1633
      %1635 = vst [vmem:[%s1563 + $0x74] sm:$0x1] %v1634
      %v1636 = vld [vmem:[%s1563 + $0x78] sm:$0xf]
      %v1637 = vsel %vm1565, %v1419, %v1636
      %1638 = vst [vmem:[%s1563 + $0x78] sm:$0xf] %v1637
      %1639 = vst.msk [vmem:[%s1563 + $0x7c] sm:$0xf] %vm1023, %v1428
      %v1640 = vld [vmem:[%s1563 + $0x80] sm:$0x1]
      %v1641 = vsel %vm1034, %v1429, %v1640
      %1642 = vst [vmem:[%s1563 + $0x80] sm:$0x1] %v1641
      %v1643 = vld [vmem:[%s1563 + $0x84] sm:$0xf]
      %v1644 = vsel %vm1565, %v1436, %v1643
      %1645 = vst [vmem:[%s1563 + $0x84] sm:$0xf] %v1644
      %1646 = vst.msk [vmem:[%s1563 + $0x88] sm:$0xf] %vm1023, %v1445
      %v1647 = vld [vmem:[%s1563 + $0x8c] sm:$0x1]
      %v1648 = vsel %vm1034, %v1446, %v1647
      %1649 = vst [vmem:[%s1563 + $0x8c] sm:$0x1] %v1648
      %v1650 = vld [vmem:[%s1563 + $0x90] sm:$0xf]
      %v1651 = vsel %vm1565, %v1453, %v1650
      %1652 = vst [vmem:[%s1563 + $0x90] sm:$0xf] %v1651
      %1653 = vst.msk [vmem:[%s1563 + $0x94] sm:$0xf] %vm1023, %v1462
      %v1654 = vld [vmem:[%s1563 + $0x98] sm:$0x1]
      %v1655 = vsel %vm1034, %v1463, %v1654
      %1656 = vst [vmem:[%s1563 + $0x98] sm:$0x1] %v1655
      %v1657 = vld [vmem:[%s1563 + $0x9c] sm:$0xf]
      %v1658 = vsel %vm1565, %v1470, %v1657
      %1659 = vst [vmem:[%s1563 + $0x9c] sm:$0xf] %v1658
      %1660 = vst.msk [vmem:[%s1563 + $0xa0] sm:$0xf] %vm1023, %v1479
      %v1661 = vld [vmem:[%s1563 + $0xa4] sm:$0x1]
      %v1662 = vsel %vm1034, %v1480, %v1661
      %1663 = vst [vmem:[%s1563 + $0xa4] sm:$0x1] %v1662
      %v1664 = vld [vmem:[%s1563 + $0xa8] sm:$0xf]
      %v1665 = vsel %vm1565, %v1487, %v1664
      %1666 = vst [vmem:[%s1563 + $0xa8] sm:$0xf] %v1665
      %1667 = vst.msk [vmem:[%s1563 + $0xac] sm:$0xf] %vm1023, %v1496
      %v1668 = vld [vmem:[%s1563 + $0xb0] sm:$0x1]
      %v1669 = vsel %vm1034, %v1497, %v1668
      %1670 = vst [vmem:[%s1563 + $0xb0] sm:$0x1] %v1669
      %v1671 = vld [vmem:[%s1563 + $0xb4] sm:$0xf]
      %v1672 = vsel %vm1565, %v1504, %v1671
      %1673 = vst [vmem:[%s1563 + $0xb4] sm:$0xf] %v1672
      %1674 = vst.msk [vmem:[%s1563 + $0xb8] sm:$0xf] %vm1023, %v1513
      %v1675 = vld [vmem:[%s1563 + $0xbc] sm:$0x1]
      %v1676 = vsel %vm1034, %v1514, %v1675
      %1677 = vst [vmem:[%s1563 + $0xbc] sm:$0x1] %v1676
      %v1678 = vld [vmem:[#allocation2] sm:$0xf]
      %v1679 = vld [vmem:[#allocation2 + $0x4] sm:$0xf]
      %v1680 = vld [vmem:[#allocation2 + $0xc] sm:$0xf]
      %v1681 = vld [vmem:[#allocation2 + $0x10] sm:$0xf]
      %v1682 = vld [vmem:[#allocation2 + $0x18] sm:$0xf]
      %v1683 = vld [vmem:[#allocation2 + $0x1c] sm:$0xf]
      %v1684 = vld [vmem:[#allocation2 + $0x24] sm:$0xf]
      %v1685 = vld [vmem:[#allocation2 + $0x28] sm:$0xf]
      %v1686 = vld [vmem:[#allocation2 + $0x30] sm:$0xf]
      %v1687 = vld [vmem:[#allocation2 + $0x34] sm:$0xf]
      %v1688 = vld [vmem:[#allocation2 + $0x3c] sm:$0xf]
      %v1689 = vld [vmem:[#allocation2 + $0x40] sm:$0xf]
      %v1690 = vld [vmem:[#allocation2 + $0x48] sm:$0xf]
      %v1691 = vld [vmem:[#allocation2 + $0x4c] sm:$0xf]
      %v1692 = vld [vmem:[#allocation2 + $0x54] sm:$0xf]
      %v1693 = vld [vmem:[#allocation2 + $0x58] sm:$0xf]
      %v1694 = vld [vmem:[#allocation2 + $0x60] sm:$0xf]
      %v1695 = vld [vmem:[#allocation2 + $0x64] sm:$0xf]
      %v1696 = vld [vmem:[#allocation2 + $0x6c] sm:$0xf]
      %v1697 = vld [vmem:[#allocation2 + $0x70] sm:$0xf]
      %v1698 = vld [vmem:[#allocation2 + $0x78] sm:$0xf]
      %v1699 = vld [vmem:[#allocation2 + $0x7c] sm:$0xf]
      %v1700 = vld [vmem:[#allocation2 + $0x84] sm:$0xf]
      %v1701 = vld [vmem:[#allocation2 + $0x88] sm:$0xf]
      %v1702 = vld [vmem:[#allocation2 + $0x90] sm:$0xf]
      %v1703 = vld [vmem:[#allocation2 + $0x94] sm:$0xf]
      %v1704 = vld [vmem:[#allocation2 + $0x9c] sm:$0xf]
      %v1705 = vld [vmem:[#allocation2 + $0xa0] sm:$0xf]
      %v1706 = vld [vmem:[#allocation2 + $0xa8] sm:$0xf]
      %v1707 = vld [vmem:[#allocation2 + $0xac] sm:$0xf]
      %v1708 = vld [vmem:[#allocation2 + $0xb4] sm:$0xf]
      %v1709 = vld [vmem:[#allocation2 + $0xb8] sm:$0xf]
      %v1710 = vld [vmem:[%s5] sm:$0xf]
      %v1711 = vld [vmem:[#allocation2 + $0x8] sm:$0x1]
      %v1712 = vld [vmem:[#allocation2 + $0x14] sm:$0x1]
      %v1713 = vld [vmem:[#allocation2 + $0x20] sm:$0x1]
      %v1714 = vld [vmem:[#allocation2 + $0x2c] sm:$0x1]
      %v1715 = vld [vmem:[#allocation2 + $0x38] sm:$0x1]
      %v1716 = vld [vmem:[#allocation2 + $0x44] sm:$0x1]
      %v1717 = vld [vmem:[#allocation2 + $0x50] sm:$0x1]
      %v1718 = vld [vmem:[#allocation2 + $0x5c] sm:$0x1]
      %v1719 = vld [vmem:[#allocation2 + $0x68] sm:$0x1]
      %v1720 = vld [vmem:[#allocation2 + $0x74] sm:$0x1]
      %v1721 = vld [vmem:[#allocation2 + $0x80] sm:$0x1]
      %v1722 = vld [vmem:[#allocation2 + $0x8c] sm:$0x1]
      %v1723 = vld [vmem:[#allocation2 + $0x98] sm:$0x1]
      %v1724 = vld [vmem:[#allocation2 + $0xa4] sm:$0x1]
      %v1725 = vld [vmem:[#allocation2 + $0xb0] sm:$0x1]
      %v1726 = vld [vmem:[#allocation2 + $0xbc] sm:$0x1]
      %vm1727 = vsmask.f32 3328
      %vm1728 = vsmask.f32 7440
      %vm1729 = vmor %vm1727, %vm1728
      %v1731 = vshrl.u32 %v1678, 16
      %v1733 = vrot.slane %v1731, 4
      %v1734 = vshll.u32 %v1678, 16
      %v1736 = vrot.slane %v1734, 5
      %v1737 = vor.u32 %v1733, %v1736
      %v1738 = vrot.slane %v1737, 4
      %v1740 = vshll.u32 %v1679, 16
      %v1742 = vrot.slane %v1740, 5
      %v1743 = vsel %vm1729, %v1738, %v1742
      %v1744 = vshrl.u32 %v1679, 16
      %v1746 = vrot.slane %v1744, 4
      %v1747 = vor.u32 %v1746, %v1742
      %v1748 = vrot.slane %v1747, 4
      %v1750 = vshll.u32 %v1711, 16
      %v1752 = vrot.slane %v1750, 5
      %v1753 = vsel %vm1729, %v1748, %v1752
      %v1755 = vshrl.u32 %v1680, 16
      %v1757 = vrot.slane %v1755, 4
      %v1758 = vshll.u32 %v1680, 16
      %v1760 = vrot.slane %v1758, 5
      %v1761 = vor.u32 %v1757, %v1760
      %v1762 = vrot.slane %v1761, 4
      %v1764 = vshll.u32 %v1681, 16
      %v1766 = vrot.slane %v1764, 5
      %v1767 = vsel %vm1729, %v1762, %v1766
      %v1768 = vshrl.u32 %v1681, 16
      %v1770 = vrot.slane %v1768, 4
      %v1771 = vor.u32 %v1770, %v1766
      %v1772 = vrot.slane %v1771, 4
      %v1774 = vshll.u32 %v1712, 16
      %v1776 = vrot.slane %v1774, 5
      %v1777 = vsel %vm1729, %v1772, %v1776
      %v1779 = vshrl.u32 %v1682, 16
      %v1781 = vrot.slane %v1779, 4
      %v1782 = vshll.u32 %v1682, 16
      %v1784 = vrot.slane %v1782, 5
      %v1785 = vor.u32 %v1781, %v1784
      %v1786 = vrot.slane %v1785, 4
      %v1788 = vshll.u32 %v1683, 16
      %v1790 = vrot.slane %v1788, 5
      %v1791 = vsel %vm1729, %v1786, %v1790
      %v1792 = vshrl.u32 %v1683, 16
      %v1794 = vrot.slane %v1792, 4
      %v1795 = vor.u32 %v1794, %v1790
      %v1796 = vrot.slane %v1795, 4
      %v1798 = vshll.u32 %v1713, 16
      %v1800 = vrot.slane %v1798, 5
      %v1801 = vsel %vm1729, %v1796, %v1800
      %v1803 = vshrl.u32 %v1684, 16
      %v1805 = vrot.slane %v1803, 4
      %v1806 = vshll.u32 %v1684, 16
      %v1808 = vrot.slane %v1806, 5
      %v1809 = vor.u32 %v1805, %v1808
      %v1810 = vrot.slane %v1809, 4
      %v1812 = vshll.u32 %v1685, 16
      %v1814 = vrot.slane %v1812, 5
      %v1815 = vsel %vm1729, %v1810, %v1814
      %v1816 = vshrl.u32 %v1685, 16
      %v1818 = vrot.slane %v1816, 4
      %v1819 = vor.u32 %v1818, %v1814
      %v1820 = vrot.slane %v1819, 4
      %v1822 = vshll.u32 %v1714, 16
      %v1824 = vrot.slane %v1822, 5
      %v1825 = vsel %vm1729, %v1820, %v1824
      %v1827 = vshrl.u32 %v1686, 16
      %v1829 = vrot.slane %v1827, 4
      %v1830 = vshll.u32 %v1686, 16
      %v1832 = vrot.slane %v1830, 5
      %v1833 = vor.u32 %v1829, %v1832
      %v1834 = vrot.slane %v1833, 4
      %v1836 = vshll.u32 %v1687, 16
      %v1838 = vrot.slane %v1836, 5
      %v1839 = vsel %vm1729, %v1834, %v1838
      %v1840 = vshrl.u32 %v1687, 16
      %v1842 = vrot.slane %v1840, 4
      %v1843 = vor.u32 %v1842, %v1838
      %v1844 = vrot.slane %v1843, 4
      %v1846 = vshll.u32 %v1715, 16
      %v1848 = vrot.slane %v1846, 5
      %v1849 = vsel %vm1729, %v1844, %v1848
      %v1851 = vshrl.u32 %v1688, 16
      %v1853 = vrot.slane %v1851, 4
      %v1854 = vshll.u32 %v1688, 16
      %v1856 = vrot.slane %v1854, 5
      %v1857 = vor.u32 %v1853, %v1856
      %v1858 = vrot.slane %v1857, 4
      %v1860 = vshll.u32 %v1689, 16
      %v1862 = vrot.slane %v1860, 5
      %v1863 = vsel %vm1729, %v1858, %v1862
      %v1864 = vshrl.u32 %v1689, 16
      %v1866 = vrot.slane %v1864, 4
      %v1867 = vor.u32 %v1866, %v1862
      %v1868 = vrot.slane %v1867, 4
      %v1870 = vshll.u32 %v1716, 16
      %v1872 = vrot.slane %v1870, 5
      %v1873 = vsel %vm1729, %v1868, %v1872
      %v1875 = vshrl.u32 %v1690, 16
      %v1877 = vrot.slane %v1875, 4
      %v1878 = vshll.u32 %v1690, 16
      %v1880 = vrot.slane %v1878, 5
      %v1881 = vor.u32 %v1877, %v1880
      %v1882 = vrot.slane %v1881, 4
      %v1884 = vshll.u32 %v1691, 16
      %v1886 = vrot.slane %v1884, 5
      %v1887 = vsel %vm1729, %v1882, %v1886
      %v1888 = vshrl.u32 %v1691, 16
      %v1890 = vrot.slane %v1888, 4
      %v1891 = vor.u32 %v1890, %v1886
      %v1892 = vrot.slane %v1891, 4
      %v1894 = vshll.u32 %v1717, 16
      %v1896 = vrot.slane %v1894, 5
      %v1897 = vsel %vm1729, %v1892, %v1896
      %v1899 = vshrl.u32 %v1692, 16
      %v1901 = vrot.slane %v1899, 4
      %v1902 = vshll.u32 %v1692, 16
      %v1904 = vrot.slane %v1902, 5
      %v1905 = vor.u32 %v1901, %v1904
      %v1906 = vrot.slane %v1905, 4
      %v1908 = vshll.u32 %v1693, 16
      %v1910 = vrot.slane %v1908, 5
      %v1911 = vsel %vm1729, %v1906, %v1910
      %v1912 = vshrl.u32 %v1693, 16
      %v1914 = vrot.slane %v1912, 4
      %v1915 = vor.u32 %v1914, %v1910
      %v1916 = vrot.slane %v1915, 4
      %v1918 = vshll.u32 %v1718, 16
      %v1920 = vrot.slane %v1918, 5
      %v1921 = vsel %vm1729, %v1916, %v1920
      %v1923 = vshrl.u32 %v1694, 16
      %v1925 = vrot.slane %v1923, 4
      %v1926 = vshll.u32 %v1694, 16
      %v1928 = vrot.slane %v1926, 5
      %v1929 = vor.u32 %v1925, %v1928
      %v1930 = vrot.slane %v1929, 4
      %v1932 = vshll.u32 %v1695, 16
      %v1934 = vrot.slane %v1932, 5
      %v1935 = vsel %vm1729, %v1930, %v1934
      %v1936 = vshrl.u32 %v1695, 16
      %v1938 = vrot.slane %v1936, 4
      %v1939 = vor.u32 %v1938, %v1934
      %v1940 = vrot.slane %v1939, 4
      %v1942 = vshll.u32 %v1719, 16
      %v1944 = vrot.slane %v1942, 5
      %v1945 = vsel %vm1729, %v1940, %v1944
      %v1947 = vshrl.u32 %v1696, 16
      %v1949 = vrot.slane %v1947, 4
      %v1950 = vshll.u32 %v1696, 16
      %v1952 = vrot.slane %v1950, 5
      %v1953 = vor.u32 %v1949, %v1952
      %v1954 = vrot.slane %v1953, 4
      %v1956 = vshll.u32 %v1697, 16
      %v1958 = vrot.slane %v1956, 5
      %v1959 = vsel %vm1729, %v1954, %v1958
      %v1960 = vshrl.u32 %v1697, 16
      %v1962 = vrot.slane %v1960, 4
      %v1963 = vor.u32 %v1962, %v1958
      %v1964 = vrot.slane %v1963, 4
      %v1966 = vshll.u32 %v1720, 16
      %v1968 = vrot.slane %v1966, 5
      %v1969 = vsel %vm1729, %v1964, %v1968
      %v1971 = vshrl.u32 %v1698, 16
      %v1973 = vrot.slane %v1971, 4
      %v1974 = vshll.u32 %v1698, 16
      %v1976 = vrot.slane %v1974, 5
      %v1977 = vor.u32 %v1973, %v1976
      %v1978 = vrot.slane %v1977, 4
      %v1980 = vshll.u32 %v1699, 16
      %v1982 = vrot.slane %v1980, 5
      %v1983 = vsel %vm1729, %v1978, %v1982
      %v1984 = vshrl.u32 %v1699, 16
      %v1986 = vrot.slane %v1984, 4
      %v1987 = vor.u32 %v1986, %v1982
      %v1988 = vrot.slane %v1987, 4
      %v1990 = vshll.u32 %v1721, 16
      %v1992 = vrot.slane %v1990, 5
      %v1993 = vsel %vm1729, %v1988, %v1992
      %v1995 = vshrl.u32 %v1700, 16
      %v1997 = vrot.slane %v1995, 4
      %v1998 = vshll.u32 %v1700, 16
      %v2000 = vrot.slane %v1998, 5
      %v2001 = vor.u32 %v1997, %v2000
      %v2002 = vrot.slane %v2001, 4
      %v2004 = vshll.u32 %v1701, 16
      %v2006 = vrot.slane %v2004, 5
      %v2007 = vsel %vm1729, %v2002, %v2006
      %v2008 = vshrl.u32 %v1701, 16
      %v2010 = vrot.slane %v2008, 4
      %v2011 = vor.u32 %v2010, %v2006
      %v2012 = vrot.slane %v2011, 4
      %v2014 = vshll.u32 %v1722, 16
      %v2016 = vrot.slane %v2014, 5
      %v2017 = vsel %vm1729, %v2012, %v2016
      %v2019 = vshrl.u32 %v1702, 16
      %v2021 = vrot.slane %v2019, 4
      %v2022 = vshll.u32 %v1702, 16
      %v2024 = vrot.slane %v2022, 5
      %v2025 = vor.u32 %v2021, %v2024
      %v2026 = vrot.slane %v2025, 4
      %v2028 = vshll.u32 %v1703, 16
      %v2030 = vrot.slane %v2028, 5
      %v2031 = vsel %vm1729, %v2026, %v2030
      %v2032 = vshrl.u32 %v1703, 16
      %v2034 = vrot.slane %v2032, 4
      %v2035 = vor.u32 %v2034, %v2030
      %v2036 = vrot.slane %v2035, 4
      %v2038 = vshll.u32 %v1723, 16
      %v2040 = vrot.slane %v2038, 5
      %v2041 = vsel %vm1729, %v2036, %v2040
      %v2043 = vshrl.u32 %v1704, 16
      %v2045 = vrot.slane %v2043, 4
      %v2046 = vshll.u32 %v1704, 16
      %v2048 = vrot.slane %v2046, 5
      %v2049 = vor.u32 %v2045, %v2048
      %v2050 = vrot.slane %v2049, 4
      %v2052 = vshll.u32 %v1705, 16
      %v2054 = vrot.slane %v2052, 5
      %v2055 = vsel %vm1729, %v2050, %v2054
      %v2056 = vshrl.u32 %v1705, 16
      %v2058 = vrot.slane %v2056, 4
      %v2059 = vor.u32 %v2058, %v2054
      %v2060 = vrot.slane %v2059, 4
      %v2062 = vshll.u32 %v1724, 16
      %v2064 = vrot.slane %v2062, 5
      %v2065 = vsel %vm1729, %v2060, %v2064
      %v2067 = vshrl.u32 %v1706, 16
      %v2069 = vrot.slane %v2067, 4
      %v2070 = vshll.u32 %v1706, 16
      %v2072 = vrot.slane %v2070, 5
      %v2073 = vor.u32 %v2069, %v2072
      %v2074 = vrot.slane %v2073, 4
      %v2076 = vshll.u32 %v1707, 16
      %v2078 = vrot.slane %v2076, 5
      %v2079 = vsel %vm1729, %v2074, %v2078
      %v2080 = vshrl.u32 %v1707, 16
      %v2082 = vrot.slane %v2080, 4
      %v2083 = vor.u32 %v2082, %v2078
      %v2084 = vrot.slane %v2083, 4
      %v2086 = vshll.u32 %v1725, 16
      %v2088 = vrot.slane %v2086, 5
      %v2089 = vsel %vm1729, %v2084, %v2088
      %v2091 = vshrl.u32 %v1708, 16
      %v2093 = vrot.slane %v2091, 4
      %v2094 = vshll.u32 %v1708, 16
      %v2096 = vrot.slane %v2094, 5
      %v2097 = vor.u32 %v2093, %v2096
      %v2098 = vrot.slane %v2097, 4
      %v2100 = vshll.u32 %v1709, 16
      %v2102 = vrot.slane %v2100, 5
      %v2103 = vsel %vm1729, %v2098, %v2102
      %v2104 = vshrl.u32 %v1709, 16
      %v2106 = vrot.slane %v2104, 4
      %v2107 = vor.u32 %v2106, %v2102
      %v2108 = vrot.slane %v2107, 4
      %v2110 = vshll.u32 %v1726, 16
      %v2112 = vrot.slane %v2110, 5
      %v2113 = vsel %vm1729, %v2108, %v2112
      %s2114 = scalar_lea.vmem %s5, 4
      %v2115 = vld [vmem:[%s2114] sm:$0xf]
      %v2116 = vunpack.c.l.b16 %v1743
      %v2117 = vunpack.c.l.b16 %v1753
      %v2118 = vunpack.c.l.b16 %v1767
      %v2119 = vunpack.c.l.b16 %v1777
      %v2120 = vunpack.c.l.b16 %v1791
      %v2121 = vunpack.c.l.b16 %v1801
      %v2122 = vunpack.c.l.b16 %v1815
      %v2123 = vunpack.c.l.b16 %v1825
      %v2124 = vunpack.c.l.b16 %v1839
      %v2125 = vunpack.c.l.b16 %v1849
      %v2126 = vunpack.c.l.b16 %v1863
      %v2127 = vunpack.c.l.b16 %v1873
      %v2128 = vunpack.c.l.b16 %v1887
      %v2129 = vunpack.c.l.b16 %v1897
      %v2130 = vunpack.c.l.b16 %v1911
      %v2131 = vunpack.c.l.b16 %v1921
      %v2132 = vunpack.c.l.b16 %v1935
      %v2133 = vunpack.c.l.b16 %v1945
      %v2134 = vunpack.c.l.b16 %v1959
      %v2135 = vunpack.c.l.b16 %v1969
      %v2136 = vunpack.c.l.b16 %v1983
      %v2137 = vunpack.c.l.b16 %v1993
      %v2138 = vunpack.c.l.b16 %v2007
      %v2139 = vunpack.c.l.b16 %v2017
      %v2140 = vunpack.c.l.b16 %v2031
      %v2141 = vunpack.c.l.b16 %v2041
      %v2142 = vunpack.c.l.b16 %v2055
      %v2143 = vunpack.c.l.b16 %v2065
      %v2144 = vunpack.c.l.b16 %v2079
      %v2145 = vunpack.c.l.b16 %v2089
      %v2146 = vunpack.c.l.b16 %v2103
      %v2147 = vunpack.c.l.b16 %v2113
      %v2148 = vpack.c.b16 %v2117, %v2116
      %v2149 = vpack.c.b16 %v2119, %v2118
      %v2150 = vpack.c.b16 %v2121, %v2120
      %v2151 = vpack.c.b16 %v2123, %v2122
      %v2152 = vpack.c.b16 %v2125, %v2124
      %v2153 = vpack.c.b16 %v2127, %v2126
      %v2154 = vpack.c.b16 %v2129, %v2128
      %v2155 = vpack.c.b16 %v2131, %v2130
      %v2156 = vpack.c.b16 %v2133, %v2132
      %v2157 = vpack.c.b16 %v2135, %v2134
      %v2158 = vpack.c.b16 %v2137, %v2136
      %v2159 = vpack.c.b16 %v2139, %v2138
      %v2160 = vpack.c.b16 %v2141, %v2140
      %v2161 = vpack.c.b16 %v2143, %v2142
      %v2162 = vpack.c.b16 %v2145, %v2144
      %v2163 = vpack.c.b16 %v2147, %v2146
      %vm2164 = vcmask 64512
      %v2166 = vsel %vm2164, %v2148, 0
      %v2169 = vsel %vm2164, %v2149, 0
      %v2172 = vsel %vm2164, %v2150, 0
      %v2175 = vsel %vm2164, %v2151, 0
      %v2178 = vsel %vm2164, %v2152, 0
      %v2181 = vsel %vm2164, %v2153, 0
      %v2184 = vsel %vm2164, %v2154, 0
      %v2187 = vsel %vm2164, %v2155, 0
      %v2190 = vsel %vm2164, %v2156, 0
      %v2193 = vsel %vm2164, %v2157, 0
      %v2196 = vsel %vm2164, %v2158, 0
      %v2199 = vsel %vm2164, %v2159, 0
      %v2202 = vsel %vm2164, %v2160, 0
      %v2205 = vsel %vm2164, %v2161, 0
      %v2208 = vsel %vm2164, %v2162, 0
      %v2211 = vsel %vm2164, %v2163, 0
      %vm2213 = vcmask 1043456
      %v2215 = vsel %vm2213, %v2115, 0
      %2217 = vmatprep.subr.bf16.mxu0 0
      %2218 = vmatpush1.bf16.msra.mxu0 %v2215
      %2219 = vmatprep.subr.bf16.mxu0 0
      %2220 = vmatpush1.bf16.msra.mxu0 0
      %2221 = vmatprep.subr.bf16.mxu0 0
      %2222 = vmatpush1.bf16.msra.mxu0 0
      %2223 = vmatprep.subr.bf16.mxu0 0
      %2224 = vmatpush1.bf16.msra.mxu0 0
      %2225 = vmatprep.subr.bf16.mxu0 0
      %2226 = vmatpush1.bf16.msra.mxu0 0
      %2227 = vmatprep.subr.bf16.mxu0 0
      %2228 = vmatpush1.bf16.msra.mxu0 0
      %2229 = vmatprep.subr.bf16.mxu0 0
      %2230 = vmatpush1.bf16.msra.mxu0 0
      %2231 = vmatprep.subr.bf16.mxu0 0
      %2232 = vmatpush1.bf16.msra.mxu0 0
      %2233 = vmatprep.subr.bf16.mxu0 0
      %2234 = vmatpush1.bf16.msra.mxu0 0
      %2235 = vmatprep.subr.bf16.mxu0 0
      %2236 = vmatpush1.bf16.msra.mxu0 0
      %2237 = vmatprep.subr.bf16.mxu0 0
      %2238 = vmatpush1.bf16.msra.mxu0 0
      %2239 = vmatprep.subr.bf16.mxu0 0
      %2240 = vmatpush1.bf16.msra.mxu0 0
      %2241 = vmatprep.subr.bf16.mxu0 0
      %2242 = vmatpush1.bf16.msra.mxu0 0
      %2243 = vmatprep.subr.bf16.mxu0 0
      %2244 = vmatpush1.bf16.msra.mxu0 0
      %2245 = vmatprep.subr.bf16.mxu0 0
      %2246 = vmatpush1.bf16.msra.mxu0 0
      %2247 = vmatprep.subr.bf16.mxu0 0
      %2248 = vmatpush1.bf16.msra.mxu0 0
      %2249 = vmatprep.mubr.bf16.mxu0 0
      %2250 = vmatmul.mubr.bf16.gmra.mrb[0].mxu0 %v2166
      %v2251 = vpop.f32.mrb[0].mxu0
      %v2252 = vadd.f32 0.0, %v2251
      %v2253 = vpop.f32.mrb[0].mxu0
      %v2254 = vpop.f32.mrb[0].mxu0
      %v2255 = vadd.f32 0.0, %v2254
      %v2256 = vpop.f32.mrb[0].mxu0
      %2257 = vmatprep.mubr.bf16.mxu0 0
      %2258 = vmatmul.mubr.bf16.gmra.mrb[0].mxu0 %v2169
      %v2259 = vpop.f32.mrb[0].mxu0
      %v2260 = vadd.f32 0.0, %v2259
      %v2261 = vpop.f32.mrb[0].mxu0
      %v2262 = vpop.f32.mrb[0].mxu0
      %v2263 = vadd.f32 0.0, %v2262
      %v2264 = vpop.f32.mrb[0].mxu0
      %2265 = vmatprep.mubr.bf16.mxu0 0
      %2266 = vmatmul.mubr.bf16.gmra.mrb[0].mxu0 %v2172
      %v2267 = vpop.f32.mrb[0].mxu0
      %v2268 = vadd.f32 0.0, %v2267
      %v2269 = vpop.f32.mrb[0].mxu0
      %v2270 = vpop.f32.mrb[0].mxu0
      %v2271 = vadd.f32 0.0, %v2270
      %v2272 = vpop.f32.mrb[0].mxu0
      %2273 = vmatprep.mubr.bf16.mxu0 0
      %2274 = vmatmul.mubr.bf16.gmra.mrb[0].mxu0 %v2175
      %v2275 = vpop.f32.mrb[0].mxu0
      %v2276 = vadd.f32 0.0, %v2275
      %v2277 = vpop.f32.mrb[0].mxu0
      %v2278 = vpop.f32.mrb[0].mxu0
      %v2279 = vadd.f32 0.0, %v2278
      %v2280 = vpop.f32.mrb[0].mxu0
      %2281 = vmatprep.mubr.bf16.mxu0 0
      %2282 = vmatmul.mubr.bf16.gmra.mrb[0].mxu0 %v2178
      %v2283 = vpop.f32.mrb[0].mxu0
      %v2284 = vadd.f32 0.0, %v2283
      %v2285 = vpop.f32.mrb[0].mxu0
      %v2286 = vpop.f32.mrb[0].mxu0
      %v2287 = vadd.f32 0.0, %v2286
      %v2288 = vpop.f32.mrb[0].mxu0
      %2289 = vmatprep.mubr.bf16.mxu0 0
      %2290 = vmatmul.mubr.bf16.gmra.mrb[0].mxu0 %v2181
      %v2291 = vpop.f32.mrb[0].mxu0
      %v2292 = vadd.f32 0.0, %v2291
      %v2293 = vpop.f32.mrb[0].mxu0
      %v2294 = vpop.f32.mrb[0].mxu0
      %v2295 = vadd.f32 0.0, %v2294
      %v2296 = vpop.f32.mrb[0].mxu0
      %2297 = vmatprep.mubr.bf16.mxu0 0
      %2298 = vmatmul.mubr.bf16.gmra.mrb[0].mxu0 %v2184
      %v2299 = vpop.f32.mrb[0].mxu0
      %v2300 = vadd.f32 0.0, %v2299
      %v2301 = vpop.f32.mrb[0].mxu0
      %v2302 = vpop.f32.mrb[0].mxu0
      %v2303 = vadd.f32 0.0, %v2302
      %v2304 = vpop.f32.mrb[0].mxu0
      %2305 = vmatprep.mubr.bf16.mxu0 0
      %2306 = vmatmul.mubr.bf16.gmra.mrb[0].mxu0 %v2187
      %v2307 = vpop.f32.mrb[0].mxu0
      %v2308 = vadd.f32 0.0, %v2307
      %v2309 = vpop.f32.mrb[0].mxu0
      %v2310 = vpop.f32.mrb[0].mxu0
      %v2311 = vadd.f32 0.0, %v2310
      %v2312 = vpop.f32.mrb[0].mxu0
      %2313 = vmatprep.mubr.bf16.mxu0 0
      %2314 = vmatmul.mubr.bf16.gmra.mrb[0].mxu0 %v2190
      %v2315 = vpop.f32.mrb[0].mxu0
      %v2316 = vadd.f32 0.0, %v2315
      %v2317 = vpop.f32.mrb[0].mxu0
      %v2318 = vpop.f32.mrb[0].mxu0
      %v2319 = vadd.f32 0.0, %v2318
      %v2320 = vpop.f32.mrb[0].mxu0
      %2321 = vmatprep.mubr.bf16.mxu0 0
      %2322 = vmatmul.mubr.bf16.gmra.mrb[0].mxu0 %v2193
      %v2323 = vpop.f32.mrb[0].mxu0
      %v2324 = vadd.f32 0.0, %v2323
      %v2325 = vpop.f32.mrb[0].mxu0
      %v2326 = vpop.f32.mrb[0].mxu0
      %v2327 = vadd.f32 0.0, %v2326
      %v2328 = vpop.f32.mrb[0].mxu0
      %2329 = vmatprep.mubr.bf16.mxu0 0
      %2330 = vmatmul.mubr.bf16.gmra.mrb[0].mxu0 %v2196
      %v2331 = vpop.f32.mrb[0].mxu0
      %v2332 = vadd.f32 0.0, %v2331
      %v2333 = vpop.f32.mrb[0].mxu0
      %v2334 = vpop.f32.mrb[0].mxu0
      %v2335 = vadd.f32 0.0, %v2334
      %v2336 = vpop.f32.mrb[0].mxu0
      %2337 = vmatprep.mubr.bf16.mxu0 0
      %2338 = vmatmul.mubr.bf16.gmra.mrb[0].mxu0 %v2199
      %v2339 = vpop.f32.mrb[0].mxu0
      %v2340 = vadd.f32 0.0, %v2339
      %v2341 = vpop.f32.mrb[0].mxu0
      %v2342 = vpop.f32.mrb[0].mxu0
      %v2343 = vadd.f32 0.0, %v2342
      %v2344 = vpop.f32.mrb[0].mxu0
      %2345 = vmatprep.mubr.bf16.mxu0 0
      %2346 = vmatmul.mubr.bf16.gmra.mrb[0].mxu0 %v2202
      %v2347 = vpop.f32.mrb[0].mxu0
      %v2348 = vadd.f32 0.0, %v2347
      %v2349 = vpop.f32.mrb[0].mxu0
      %v2350 = vpop.f32.mrb[0].mxu0
      %v2351 = vadd.f32 0.0, %v2350
      %v2352 = vpop.f32.mrb[0].mxu0
      %2353 = vmatprep.mubr.bf16.mxu0 0
      %2354 = vmatmul.mubr.bf16.gmra.mrb[0].mxu0 %v2205
      %v2355 = vpop.f32.mrb[0].mxu0
      %v2356 = vadd.f32 0.0, %v2355
      %v2357 = vpop.f32.mrb[0].mxu0
      %v2358 = vpop.f32.mrb[0].mxu0
      %v2359 = vadd.f32 0.0, %v2358
      %v2360 = vpop.f32.mrb[0].mxu0
      %2361 = vmatprep.mubr.bf16.mxu0 0
      %2362 = vmatmul.mubr.bf16.gmra.mrb[0].mxu0 %v2208
      %v2363 = vpop.f32.mrb[0].mxu0
      %v2364 = vadd.f32 0.0, %v2363
      %v2365 = vpop.f32.mrb[0].mxu0
      %v2366 = vpop.f32.mrb[0].mxu0
      %v2367 = vadd.f32 0.0, %v2366
      %v2368 = vpop.f32.mrb[0].mxu0
      %2369 = vmatprep.mubr.bf16.mxu0 0
      %2370 = vmatmul.mubr.bf16.gmra.mrb[0].mxu0 %v2211
      %v2371 = vpop.f32.mrb[0].mxu0
      %v2372 = vadd.f32 0.0, %v2371
      %v2373 = vpop.f32.mrb[0].mxu0
      %v2374 = vpop.f32.mrb[0].mxu0
      %v2375 = vadd.f32 0.0, %v2374
      %v2376 = vpop.f32.mrb[0].mxu0
      %2377 = vdwg.mxu0
      %v2410 = vunpack.c.l.b16 %v1678
      %v2411 = vunpack.c.l.b16 %v1679
      %v2412 = vunpack.c.l.b16 %v1680
      %v2413 = vunpack.c.l.b16 %v1681
      %v2414 = vunpack.c.l.b16 %v1682
      %v2415 = vunpack.c.l.b16 %v1683
      %v2416 = vunpack.c.l.b16 %v1684
      %v2417 = vunpack.c.l.b16 %v1685
      %v2418 = vunpack.c.l.b16 %v1686
      %v2419 = vunpack.c.l.b16 %v1687
      %v2420 = vunpack.c.l.b16 %v1688
      %v2421 = vunpack.c.l.b16 %v1689
      %v2422 = vunpack.c.l.b16 %v1690
      %v2423 = vunpack.c.l.b16 %v1691
      %v2424 = vunpack.c.l.b16 %v1692
      %v2425 = vunpack.c.l.b16 %v1693
      %v2426 = vunpack.c.l.b16 %v1694
      %v2427 = vunpack.c.l.b16 %v1695
      %v2428 = vunpack.c.l.b16 %v1696
      %v2429 = vunpack.c.l.b16 %v1697
      %v2430 = vunpack.c.l.b16 %v1698
      %v2431 = vunpack.c.l.b16 %v1699
      %v2432 = vunpack.c.l.b16 %v1700
      %v2433 = vunpack.c.l.b16 %v1701
      %v2434 = vunpack.c.l.b16 %v1702
      %v2435 = vunpack.c.l.b16 %v1703
      %v2436 = vunpack.c.l.b16 %v1704
      %v2437 = vunpack.c.l.b16 %v1705
      %v2438 = vunpack.c.l.b16 %v1706
      %v2439 = vunpack.c.l.b16 %v1707
      %v2440 = vunpack.c.l.b16 %v1708
      %v2441 = vunpack.c.l.b16 %v1709
      %v2442 = vpack.c.b16 %v2411, %v2410
      %v2443 = vpack.c.b16 %v2413, %v2412
      %v2444 = vpack.c.b16 %v2415, %v2414
      %v2445 = vpack.c.b16 %v2417, %v2416
      %v2446 = vpack.c.b16 %v2419, %v2418
      %v2447 = vpack.c.b16 %v2421, %v2420
      %v2448 = vpack.c.b16 %v2423, %v2422
      %v2449 = vpack.c.b16 %v2425, %v2424
      %v2450 = vpack.c.b16 %v2427, %v2426
      %v2451 = vpack.c.b16 %v2429, %v2428
      %v2452 = vpack.c.b16 %v2431, %v2430
      %v2453 = vpack.c.b16 %v2433, %v2432
      %v2454 = vpack.c.b16 %v2435, %v2434
      %v2455 = vpack.c.b16 %v2437, %v2436
      %v2456 = vpack.c.b16 %v2439, %v2438
      %v2457 = vpack.c.b16 %v2441, %v2440
      %v2459 = vsel %vm2164, %v2442, 0
      %v2462 = vsel %vm2164, %v2443, 0
      %v2465 = vsel %vm2164, %v2444, 0
      %v2468 = vsel %vm2164, %v2445, 0
      %v2471 = vsel %vm2164, %v2446, 0
      %v2474 = vsel %vm2164, %v2447, 0
      %v2477 = vsel %vm2164, %v2448, 0
      %v2480 = vsel %vm2164, %v2449, 0
      %v2483 = vsel %vm2164, %v2450, 0
      %v2486 = vsel %vm2164, %v2451, 0
      %v2489 = vsel %vm2164, %v2452, 0
      %v2492 = vsel %vm2164, %v2453, 0
      %v2495 = vsel %vm2164, %v2454, 0
      %v2498 = vsel %vm2164, %v2455, 0
      %v2501 = vsel %vm2164, %v2456, 0
      %v2504 = vsel %vm2164, %v2457, 0
      %v2507 = vsel %vm2213, %v1710, 0
      %2509 = vmatprep.subr.bf16.mxu0 0
      %2510 = vmatpush1.bf16.msra.mxu0 %v2507
      %2511 = vmatprep.subr.bf16.mxu0 0
      %2512 = vmatpush1.bf16.msra.mxu0 0
      %2513 = vmatprep.subr.bf16.mxu0 0
      %2514 = vmatpush1.bf16.msra.mxu0 0
      %2515 = vmatprep.subr.bf16.mxu0 0
      %2516 = vmatpush1.bf16.msra.mxu0 0
      %2517 = vmatprep.subr.bf16.mxu0 0
      %2518 = vmatpush1.bf16.msra.mxu0 0
      %2519 = vmatprep.subr.bf16.mxu0 0
      %2520 = vmatpush1.bf16.msra.mxu0 0
      %2521 = vmatprep.subr.bf16.mxu0 0
      %2522 = vmatpush1.bf16.msra.mxu0 0
      %2523 = vmatprep.subr.bf16.mxu0 0
      %2524 = vmatpush1.bf16.msra.mxu0 0
      %2525 = vmatprep.subr.bf16.mxu0 0
      %2526 = vmatpush1.bf16.msra.mxu0 0
      %2527 = vmatprep.subr.bf16.mxu0 0
      %2528 = vmatpush1.bf16.msra.mxu0 0
      %2529 = vmatprep.subr.bf16.mxu0 0
      %2530 = vmatpush1.bf16.msra.mxu0 0
      %2531 = vmatprep.subr.bf16.mxu0 0
      %2532 = vmatpush1.bf16.msra.mxu0 0
      %2533 = vmatprep.subr.bf16.mxu0 0
      %2534 = vmatpush1.bf16.msra.mxu0 0
      %2535 = vmatprep.subr.bf16.mxu0 0
      %2536 = vmatpush1.bf16.msra.mxu0 0
      %2537 = vmatprep.subr.bf16.mxu0 0
      %2538 = vmatpush1.bf16.msra.mxu0 0
      %2539 = vmatprep.subr.bf16.mxu0 0
      %2540 = vmatpush1.bf16.msra.mxu0 0
      %2541 = vmatprep.mubr.bf16.mxu0 0
      %2542 = vmatmul.mubr.bf16.gmra.mrb[0].mxu0 %v2459
      %v2543 = vpop.f32.mrb[0].mxu0
      %v2544 = vadd.f32 %v2252, %v2543
      %v2545 = vpop.f32.mrb[0].mxu0
      %v2546 = vpop.f32.mrb[0].mxu0
      %v2547 = vadd.f32 %v2255, %v2546
      %v2548 = vpop.f32.mrb[0].mxu0
      %2549 = vmatprep.mubr.bf16.mxu0 0
      %2550 = vmatmul.mubr.bf16.gmra.mrb[0].mxu0 %v2462
      %v2551 = vpop.f32.mrb[0].mxu0
      %v2552 = vadd.f32 %v2260, %v2551
      %v2553 = vpop.f32.mrb[0].mxu0
      %v2554 = vpop.f32.mrb[0].mxu0
      %v2555 = vadd.f32 %v2263, %v2554
      %v2556 = vpop.f32.mrb[0].mxu0
      %2557 = vmatprep.mubr.bf16.mxu0 0
      %2558 = vmatmul.mubr.bf16.gmra.mrb[0].mxu0 %v2465
      %v2559 = vpop.f32.mrb[0].mxu0
      %v2560 = vadd.f32 %v2268, %v2559
      %v2561 = vpop.f32.mrb[0].mxu0
      %v2562 = vpop.f32.mrb[0].mxu0
      %v2563 = vadd.f32 %v2271, %v2562
      %v2564 = vpop.f32.mrb[0].mxu0
      %2565 = vmatprep.mubr.bf16.mxu0 0
      %2566 = vmatmul.mubr.bf16.gmra.mrb[0].mxu0 %v2468
      %v2567 = vpop.f32.mrb[0].mxu0
      %v2568 = vadd.f32 %v2276, %v2567
      %v2569 = vpop.f32.mrb[0].mxu0
      %v2570 = vpop.f32.mrb[0].mxu0
      %v2571 = vadd.f32 %v2279, %v2570
      %v2572 = vpop.f32.mrb[0].mxu0
      %2573 = vmatprep.mubr.bf16.mxu0 0
      %2574 = vmatmul.mubr.bf16.gmra.mrb[0].mxu0 %v2471
      %v2575 = vpop.f32.mrb[0].mxu0
      %v2576 = vadd.f32 %v2284, %v2575
      %v2577 = vpop.f32.mrb[0].mxu0
      %v2578 = vpop.f32.mrb[0].mxu0
      %v2579 = vadd.f32 %v2287, %v2578
      %v2580 = vpop.f32.mrb[0].mxu0
      %2581 = vmatprep.mubr.bf16.mxu0 0
      %2582 = vmatmul.mubr.bf16.gmra.mrb[0].mxu0 %v2474
      %v2583 = vpop.f32.mrb[0].mxu0
      %v2584 = vadd.f32 %v2292, %v2583
      %v2585 = vpop.f32.mrb[0].mxu0
      %v2586 = vpop.f32.mrb[0].mxu0
      %v2587 = vadd.f32 %v2295, %v2586
      %v2588 = vpop.f32.mrb[0].mxu0
      %2589 = vmatprep.mubr.bf16.mxu0 0
      %2590 = vmatmul.mubr.bf16.gmra.mrb[0].mxu0 %v2477
      %v2591 = vpop.f32.mrb[0].mxu0
      %v2592 = vadd.f32 %v2300, %v2591
      %v2593 = vpop.f32.mrb[0].mxu0
      %v2594 = vpop.f32.mrb[0].mxu0
      %v2595 = vadd.f32 %v2303, %v2594
      %v2596 = vpop.f32.mrb[0].mxu0
      %2597 = vmatprep.mubr.bf16.mxu0 0
      %2598 = vmatmul.mubr.bf16.gmra.mrb[0].mxu0 %v2480
      %v2599 = vpop.f32.mrb[0].mxu0
      %v2600 = vadd.f32 %v2308, %v2599
      %v2601 = vpop.f32.mrb[0].mxu0
      %v2602 = vpop.f32.mrb[0].mxu0
      %v2603 = vadd.f32 %v2311, %v2602
      %v2604 = vpop.f32.mrb[0].mxu0
      %2605 = vmatprep.mubr.bf16.mxu0 0
      %2606 = vmatmul.mubr.bf16.gmra.mrb[0].mxu0 %v2483
      %v2607 = vpop.f32.mrb[0].mxu0
      %v2608 = vadd.f32 %v2316, %v2607
      %v2609 = vpop.f32.mrb[0].mxu0
      %v2610 = vpop.f32.mrb[0].mxu0
      %v2611 = vadd.f32 %v2319, %v2610
      %v2612 = vpop.f32.mrb[0].mxu0
      %2613 = vmatprep.mubr.bf16.mxu0 0
      %2614 = vmatmul.mubr.bf16.gmra.mrb[0].mxu0 %v2486
      %v2615 = vpop.f32.mrb[0].mxu0
      %v2616 = vadd.f32 %v2324, %v2615
      %v2617 = vpop.f32.mrb[0].mxu0
      %v2618 = vpop.f32.mrb[0].mxu0
      %v2619 = vadd.f32 %v2327, %v2618
      %v2620 = vpop.f32.mrb[0].mxu0
      %2621 = vmatprep.mubr.bf16.mxu0 0
      %2622 = vmatmul.mubr.bf16.gmra.mrb[0].mxu0 %v2489
      %v2623 = vpop.f32.mrb[0].mxu0
      %v2624 = vadd.f32 %v2332, %v2623
      %v2625 = vpop.f32.mrb[0].mxu0
      %v2626 = vpop.f32.mrb[0].mxu0
      %v2627 = vadd.f32 %v2335, %v2626
      %v2628 = vpop.f32.mrb[0].mxu0
      %2629 = vmatprep.mubr.bf16.mxu0 0
      %2630 = vmatmul.mubr.bf16.gmra.mrb[0].mxu0 %v2492
      %v2631 = vpop.f32.mrb[0].mxu0
      %v2632 = vadd.f32 %v2340, %v2631
      %v2633 = vpop.f32.mrb[0].mxu0
      %v2634 = vpop.f32.mrb[0].mxu0
      %v2635 = vadd.f32 %v2343, %v2634
      %v2636 = vpop.f32.mrb[0].mxu0
      %2637 = vmatprep.mubr.bf16.mxu0 0
      %2638 = vmatmul.mubr.bf16.gmra.mrb[0].mxu0 %v2495
      %v2639 = vpop.f32.mrb[0].mxu0
      %v2640 = vadd.f32 %v2348, %v2639
      %v2641 = vpop.f32.mrb[0].mxu0
      %v2642 = vpop.f32.mrb[0].mxu0
      %v2643 = vadd.f32 %v2351, %v2642
      %v2644 = vpop.f32.mrb[0].mxu0
      %2645 = vmatprep.mubr.bf16.mxu0 0
      %2646 = vmatmul.mubr.bf16.gmra.mrb[0].mxu0 %v2498
      %v2647 = vpop.f32.mrb[0].mxu0
      %v2648 = vadd.f32 %v2356, %v2647
      %v2649 = vpop.f32.mrb[0].mxu0
      %v2650 = vpop.f32.mrb[0].mxu0
      %v2651 = vadd.f32 %v2359, %v2650
      %v2652 = vpop.f32.mrb[0].mxu0
      %2653 = vmatprep.mubr.bf16.mxu0 0
      %2654 = vmatmul.mubr.bf16.gmra.mrb[0].mxu0 %v2501
      %v2655 = vpop.f32.mrb[0].mxu0
      %v2656 = vadd.f32 %v2364, %v2655
      %v2657 = vpop.f32.mrb[0].mxu0
      %v2658 = vpop.f32.mrb[0].mxu0
      %v2659 = vadd.f32 %v2367, %v2658
      %v2660 = vpop.f32.mrb[0].mxu0
      %2661 = vmatprep.mubr.bf16.mxu0 0
      %2662 = vmatmul.mubr.bf16.gmra.mrb[0].mxu0 %v2504
      %v2663 = vpop.f32.mrb[0].mxu0
      %v2664 = vadd.f32 %v2372, %v2663
      %v2665 = vpop.f32.mrb[0].mxu0
      %v2666 = vpop.f32.mrb[0].mxu0
      %v2667 = vadd.f32 %v2375, %v2666
      %v2668 = vpop.f32.mrb[0].mxu0
      %2669 = vdwg.mxu0
      %v2670 = vld [vmem:[#allocation2] sm:$0xe]
      %v2671 = vld [vmem:[#allocation2 + $0xc] sm:$0xe]
      %v2672 = vld [vmem:[#allocation2 + $0x18] sm:$0xe]
      %v2673 = vld [vmem:[#allocation2 + $0x24] sm:$0xe]
      %v2674 = vld [vmem:[#allocation2 + $0x30] sm:$0xe]
      %v2675 = vld [vmem:[#allocation2 + $0x3c] sm:$0xe]
      %v2676 = vld [vmem:[#allocation2 + $0x48] sm:$0xe]
      %v2677 = vld [vmem:[#allocation2 + $0x54] sm:$0xe]
      %v2678 = vld [vmem:[#allocation2 + $0x60] sm:$0xe]
      %v2679 = vld [vmem:[#allocation2 + $0x6c] sm:$0xe]
      %v2680 = vld [vmem:[#allocation2 + $0x78] sm:$0xe]
      %v2681 = vld [vmem:[#allocation2 + $0x84] sm:$0xe]
      %v2682 = vld [vmem:[#allocation2 + $0x90] sm:$0xe]
      %v2683 = vld [vmem:[#allocation2 + $0x9c] sm:$0xe]
      %v2684 = vld [vmem:[#allocation2 + $0xa8] sm:$0xe]
      %v2685 = vld [vmem:[#allocation2 + $0xb4] sm:$0xe]
      %vm2718 = vcmask 1042432
      %vm2719 = vcmask 1046532
      %vm2720 = vmor %vm2718, %vm2719
      %v2721 = vrot.slane %v2670, 5
      %v2722 = vrot.slane %v2721, 4
      %v2723 = vrot.slane %v1679, 5
      %v2724 = vsel %vm2720, %v2722, %v2723
      %v2725 = vrot.slane %v2723, 4
      %v2726 = vrot.slane %v1711, 5
      %v2727 = vsel %vm2720, %v2725, %v2726
      %v2728 = vrot.slane %v2671, 5
      %v2729 = vrot.slane %v2728, 4
      %v2730 = vrot.slane %v1681, 5
      %v2731 = vsel %vm2720, %v2729, %v2730
      %v2732 = vrot.slane %v2730, 4
      %v2733 = vrot.slane %v1712, 5
      %v2734 = vsel %vm2720, %v2732, %v2733
      %v2735 = vrot.slane %v2672, 5
      %v2736 = vrot.slane %v2735, 4
      %v2737 = vrot.slane %v1683, 5
      %v2738 = vsel %vm2720, %v2736, %v2737
      %v2739 = vrot.slane %v2737, 4
      %v2740 = vrot.slane %v1713, 5
      %v2741 = vsel %vm2720, %v2739, %v2740
      %v2742 = vrot.slane %v2673, 5
      %v2743 = vrot.slane %v2742, 4
      %v2744 = vrot.slane %v1685, 5
      %v2745 = vsel %vm2720, %v2743, %v2744
      %v2746 = vrot.slane %v2744, 4
      %v2747 = vrot.slane %v1714, 5
      %v2748 = vsel %vm2720, %v2746, %v2747
      %v2749 = vrot.slane %v2674, 5
      %v2750 = vrot.slane %v2749, 4
      %v2751 = vrot.slane %v1687, 5
      %v2752 = vsel %vm2720, %v2750, %v2751
      %v2753 = vrot.slane %v2751, 4
      %v2754 = vrot.slane %v1715, 5
      %v2755 = vsel %vm2720, %v2753, %v2754
      %v2756 = vrot.slane %v2675, 5
      %v2757 = vrot.slane %v2756, 4
      %v2758 = vrot.slane %v1689, 5
      %v2759 = vsel %vm2720, %v2757, %v2758
      %v2760 = vrot.slane %v2758, 4
      %v2761 = vrot.slane %v1716, 5
      %v2762 = vsel %vm2720, %v2760, %v2761
      %v2763 = vrot.slane %v2676, 5
      %v2764 = vrot.slane %v2763, 4
      %v2765 = vrot.slane %v1691, 5
      %v2766 = vsel %vm2720, %v2764, %v2765
      %v2767 = vrot.slane %v2765, 4
      %v2768 = vrot.slane %v1717, 5
      %v2769 = vsel %vm2720, %v2767, %v2768
      %v2770 = vrot.slane %v2677, 5
      %v2771 = vrot.slane %v2770, 4
      %v2772 = vrot.slane %v1693, 5
      %v2773 = vsel %vm2720, %v2771, %v2772
      %v2774 = vrot.slane %v2772, 4
      %v2775 = vrot.slane %v1718, 5
      %v2776 = vsel %vm2720, %v2774, %v2775
      %v2777 = vrot.slane %v2678, 5
      %v2778 = vrot.slane %v2777, 4
      %v2779 = vrot.slane %v1695, 5
      %v2780 = vsel %vm2720, %v2778, %v2779
      %v2781 = vrot.slane %v2779, 4
      %v2782 = vrot.slane %v1719, 5
      %v2783 = vsel %vm2720, %v2781, %v2782
      %v2784 = vrot.slane %v2679, 5
      %v2785 = vrot.slane %v2784, 4
      %v2786 = vrot.slane %v1697, 5
      %v2787 = vsel %vm2720, %v2785, %v2786
      %v2788 = vrot.slane %v2786, 4
      %v2789 = vrot.slane %v1720, 5
      %v2790 = vsel %vm2720, %v2788, %v2789
      %v2791 = vrot.slane %v2680, 5
      %v2792 = vrot.slane %v2791, 4
      %v2793 = vrot.slane %v1699, 5
      %v2794 = vsel %vm2720, %v2792, %v2793
      %v2795 = vrot.slane %v2793, 4
      %v2796 = vrot.slane %v1721, 5
      %v2797 = vsel %vm2720, %v2795, %v2796
      %v2798 = vrot.slane %v2681, 5
      %v2799 = vrot.slane %v2798, 4
      %v2800 = vrot.slane %v1701, 5
      %v2801 = vsel %vm2720, %v2799, %v2800
      %v2802 = vrot.slane %v2800, 4
      %v2803 = vrot.slane %v1722, 5
      %v2804 = vsel %vm2720, %v2802, %v2803
      %v2805 = vrot.slane %v2682, 5
      %v2806 = vrot.slane %v2805, 4
      %v2807 = vrot.slane %v1703, 5
      %v2808 = vsel %vm2720, %v2806, %v2807
      %v2809 = vrot.slane %v2807, 4
      %v2810 = vrot.slane %v1723, 5
      %v2811 = vsel %vm2720, %v2809, %v2810
      %v2812 = vrot.slane %v2683, 5
      %v2813 = vrot.slane %v2812, 4
      %v2814 = vrot.slane %v1705, 5
      %v2815 = vsel %vm2720, %v2813, %v2814
      %v2816 = vrot.slane %v2814, 4
      %v2817 = vrot.slane %v1724, 5
      %v2818 = vsel %vm2720, %v2816, %v2817
      %v2819 = vrot.slane %v2684, 5
      %v2820 = vrot.slane %v2819, 4
      %v2821 = vrot.slane %v1707, 5
      %v2822 = vsel %vm2720, %v2820, %v2821
      %v2823 = vrot.slane %v2821, 4
      %v2824 = vrot.slane %v1725, 5
      %v2825 = vsel %vm2720, %v2823, %v2824
      %v2826 = vrot.slane %v2685, 5
      %v2827 = vrot.slane %v2826, 4
      %v2828 = vrot.slane %v1709, 5
      %v2829 = vsel %vm2720, %v2827, %v2828
      %v2830 = vrot.slane %v2828, 4
      %v2831 = vrot.slane %v1726, 5
      %v2832 = vsel %vm2720, %v2830, %v2831
      %s2833 = scalar_lea.vmem %s5, 8
      %v2834 = vld [vmem:[%s2833] sm:$0xf]
      %v2835 = vunpack.c.l.b16 %v2724
      %v2836 = vunpack.c.l.b16 %v2727
      %v2837 = vunpack.c.l.b16 %v2731
      %v2838 = vunpack.c.l.b16 %v2734
      %v2839 = vunpack.c.l.b16 %v2738
      %v2840 = vunpack.c.l.b16 %v2741
      %v2841 = vunpack.c.l.b16 %v2745
      %v2842 = vunpack.c.l.b16 %v2748
      %v2843 = vunpack.c.l.b16 %v2752
      %v2844 = vunpack.c.l.b16 %v2755
      %v2845 = vunpack.c.l.b16 %v2759
      %v2846 = vunpack.c.l.b16 %v2762
      %v2847 = vunpack.c.l.b16 %v2766
      %v2848 = vunpack.c.l.b16 %v2769
      %v2849 = vunpack.c.l.b16 %v2773
      %v2850 = vunpack.c.l.b16 %v2776
      %v2851 = vunpack.c.l.b16 %v2780
      %v2852 = vunpack.c.l.b16 %v2783
      %v2853 = vunpack.c.l.b16 %v2787
      %v2854 = vunpack.c.l.b16 %v2790
      %v2855 = vunpack.c.l.b16 %v2794
      %v2856 = vunpack.c.l.b16 %v2797
      %v2857 = vunpack.c.l.b16 %v2801
      %v2858 = vunpack.c.l.b16 %v2804
      %v2859 = vunpack.c.l.b16 %v2808
      %v2860 = vunpack.c.l.b16 %v2811
      %v2861 = vunpack.c.l.b16 %v2815
      %v2862 = vunpack.c.l.b16 %v2818
      %v2863 = vunpack.c.l.b16 %v2822
      %v2864 = vunpack.c.l.b16 %v2825
      %v2865 = vunpack.c.l.b16 %v2829
      %v2866 = vunpack.c.l.b16 %v2832
      %v2867 = vpack.c.b16 %v2836, %v2835
      %v2868 = vpack.c.b16 %v2838, %v2837
      %v2869 = vpack.c.b16 %v2840, %v2839
      %v2870 = vpack.c.b16 %v2842, %v2841
      %v2871 = vpack.c.b16 %v2844, %v2843
      %v2872 = vpack.c.b16 %v2846, %v2845
      %v2873 = vpack.c.b16 %v2848, %v2847
      %v2874 = vpack.c.b16 %v2850, %v2849
      %v2875 = vpack.c.b16 %v2852, %v2851
      %v2876 = vpack.c.b16 %v2854, %v2853
      %v2877 = vpack.c.b16 %v2856, %v2855
      %v2878 = vpack.c.b16 %v2858, %v2857
      %v2879 = vpack.c.b16 %v2860, %v2859
      %v2880 = vpack.c.b16 %v2862, %v2861
      %v2881 = vpack.c.b16 %v2864, %v2863
      %v2882 = vpack.c.b16 %v2866, %v2865
      %v2884 = vsel %vm2164, %v2867, 0
      %v2887 = vsel %vm2164, %v2868, 0
      %v2890 = vsel %vm2164, %v2869, 0
      %v2893 = vsel %vm2164, %v2870, 0
      %v2896 = vsel %vm2164, %v2871, 0
      %v2899 = vsel %vm2164, %v2872, 0
      %v2902 = vsel %vm2164, %v2873, 0
      %v2905 = vsel %vm2164, %v2874, 0
      %v2908 = vsel %vm2164, %v2875, 0
      %v2911 = vsel %vm2164, %v2876, 0
      %v2914 = vsel %vm2164, %v2877, 0
      %v2917 = vsel %vm2164, %v2878, 0
      %v2920 = vsel %vm2164, %v2879, 0
      %v2923 = vsel %vm2164, %v2880, 0
      %v2926 = vsel %vm2164, %v2881, 0
      %v2929 = vsel %vm2164, %v2882, 0
      %v2932 = vsel %vm2213, %v2834, 0
      %2934 = vmatprep.subr.bf16.mxu0 0
      %2935 = vmatpush1.bf16.msra.mxu0 %v2932
      %2936 = vmatprep.subr.bf16.mxu0 0
      %2937 = vmatpush1.bf16.msra.mxu0 0
      %2938 = vmatprep.subr.bf16.mxu0 0
      %2939 = vmatpush1.bf16.msra.mxu0 0
      %2940 = vmatprep.subr.bf16.mxu0 0
      %2941 = vmatpush1.bf16.msra.mxu0 0
      %2942 = vmatprep.subr.bf16.mxu0 0
      %2943 = vmatpush1.bf16.msra.mxu0 0
      %2944 = vmatprep.subr.bf16.mxu0 0
      %2945 = vmatpush1.bf16.msra.mxu0 0
      %2946 = vmatprep.subr.bf16.mxu0 0
      %2947 = vmatpush1.bf16.msra.mxu0 0
      %2948 = vmatprep.subr.bf16.mxu0 0
      %2949 = vmatpush1.bf16.msra.mxu0 0
      %2950 = vmatprep.subr.bf16.mxu0 0
      %2951 = vmatpush1.bf16.msra.mxu0 0
      %2952 = vmatprep.subr.bf16.mxu0 0
      %2953 = vmatpush1.bf16.msra.mxu0 0
      %2954 = vmatprep.subr.bf16.mxu0 0
      %2955 = vmatpush1.bf16.msra.mxu0 0
      %2956 = vmatprep.subr.bf16.mxu0 0
      %2957 = vmatpush1.bf16.msra.mxu0 0
      %2958 = vmatprep.subr.bf16.mxu0 0
      %2959 = vmatpush1.bf16.msra.mxu0 0
      %2960 = vmatprep.subr.bf16.mxu0 0
      %2961 = vmatpush1.bf16.msra.mxu0 0
      %2962 = vmatprep.subr.bf16.mxu0 0
      %2963 = vmatpush1.bf16.msra.mxu0 0
      %2964 = vmatprep.subr.bf16.mxu0 0
      %2965 = vmatpush1.bf16.msra.mxu0 0
      %2966 = vmatprep.mubr.bf16.mxu0 0
      %2967 = vmatmul.mubr.bf16.gmra.mrb[0].mxu0 %v2884
      %v2968 = vpop.f32.mrb[0].mxu0
      %v2969 = vadd.f32 0.0, %v2968
      %v2970 = vpop.f32.mrb[0].mxu0
      %v2971 = vpop.f32.mrb[0].mxu0
      %v2972 = vadd.f32 0.0, %v2971
      %v2973 = vpop.f32.mrb[0].mxu0
      %2974 = vmatprep.mubr.bf16.mxu0 0
      %2975 = vmatmul.mubr.bf16.gmra.mrb[0].mxu0 %v2887
      %v2976 = vpop.f32.mrb[0].mxu0
      %v2977 = vadd.f32 0.0, %v2976
      %v2978 = vpop.f32.mrb[0].mxu0
      %v2979 = vpop.f32.mrb[0].mxu0
      %v2980 = vadd.f32 0.0, %v2979
      %v2981 = vpop.f32.mrb[0].mxu0
      %2982 = vmatprep.mubr.bf16.mxu0 0
      %2983 = vmatmul.mubr.bf16.gmra.mrb[0].mxu0 %v2890
      %v2984 = vpop.f32.mrb[0].mxu0
      %v2985 = vadd.f32 0.0, %v2984
      %v2986 = vpop.f32.mrb[0].mxu0
      %v2987 = vpop.f32.mrb[0].mxu0
      %v2988 = vadd.f32 0.0, %v2987
      %v2989 = vpop.f32.mrb[0].mxu0
      %2990 = vmatprep.mubr.bf16.mxu0 0
      %2991 = vmatmul.mubr.bf16.gmra.mrb[0].mxu0 %v2893
      %v2992 = vpop.f32.mrb[0].mxu0
      %v2993 = vadd.f32 0.0, %v2992
      %v2994 = vpop.f32.mrb[0].mxu0
      %v2995 = vpop.f32.mrb[0].mxu0
      %v2996 = vadd.f32 0.0, %v2995
      %v2997 = vpop.f32.mrb[0].mxu0
      %2998 = vmatprep.mubr.bf16.mxu0 0
      %2999 = vmatmul.mubr.bf16.gmra.mrb[0].mxu0 %v2896
      %v3000 = vpop.f32.mrb[0].mxu0
      %v3001 = vadd.f32 0.0, %v3000
      %v3002 = vpop.f32.mrb[0].mxu0
      %v3003 = vpop.f32.mrb[0].mxu0
      %v3004 = vadd.f32 0.0, %v3003
      %v3005 = vpop.f32.mrb[0].mxu0
      %3006 = vmatprep.mubr.bf16.mxu0 0
      %3007 = vmatmul.mubr.bf16.gmra.mrb[0].mxu0 %v2899
      %v3008 = vpop.f32.mrb[0].mxu0
      %v3009 = vadd.f32 0.0, %v3008
      %v3010 = vpop.f32.mrb[0].mxu0
      %v3011 = vpop.f32.mrb[0].mxu0
      %v3012 = vadd.f32 0.0, %v3011
      %v3013 = vpop.f32.mrb[0].mxu0
      %3014 = vmatprep.mubr.bf16.mxu0 0
      %3015 = vmatmul.mubr.bf16.gmra.mrb[0].mxu0 %v2902
      %v3016 = vpop.f32.mrb[0].mxu0
      %v3017 = vadd.f32 0.0, %v3016
      %v3018 = vpop.f32.mrb[0].mxu0
      %v3019 = vpop.f32.mrb[0].mxu0
      %v3020 = vadd.f32 0.0, %v3019
      %v3021 = vpop.f32.mrb[0].mxu0
      %3022 = vmatprep.mubr.bf16.mxu0 0
      %3023 = vmatmul.mubr.bf16.gmra.mrb[0].mxu0 %v2905
      %v3024 = vpop.f32.mrb[0].mxu0
      %v3025 = vadd.f32 0.0, %v3024
      %v3026 = vpop.f32.mrb[0].mxu0
      %v3027 = vpop.f32.mrb[0].mxu0
      %v3028 = vadd.f32 0.0, %v3027
      %v3029 = vpop.f32.mrb[0].mxu0
      %3030 = vmatprep.mubr.bf16.mxu0 0
      %3031 = vmatmul.mubr.bf16.gmra.mrb[0].mxu0 %v2908
      %v3032 = vpop.f32.mrb[0].mxu0
      %v3033 = vadd.f32 0.0, %v3032
      %v3034 = vpop.f32.mrb[0].mxu0
      %v3035 = vpop.f32.mrb[0].mxu0
      %v3036 = vadd.f32 0.0, %v3035
      %v3037 = vpop.f32.mrb[0].mxu0
      %3038 = vmatprep.mubr.bf16.mxu0 0
      %3039 = vmatmul.mubr.bf16.gmra.mrb[0].mxu0 %v2911
      %v3040 = vpop.f32.mrb[0].mxu0
      %v3041 = vadd.f32 0.0, %v3040
      %v3042 = vpop.f32.mrb[0].mxu0
      %v3043 = vpop.f32.mrb[0].mxu0
      %v3044 = vadd.f32 0.0, %v3043
      %v3045 = vpop.f32.mrb[0].mxu0
      %3046 = vmatprep.mubr.bf16.mxu0 0
      %3047 = vmatmul.mubr.bf16.gmra.mrb[0].mxu0 %v2914
      %v3048 = vpop.f32.mrb[0].mxu0
      %v3049 = vadd.f32 0.0, %v3048
      %v3050 = vpop.f32.mrb[0].mxu0
      %v3051 = vpop.f32.mrb[0].mxu0
      %v3052 = vadd.f32 0.0, %v3051
      %v3053 = vpop.f32.mrb[0].mxu0
      %3054 = vmatprep.mubr.bf16.mxu0 0
      %3055 = vmatmul.mubr.bf16.gmra.mrb[0].mxu0 %v2917
      %v3056 = vpop.f32.mrb[0].mxu0
      %v3057 = vadd.f32 0.0, %v3056
      %v3058 = vpop.f32.mrb[0].mxu0
      %v3059 = vpop.f32.mrb[0].mxu0
      %v3060 = vadd.f32 0.0, %v3059
      %v3061 = vpop.f32.mrb[0].mxu0
      %3062 = vmatprep.mubr.bf16.mxu0 0
      %3063 = vmatmul.mubr.bf16.gmra.mrb[0].mxu0 %v2920
      %v3064 = vpop.f32.mrb[0].mxu0
      %v3065 = vadd.f32 0.0, %v3064
      %v3066 = vpop.f32.mrb[0].mxu0
      %v3067 = vpop.f32.mrb[0].mxu0
      %v3068 = vadd.f32 0.0, %v3067
      %v3069 = vpop.f32.mrb[0].mxu0
      %3070 = vmatprep.mubr.bf16.mxu0 0
      %3071 = vmatmul.mubr.bf16.gmra.mrb[0].mxu0 %v2923
      %v3072 = vpop.f32.mrb[0].mxu0
      %v3073 = vadd.f32 0.0, %v3072
      %v3074 = vpop.f32.mrb[0].mxu0
      %v3075 = vpop.f32.mrb[0].mxu0
      %v3076 = vadd.f32 0.0, %v3075
      %v3077 = vpop.f32.mrb[0].mxu0
      %3078 = vmatprep.mubr.bf16.mxu0 0
      %3079 = vmatmul.mubr.bf16.gmra.mrb[0].mxu0 %v2926
      %v3080 = vpop.f32.mrb[0].mxu0
      %v3081 = vadd.f32 0.0, %v3080
      %v3082 = vpop.f32.mrb[0].mxu0
      %v3083 = vpop.f32.mrb[0].mxu0
      %v3084 = vadd.f32 0.0, %v3083
      %v3085 = vpop.f32.mrb[0].mxu0
      %3086 = vmatprep.mubr.bf16.mxu0 0
      %3087 = vmatmul.mubr.bf16.gmra.mrb[0].mxu0 %v2929
      %v3088 = vpop.f32.mrb[0].mxu0
      %v3089 = vadd.f32 0.0, %v3088
      %v3090 = vpop.f32.mrb[0].mxu0
      %v3091 = vpop.f32.mrb[0].mxu0
      %v3092 = vadd.f32 0.0, %v3091
      %v3093 = vpop.f32.mrb[0].mxu0
      %3094 = vdwg.mxu0
      %v3095 = vadd.f32 %v2544, %v2969
      %v3096 = vadd.f32 %v2547, %v2972
      %v3097 = vadd.f32 %v2552, %v2977
      %v3098 = vadd.f32 %v2555, %v2980
      %v3099 = vadd.f32 %v2560, %v2985
      %v3100 = vadd.f32 %v2563, %v2988
      %v3101 = vadd.f32 %v2568, %v2993
      %v3102 = vadd.f32 %v2571, %v2996
      %v3103 = vadd.f32 %v2576, %v3001
      %v3104 = vadd.f32 %v2579, %v3004
      %v3105 = vadd.f32 %v2584, %v3009
      %v3106 = vadd.f32 %v2587, %v3012
      %v3107 = vadd.f32 %v2592, %v3017
      %v3108 = vadd.f32 %v2595, %v3020
      %v3109 = vadd.f32 %v2600, %v3025
      %v3110 = vadd.f32 %v2603, %v3028
      %v3111 = vadd.f32 %v2608, %v3033
      %v3112 = vadd.f32 %v2611, %v3036
      %v3113 = vadd.f32 %v2616, %v3041
      %v3114 = vadd.f32 %v2619, %v3044
      %v3115 = vadd.f32 %v2624, %v3049
      %v3116 = vadd.f32 %v2627, %v3052
      %v3117 = vadd.f32 %v2632, %v3057
      %v3118 = vadd.f32 %v2635, %v3060
      %v3119 = vadd.f32 %v2640, %v3065
      %v3120 = vadd.f32 %v2643, %v3068
      %v3121 = vadd.f32 %v2648, %v3073
      %v3122 = vadd.f32 %v2651, %v3076
      %v3123 = vadd.f32 %v2656, %v3081
      %v3124 = vadd.f32 %v2659, %v3084
      %v3125 = vadd.f32 %v2664, %v3089
      %v3126 = vadd.f32 %v2667, %v3092
      %v3127 = vld [vmem:[%s1563] sm:$0xf]
      %v3128 = vld [vmem:[%s1563 + $0x4] sm:$0xf]
      %v3129 = vld [vmem:[%s1563 + $0xc] sm:$0xf]
      %v3130 = vld [vmem:[%s1563 + $0x10] sm:$0xf]
      %v3131 = vld [vmem:[%s1563 + $0x18] sm:$0xf]
      %v3132 = vld [vmem:[%s1563 + $0x1c] sm:$0xf]
      %v3133 = vld [vmem:[%s1563 + $0x24] sm:$0xf]
      %v3134 = vld [vmem:[%s1563 + $0x28] sm:$0xf]
      %v3135 = vld [vmem:[%s1563 + $0x30] sm:$0xf]
      %v3136 = vld [vmem:[%s1563 + $0x34] sm:$0xf]
      %v3137 = vld [vmem:[%s1563 + $0x3c] sm:$0xf]
      %v3138 = vld [vmem:[%s1563 + $0x40] sm:$0xf]
      %v3139 = vld [vmem:[%s1563 + $0x48] sm:$0xf]
      %v3140 = vld [vmem:[%s1563 + $0x4c] sm:$0xf]
      %v3141 = vld [vmem:[%s1563 + $0x54] sm:$0xf]
      %v3142 = vld [vmem:[%s1563 + $0x58] sm:$0xf]
      %v3143 = vld [vmem:[%s1563 + $0x60] sm:$0xf]
      %v3144 = vld [vmem:[%s1563 + $0x64] sm:$0xf]
      %v3145 = vld [vmem:[%s1563 + $0x6c] sm:$0xf]
      %v3146 = vld [vmem:[%s1563 + $0x70] sm:$0xf]
      %v3147 = vld [vmem:[%s1563 + $0x78] sm:$0xf]
      %v3148 = vld [vmem:[%s1563 + $0x7c] sm:$0xf]
      %v3149 = vld [vmem:[%s1563 + $0x84] sm:$0xf]
      %v3150 = vld [vmem:[%s1563 + $0x88] sm:$0xf]
      %v3151 = vld [vmem:[%s1563 + $0x90] sm:$0xf]
      %v3152 = vld [vmem:[%s1563 + $0x94] sm:$0xf]
      %v3153 = vld [vmem:[%s1563 + $0x9c] sm:$0xf]
      %v3154 = vld [vmem:[%s1563 + $0xa0] sm:$0xf]
      %v3155 = vld [vmem:[%s1563 + $0xa8] sm:$0xf]
      %v3156 = vld [vmem:[%s1563 + $0xac] sm:$0xf]
      %v3157 = vld [vmem:[%s1563 + $0xb4] sm:$0xf]
      %v3158 = vld [vmem:[%s1563 + $0xb8] sm:$0xf]
      %s3159 = scalar_lea.vmem %s5, 12
      %v3160 = vld [vmem:[%s3159] sm:$0xf]
      %v3193 = vunpack.c.l.b16 %v3127
      %v3194 = vunpack.c.l.b16 %v3128
      %v3195 = vunpack.c.l.b16 %v3129
      %v3196 = vunpack.c.l.b16 %v3130
      %v3197 = vunpack.c.l.b16 %v3131
      %v3198 = vunpack.c.l.b16 %v3132
      %v3199 = vunpack.c.l.b16 %v3133
      %v3200 = vunpack.c.l.b16 %v3134
      %v3201 = vunpack.c.l.b16 %v3135
      %v3202 = vunpack.c.l.b16 %v3136
      %v3203 = vunpack.c.l.b16 %v3137
      %v3204 = vunpack.c.l.b16 %v3138
      %v3205 = vunpack.c.l.b16 %v3139
      %v3206 = vunpack.c.l.b16 %v3140
      %v3207 = vunpack.c.l.b16 %v3141
      %v3208 = vunpack.c.l.b16 %v3142
      %v3209 = vunpack.c.l.b16 %v3143
      %v3210 = vunpack.c.l.b16 %v3144
      %v3211 = vunpack.c.l.b16 %v3145
      %v3212 = vunpack.c.l.b16 %v3146
      %v3213 = vunpack.c.l.b16 %v3147
      %v3214 = vunpack.c.l.b16 %v3148
      %v3215 = vunpack.c.l.b16 %v3149
      %v3216 = vunpack.c.l.b16 %v3150
      %v3217 = vunpack.c.l.b16 %v3151
      %v3218 = vunpack.c.l.b16 %v3152
      %v3219 = vunpack.c.l.b16 %v3153
      %v3220 = vunpack.c.l.b16 %v3154
      %v3221 = vunpack.c.l.b16 %v3155
      %v3222 = vunpack.c.l.b16 %v3156
      %v3223 = vunpack.c.l.b16 %v3157
      %v3224 = vunpack.c.l.b16 %v3158
      %v3225 = vpack.c.b16 %v3194, %v3193
      %v3226 = vpack.c.b16 %v3196, %v3195
      %v3227 = vpack.c.b16 %v3198, %v3197
      %v3228 = vpack.c.b16 %v3200, %v3199
      %v3229 = vpack.c.b16 %v3202, %v3201
      %v3230 = vpack.c.b16 %v3204, %v3203
      %v3231 = vpack.c.b16 %v3206, %v3205
      %v3232 = vpack.c.b16 %v3208, %v3207
      %v3233 = vpack.c.b16 %v3210, %v3209
      %v3234 = vpack.c.b16 %v3212, %v3211
      %v3235 = vpack.c.b16 %v3214, %v3213
      %v3236 = vpack.c.b16 %v3216, %v3215
      %v3237 = vpack.c.b16 %v3218, %v3217
      %v3238 = vpack.c.b16 %v3220, %v3219
      %v3239 = vpack.c.b16 %v3222, %v3221
      %v3240 = vpack.c.b16 %v3224, %v3223
      %v3242 = vsel %vm2164, %v3225, 0
      %v3245 = vsel %vm2164, %v3226, 0
      %v3248 = vsel %vm2164, %v3227, 0
      %v3251 = vsel %vm2164, %v3228, 0
      %v3254 = vsel %vm2164, %v3229, 0
      %v3257 = vsel %vm2164, %v3230, 0
      %v3260 = vsel %vm2164, %v3231, 0
      %v3263 = vsel %vm2164, %v3232, 0
      %v3266 = vsel %vm2164, %v3233, 0
      %v3269 = vsel %vm2164, %v3234, 0
      %v3272 = vsel %vm2164, %v3235, 0
      %v3275 = vsel %vm2164, %v3236, 0
      %v3278 = vsel %vm2164, %v3237, 0
      %v3281 = vsel %vm2164, %v3238, 0
      %v3284 = vsel %vm2164, %v3239, 0
      %v3287 = vsel %vm2164, %v3240, 0
      %v3290 = vsel %vm2213, %v3160, 0
      %3292 = vmatprep.subr.bf16.mxu0 0
      %3293 = vmatpush1.bf16.msra.mxu0 %v3290
      %3294 = vmatprep.subr.bf16.mxu0 0
      %3295 = vmatpush1.bf16.msra.mxu0 0
      %3296 = vmatprep.subr.bf16.mxu0 0
      %3297 = vmatpush1.bf16.msra.mxu0 0
      %3298 = vmatprep.subr.bf16.mxu0 0
      %3299 = vmatpush1.bf16.msra.mxu0 0
      %3300 = vmatprep.subr.bf16.mxu0 0
      %3301 = vmatpush1.bf16.msra.mxu0 0
      %3302 = vmatprep.subr.bf16.mxu0 0
      %3303 = vmatpush1.bf16.msra.mxu0 0
      %3304 = vmatprep.subr.bf16.mxu0 0
      %3305 = vmatpush1.bf16.msra.mxu0 0
      %3306 = vmatprep.subr.bf16.mxu0 0
      %3307 = vmatpush1.bf16.msra.mxu0 0
      %3308 = vmatprep.subr.bf16.mxu0 0
      %3309 = vmatpush1.bf16.msra.mxu0 0
      %3310 = vmatprep.subr.bf16.mxu0 0
      %3311 = vmatpush1.bf16.msra.mxu0 0
      %3312 = vmatprep.subr.bf16.mxu0 0
      %3313 = vmatpush1.bf16.msra.mxu0 0
      %3314 = vmatprep.subr.bf16.mxu0 0
      %3315 = vmatpush1.bf16.msra.mxu0 0
      %3316 = vmatprep.subr.bf16.mxu0 0
      %3317 = vmatpush1.bf16.msra.mxu0 0
      %3318 = vmatprep.subr.bf16.mxu0 0
      %3319 = vmatpush1.bf16.msra.mxu0 0
      %3320 = vmatprep.subr.bf16.mxu0 0
      %3321 = vmatpush1.bf16.msra.mxu0 0
      %3322 = vmatprep.subr.bf16.mxu0 0
      %3323 = vmatpush1.bf16.msra.mxu0 0
      %3324 = vmatprep.mubr.bf16.mxu0 0
      %3325 = vmatmul.mubr.bf16.gmra.mrb[0].mxu0 %v3242
      %v3326 = vpop.f32.mrb[0].mxu0
      %v3327 = vadd.f32 0.0, %v3326
      %v3328 = vpop.f32.mrb[0].mxu0
      %v3329 = vpop.f32.mrb[0].mxu0
      %v3330 = vadd.f32 0.0, %v3329
      %v3331 = vpop.f32.mrb[0].mxu0
      %3332 = vmatprep.mubr.bf16.mxu0 0
      %3333 = vmatmul.mubr.bf16.gmra.mrb[0].mxu0 %v3245
      %v3334 = vpop.f32.mrb[0].mxu0
      %v3335 = vadd.f32 0.0, %v3334
      %v3336 = vpop.f32.mrb[0].mxu0
      %v3337 = vpop.f32.mrb[0].mxu0
      %v3338 = vadd.f32 0.0, %v3337
      %v3339 = vpop.f32.mrb[0].mxu0
      %3340 = vmatprep.mubr.bf16.mxu0 0
      %3341 = vmatmul.mubr.bf16.gmra.mrb[0].mxu0 %v3248
      %v3342 = vpop.f32.mrb[0].mxu0
      %v3343 = vadd.f32 0.0, %v3342
      %v3344 = vpop.f32.mrb[0].mxu0
      %v3345 = vpop.f32.mrb[0].mxu0
      %v3346 = vadd.f32 0.0, %v3345
      %v3347 = vpop.f32.mrb[0].mxu0
      %3348 = vmatprep.mubr.bf16.mxu0 0
      %3349 = vmatmul.mubr.bf16.gmra.mrb[0].mxu0 %v3251
      %v3350 = vpop.f32.mrb[0].mxu0
      %v3351 = vadd.f32 0.0, %v3350
      %v3352 = vpop.f32.mrb[0].mxu0
      %v3353 = vpop.f32.mrb[0].mxu0
      %v3354 = vadd.f32 0.0, %v3353
      %v3355 = vpop.f32.mrb[0].mxu0
      %3356 = vmatprep.mubr.bf16.mxu0 0
      %3357 = vmatmul.mubr.bf16.gmra.mrb[0].mxu0 %v3254
      %v3358 = vpop.f32.mrb[0].mxu0
      %v3359 = vadd.f32 0.0, %v3358
      %v3360 = vpop.f32.mrb[0].mxu0
      %v3361 = vpop.f32.mrb[0].mxu0
      %v3362 = vadd.f32 0.0, %v3361
      %v3363 = vpop.f32.mrb[0].mxu0
      %3364 = vmatprep.mubr.bf16.mxu0 0
      %3365 = vmatmul.mubr.bf16.gmra.mrb[0].mxu0 %v3257
      %v3366 = vpop.f32.mrb[0].mxu0
      %v3367 = vadd.f32 0.0, %v3366
      %v3368 = vpop.f32.mrb[0].mxu0
      %v3369 = vpop.f32.mrb[0].mxu0
      %v3370 = vadd.f32 0.0, %v3369
      %v3371 = vpop.f32.mrb[0].mxu0
      %3372 = vmatprep.mubr.bf16.mxu0 0
      %3373 = vmatmul.mubr.bf16.gmra.mrb[0].mxu0 %v3260
      %v3374 = vpop.f32.mrb[0].mxu0
      %v3375 = vadd.f32 0.0, %v3374
      %v3376 = vpop.f32.mrb[0].mxu0
      %v3377 = vpop.f32.mrb[0].mxu0
      %v3378 = vadd.f32 0.0, %v3377
      %v3379 = vpop.f32.mrb[0].mxu0
      %3380 = vmatprep.mubr.bf16.mxu0 0
      %3381 = vmatmul.mubr.bf16.gmra.mrb[0].mxu0 %v3263
      %v3382 = vpop.f32.mrb[0].mxu0
      %v3383 = vadd.f32 0.0, %v3382
      %v3384 = vpop.f32.mrb[0].mxu0
      %v3385 = vpop.f32.mrb[0].mxu0
      %v3386 = vadd.f32 0.0, %v3385
      %v3387 = vpop.f32.mrb[0].mxu0
      %3388 = vmatprep.mubr.bf16.mxu0 0
      %3389 = vmatmul.mubr.bf16.gmra.mrb[0].mxu0 %v3266
      %v3390 = vpop.f32.mrb[0].mxu0
      %v3391 = vadd.f32 0.0, %v3390
      %v3392 = vpop.f32.mrb[0].mxu0
      %v3393 = vpop.f32.mrb[0].mxu0
      %v3394 = vadd.f32 0.0, %v3393
      %v3395 = vpop.f32.mrb[0].mxu0
      %3396 = vmatprep.mubr.bf16.mxu0 0
      %3397 = vmatmul.mubr.bf16.gmra.mrb[0].mxu0 %v3269
      %v3398 = vpop.f32.mrb[0].mxu0
      %v3399 = vadd.f32 0.0, %v3398
      %v3400 = vpop.f32.mrb[0].mxu0
      %v3401 = vpop.f32.mrb[0].mxu0
      %v3402 = vadd.f32 0.0, %v3401
      %v3403 = vpop.f32.mrb[0].mxu0
      %3404 = vmatprep.mubr.bf16.mxu0 0
      %3405 = vmatmul.mubr.bf16.gmra.mrb[0].mxu0 %v3272
      %v3406 = vpop.f32.mrb[0].mxu0
      %v3407 = vadd.f32 0.0, %v3406
      %v3408 = vpop.f32.mrb[0].mxu0
      %v3409 = vpop.f32.mrb[0].mxu0
      %v3410 = vadd.f32 0.0, %v3409
      %v3411 = vpop.f32.mrb[0].mxu0
      %3412 = vmatprep.mubr.bf16.mxu0 0
      %3413 = vmatmul.mubr.bf16.gmra.mrb[0].mxu0 %v3275
      %v3414 = vpop.f32.mrb[0].mxu0
      %v3415 = vadd.f32 0.0, %v3414
      %v3416 = vpop.f32.mrb[0].mxu0
      %v3417 = vpop.f32.mrb[0].mxu0
      %v3418 = vadd.f32 0.0, %v3417
      %v3419 = vpop.f32.mrb[0].mxu0
      %3420 = vmatprep.mubr.bf16.mxu0 0
      %3421 = vmatmul.mubr.bf16.gmra.mrb[0].mxu0 %v3278
      %v3422 = vpop.f32.mrb[0].mxu0
      %v3423 = vadd.f32 0.0, %v3422
      %v3424 = vpop.f32.mrb[0].mxu0
      %v3425 = vpop.f32.mrb[0].mxu0
      %v3426 = vadd.f32 0.0, %v3425
      %v3427 = vpop.f32.mrb[0].mxu0
      %3428 = vmatprep.mubr.bf16.mxu0 0
      %3429 = vmatmul.mubr.bf16.gmra.mrb[0].mxu0 %v3281
      %v3430 = vpop.f32.mrb[0].mxu0
      %v3431 = vadd.f32 0.0, %v3430
      %v3432 = vpop.f32.mrb[0].mxu0
      %v3433 = vpop.f32.mrb[0].mxu0
      %v3434 = vadd.f32 0.0, %v3433
      %v3435 = vpop.f32.mrb[0].mxu0
      %3436 = vmatprep.mubr.bf16.mxu0 0
      %3437 = vmatmul.mubr.bf16.gmra.mrb[0].mxu0 %v3284
      %v3438 = vpop.f32.mrb[0].mxu0
      %v3439 = vadd.f32 0.0, %v3438
      %v3440 = vpop.f32.mrb[0].mxu0
      %v3441 = vpop.f32.mrb[0].mxu0
      %v3442 = vadd.f32 0.0, %v3441
      %v3443 = vpop.f32.mrb[0].mxu0
      %3444 = vmatprep.mubr.bf16.mxu0 0
      %3445 = vmatmul.mubr.bf16.gmra.mrb[0].mxu0 %v3287
      %v3446 = vpop.f32.mrb[0].mxu0
      %v3447 = vadd.f32 0.0, %v3446
      %v3448 = vpop.f32.mrb[0].mxu0
      %v3449 = vpop.f32.mrb[0].mxu0
      %v3450 = vadd.f32 0.0, %v3449
      %v3451 = vpop.f32.mrb[0].mxu0
      %3452 = vdwg.mxu0
      %v3453 = vadd.f32 %v3095, %v3327
      %v3454 = vadd.f32 %v3096, %v3330
      %v3455 = vadd.f32 %v3097, %v3335
      %v3456 = vadd.f32 %v3098, %v3338
      %v3457 = vadd.f32 %v3099, %v3343
      %v3458 = vadd.f32 %v3100, %v3346
      %v3459 = vadd.f32 %v3101, %v3351
      %v3460 = vadd.f32 %v3102, %v3354
      %v3461 = vadd.f32 %v3103, %v3359
      %v3462 = vadd.f32 %v3104, %v3362
      %v3463 = vadd.f32 %v3105, %v3367
      %v3464 = vadd.f32 %v3106, %v3370
      %v3465 = vadd.f32 %v3107, %v3375
      %v3466 = vadd.f32 %v3108, %v3378
      %v3467 = vadd.f32 %v3109, %v3383
      %v3468 = vadd.f32 %v3110, %v3386
      %v3469 = vadd.f32 %v3111, %v3391
      %v3470 = vadd.f32 %v3112, %v3394
      %v3471 = vadd.f32 %v3113, %v3399
      %v3472 = vadd.f32 %v3114, %v3402
      %v3473 = vadd.f32 %v3115, %v3407
      %v3474 = vadd.f32 %v3116, %v3410
      %v3475 = vadd.f32 %v3117, %v3415
      %v3476 = vadd.f32 %v3118, %v3418
      %v3477 = vadd.f32 %v3119, %v3423
      %v3478 = vadd.f32 %v3120, %v3426
      %v3479 = vadd.f32 %v3121, %v3431
      %v3480 = vadd.f32 %v3122, %v3434
      %v3481 = vadd.f32 %v3123, %v3439
      %v3482 = vadd.f32 %v3124, %v3442
      %v3483 = vadd.f32 %v3125, %v3447
      %v3484 = vadd.f32 %v3126, %v3450
      %v3485 = vld [vmem:[%s1563] sm:$0xf]
      %v3486 = vld [vmem:[%s1563 + $0x4] sm:$0xf]
      %v3487 = vld [vmem:[%s1563 + $0x8] sm:$0x1]
      %v3488 = vld [vmem:[%s1563 + $0xc] sm:$0xf]
      %v3489 = vld [vmem:[%s1563 + $0x10] sm:$0xf]
      %v3490 = vld [vmem:[%s1563 + $0x14] sm:$0x1]
      %v3491 = vld [vmem:[%s1563 + $0x18] sm:$0xf]
      %v3492 = vld [vmem:[%s1563 + $0x1c] sm:$0xf]
      %v3493 = vld [vmem:[%s1563 + $0x20] sm:$0x1]
      %v3494 = vld [vmem:[%s1563 + $0x24] sm:$0xf]
      %v3495 = vld [vmem:[%s1563 + $0x28] sm:$0xf]
      %v3496 = vld [vmem:[%s1563 + $0x2c] sm:$0x1]
      %v3497 = vld [vmem:[%s1563 + $0x30] sm:$0xf]
      %v3498 = vld [vmem:[%s1563 + $0x34] sm:$0xf]
      %v3499 = vld [vmem:[%s1563 + $0x38] sm:$0x1]
      %v3500 = vld [vmem:[%s1563 + $0x3c] sm:$0xf]
      %v3501 = vld [vmem:[%s1563 + $0x40] sm:$0xf]
      %v3502 = vld [vmem:[%s1563 + $0x44] sm:$0x1]
      %v3503 = vld [vmem:[%s1563 + $0x48] sm:$0xf]
      %v3504 = vld [vmem:[%s1563 + $0x4c] sm:$0xf]
      %v3505 = vld [vmem:[%s1563 + $0x50] sm:$0x1]
      %v3506 = vld [vmem:[%s1563 + $0x54] sm:$0xf]
      %v3507 = vld [vmem:[%s1563 + $0x58] sm:$0xf]
      %v3508 = vld [vmem:[%s1563 + $0x5c] sm:$0x1]
      %v3509 = vld [vmem:[%s1563 + $0x60] sm:$0xf]
      %v3510 = vld [vmem:[%s1563 + $0x64] sm:$0xf]
      %v3511 = vld [vmem:[%s1563 + $0x68] sm:$0x1]
      %v3512 = vld [vmem:[%s1563 + $0x6c] sm:$0xf]
      %v3513 = vld [vmem:[%s1563 + $0x70] sm:$0xf]
      %v3514 = vld [vmem:[%s1563 + $0x74] sm:$0x1]
      %v3515 = vld [vmem:[%s1563 + $0x78] sm:$0xf]
      %v3516 = vld [vmem:[%s1563 + $0x7c] sm:$0xf]
      %v3517 = vld [vmem:[%s1563 + $0x80] sm:$0x1]
      %v3518 = vld [vmem:[%s1563 + $0x84] sm:$0xf]
      %v3519 = vld [vmem:[%s1563 + $0x88] sm:$0xf]
      %v3520 = vld [vmem:[%s1563 + $0x8c] sm:$0x1]
      %v3521 = vld [vmem:[%s1563 + $0x90] sm:$0xf]
      %v3522 = vld [vmem:[%s1563 + $0x94] sm:$0xf]
      %v3523 = vld [vmem:[%s1563 + $0x98] sm:$0x1]
      %v3524 = vld [vmem:[%s1563 + $0x9c] sm:$0xf]
      %v3525 = vld [vmem:[%s1563 + $0xa0] sm:$0xf]
      %v3526 = vld [vmem:[%s1563 + $0xa4] sm:$0x1]
      %v3527 = vld [vmem:[%s1563 + $0xa8] sm:$0xf]
      %v3528 = vld [vmem:[%s1563 + $0xac] sm:$0xf]
      %v3529 = vld [vmem:[%s1563 + $0xb0] sm:$0x1]
      %v3530 = vld [vmem:[%s1563 + $0xb4] sm:$0xf]
      %v3531 = vld [vmem:[%s1563 + $0xb8] sm:$0xf]
      %v3532 = vld [vmem:[%s1563 + $0xbc] sm:$0x1]
      %v3534 = vshrl.u32 %v3485, 16
      %v3536 = vrot.slane %v3534, 4
      %v3537 = vshll.u32 %v3485, 16
      %v3539 = vrot.slane %v3537, 5
      %v3540 = vor.u32 %v3536, %v3539
      %v3541 = vrot.slane %v3540, 4
      %v3543 = vshll.u32 %v3486, 16
      %v3545 = vrot.slane %v3543, 5
      %v3546 = vsel %vm1729, %v3541, %v3545
      %v3547 = vshrl.u32 %v3486, 16
      %v3549 = vrot.slane %v3547, 4
      %v3550 = vor.u32 %v3549, %v3545
      %v3551 = vrot.slane %v3550, 4
      %v3553 = vshll.u32 %v3487, 16
      %v3555 = vrot.slane %v3553, 5
      %v3556 = vsel %vm1729, %v3551, %v3555
      %v3558 = vshrl.u32 %v3488, 16
      %v3560 = vrot.slane %v3558, 4
      %v3561 = vshll.u32 %v3488, 16
      %v3563 = vrot.slane %v3561, 5
      %v3564 = vor.u32 %v3560, %v3563
      %v3565 = vrot.slane %v3564, 4
      %v3567 = vshll.u32 %v3489, 16
      %v3569 = vrot.slane %v3567, 5
      %v3570 = vsel %vm1729, %v3565, %v3569
      %v3571 = vshrl.u32 %v3489, 16
      %v3573 = vrot.slane %v3571, 4
      %v3574 = vor.u32 %v3573, %v3569
      %v3575 = vrot.slane %v3574, 4
      %v3577 = vshll.u32 %v3490, 16
      %v3579 = vrot.slane %v3577, 5
      %v3580 = vsel %vm1729, %v3575, %v3579
      %v3582 = vshrl.u32 %v3491, 16
      %v3584 = vrot.slane %v3582, 4
      %v3585 = vshll.u32 %v3491, 16
      %v3587 = vrot.slane %v3585, 5
      %v3588 = vor.u32 %v3584, %v3587
      %v3589 = vrot.slane %v3588, 4
      %v3591 = vshll.u32 %v3492, 16
      %v3593 = vrot.slane %v3591, 5
      %v3594 = vsel %vm1729, %v3589, %v3593
      %v3595 = vshrl.u32 %v3492, 16
      %v3597 = vrot.slane %v3595, 4
      %v3598 = vor.u32 %v3597, %v3593
      %v3599 = vrot.slane %v3598, 4
      %v3601 = vshll.u32 %v3493, 16
      %v3603 = vrot.slane %v3601, 5
      %v3604 = vsel %vm1729, %v3599, %v3603
      %v3606 = vshrl.u32 %v3494, 16
      %v3608 = vrot.slane %v3606, 4
      %v3609 = vshll.u32 %v3494, 16
      %v3611 = vrot.slane %v3609, 5
      %v3612 = vor.u32 %v3608, %v3611
      %v3613 = vrot.slane %v3612, 4
      %v3615 = vshll.u32 %v3495, 16
      %v3617 = vrot.slane %v3615, 5
      %v3618 = vsel %vm1729, %v3613, %v3617
      %v3619 = vshrl.u32 %v3495, 16
      %v3621 = vrot.slane %v3619, 4
      %v3622 = vor.u32 %v3621, %v3617
      %v3623 = vrot.slane %v3622, 4
      %v3625 = vshll.u32 %v3496, 16
      %v3627 = vrot.slane %v3625, 5
      %v3628 = vsel %vm1729, %v3623, %v3627
      %v3630 = vshrl.u32 %v3497, 16
      %v3632 = vrot.slane %v3630, 4
      %v3633 = vshll.u32 %v3497, 16
      %v3635 = vrot.slane %v3633, 5
      %v3636 = vor.u32 %v3632, %v3635
      %v3637 = vrot.slane %v3636, 4
      %v3639 = vshll.u32 %v3498, 16
      %v3641 = vrot.slane %v3639, 5
      %v3642 = vsel %vm1729, %v3637, %v3641
      %v3643 = vshrl.u32 %v3498, 16
      %v3645 = vrot.slane %v3643, 4
      %v3646 = vor.u32 %v3645, %v3641
      %v3647 = vrot.slane %v3646, 4
      %v3649 = vshll.u32 %v3499, 16
      %v3651 = vrot.slane %v3649, 5
      %v3652 = vsel %vm1729, %v3647, %v3651
      %v3654 = vshrl.u32 %v3500, 16
      %v3656 = vrot.slane %v3654, 4
      %v3657 = vshll.u32 %v3500, 16
      %v3659 = vrot.slane %v3657, 5
      %v3660 = vor.u32 %v3656, %v3659
      %v3661 = vrot.slane %v3660, 4
      %v3663 = vshll.u32 %v3501, 16
      %v3665 = vrot.slane %v3663, 5
      %v3666 = vsel %vm1729, %v3661, %v3665
      %v3667 = vshrl.u32 %v3501, 16
      %v3669 = vrot.slane %v3667, 4
      %v3670 = vor.u32 %v3669, %v3665
      %v3671 = vrot.slane %v3670, 4
      %v3673 = vshll.u32 %v3502, 16
      %v3675 = vrot.slane %v3673, 5
      %v3676 = vsel %vm1729, %v3671, %v3675
      %v3678 = vshrl.u32 %v3503, 16
      %v3680 = vrot.slane %v3678, 4
      %v3681 = vshll.u32 %v3503, 16
      %v3683 = vrot.slane %v3681, 5
      %v3684 = vor.u32 %v3680, %v3683
      %v3685 = vrot.slane %v3684, 4
      %v3687 = vshll.u32 %v3504, 16
      %v3689 = vrot.slane %v3687, 5
      %v3690 = vsel %vm1729, %v3685, %v3689
      %v3691 = vshrl.u32 %v3504, 16
      %v3693 = vrot.slane %v3691, 4
      %v3694 = vor.u32 %v3693, %v3689
      %v3695 = vrot.slane %v3694, 4
      %v3697 = vshll.u32 %v3505, 16
      %v3699 = vrot.slane %v3697, 5
      %v3700 = vsel %vm1729, %v3695, %v3699
      %v3702 = vshrl.u32 %v3506, 16
      %v3704 = vrot.slane %v3702, 4
      %v3705 = vshll.u32 %v3506, 16
      %v3707 = vrot.slane %v3705, 5
      %v3708 = vor.u32 %v3704, %v3707
      %v3709 = vrot.slane %v3708, 4
      %v3711 = vshll.u32 %v3507, 16
      %v3713 = vrot.slane %v3711, 5
      %v3714 = vsel %vm1729, %v3709, %v3713
      %v3715 = vshrl.u32 %v3507, 16
      %v3717 = vrot.slane %v3715, 4
      %v3718 = vor.u32 %v3717, %v3713
      %v3719 = vrot.slane %v3718, 4
      %v3721 = vshll.u32 %v3508, 16
      %v3723 = vrot.slane %v3721, 5
      %v3724 = vsel %vm1729, %v3719, %v3723
      %v3726 = vshrl.u32 %v3509, 16
      %v3728 = vrot.slane %v3726, 4
      %v3729 = vshll.u32 %v3509, 16
      %v3731 = vrot.slane %v3729, 5
      %v3732 = vor.u32 %v3728, %v3731
      %v3733 = vrot.slane %v3732, 4
      %v3735 = vshll.u32 %v3510, 16
      %v3737 = vrot.slane %v3735, 5
      %v3738 = vsel %vm1729, %v3733, %v3737
      %v3739 = vshrl.u32 %v3510, 16
      %v3741 = vrot.slane %v3739, 4
      %v3742 = vor.u32 %v3741, %v3737
      %v3743 = vrot.slane %v3742, 4
      %v3745 = vshll.u32 %v3511, 16
      %v3747 = vrot.slane %v3745, 5
      %v3748 = vsel %vm1729, %v3743, %v3747
      %v3750 = vshrl.u32 %v3512, 16
      %v3752 = vrot.slane %v3750, 4
      %v3753 = vshll.u32 %v3512, 16
      %v3755 = vrot.slane %v3753, 5
      %v3756 = vor.u32 %v3752, %v3755
      %v3757 = vrot.slane %v3756, 4
      %v3759 = vshll.u32 %v3513, 16
      %v3761 = vrot.slane %v3759, 5
      %v3762 = vsel %vm1729, %v3757, %v3761
      %v3763 = vshrl.u32 %v3513, 16
      %v3765 = vrot.slane %v3763, 4
      %v3766 = vor.u32 %v3765, %v3761
      %v3767 = vrot.slane %v3766, 4
      %v3769 = vshll.u32 %v3514, 16
      %v3771 = vrot.slane %v3769, 5
      %v3772 = vsel %vm1729, %v3767, %v3771
      %v3774 = vshrl.u32 %v3515, 16
      %v3776 = vrot.slane %v3774, 4
      %v3777 = vshll.u32 %v3515, 16
      %v3779 = vrot.slane %v3777, 5
      %v3780 = vor.u32 %v3776, %v3779
      %v3781 = vrot.slane %v3780, 4
      %v3783 = vshll.u32 %v3516, 16
      %v3785 = vrot.slane %v3783, 5
      %v3786 = vsel %vm1729, %v3781, %v3785
      %v3787 = vshrl.u32 %v3516, 16
      %v3789 = vrot.slane %v3787, 4
      %v3790 = vor.u32 %v3789, %v3785
      %v3791 = vrot.slane %v3790, 4
      %v3793 = vshll.u32 %v3517, 16
      %v3795 = vrot.slane %v3793, 5
      %v3796 = vsel %vm1729, %v3791, %v3795
      %v3798 = vshrl.u32 %v3518, 16
      %v3800 = vrot.slane %v3798, 4
      %v3801 = vshll.u32 %v3518, 16
      %v3803 = vrot.slane %v3801, 5
      %v3804 = vor.u32 %v3800, %v3803
      %v3805 = vrot.slane %v3804, 4
      %v3807 = vshll.u32 %v3519, 16
      %v3809 = vrot.slane %v3807, 5
      %v3810 = vsel %vm1729, %v3805, %v3809
      %v3811 = vshrl.u32 %v3519, 16
      %v3813 = vrot.slane %v3811, 4
      %v3814 = vor.u32 %v3813, %v3809
      %v3815 = vrot.slane %v3814, 4
      %v3817 = vshll.u32 %v3520, 16
      %v3819 = vrot.slane %v3817, 5
      %v3820 = vsel %vm1729, %v3815, %v3819
      %v3822 = vshrl.u32 %v3521, 16
      %v3824 = vrot.slane %v3822, 4
      %v3825 = vshll.u32 %v3521, 16
      %v3827 = vrot.slane %v3825, 5
      %v3828 = vor.u32 %v3824, %v3827
      %v3829 = vrot.slane %v3828, 4
      %v3831 = vshll.u32 %v3522, 16
      %v3833 = vrot.slane %v3831, 5
      %v3834 = vsel %vm1729, %v3829, %v3833
      %v3835 = vshrl.u32 %v3522, 16
      %v3837 = vrot.slane %v3835, 4
      %v3838 = vor.u32 %v3837, %v3833
      %v3839 = vrot.slane %v3838, 4
      %v3841 = vshll.u32 %v3523, 16
      %v3843 = vrot.slane %v3841, 5
      %v3844 = vsel %vm1729, %v3839, %v3843
      %v3846 = vshrl.u32 %v3524, 16
      %v3848 = vrot.slane %v3846, 4
      %v3849 = vshll.u32 %v3524, 16
      %v3851 = vrot.slane %v3849, 5
      %v3852 = vor.u32 %v3848, %v3851
      %v3853 = vrot.slane %v3852, 4
      %v3855 = vshll.u32 %v3525, 16
      %v3857 = vrot.slane %v3855, 5
      %v3858 = vsel %vm1729, %v3853, %v3857
      %v3859 = vshrl.u32 %v3525, 16
      %v3861 = vrot.slane %v3859, 4
      %v3862 = vor.u32 %v3861, %v3857
      %v3863 = vrot.slane %v3862, 4
      %v3865 = vshll.u32 %v3526, 16
      %v3867 = vrot.slane %v3865, 5
      %v3868 = vsel %vm1729, %v3863, %v3867
      %v3870 = vshrl.u32 %v3527, 16
      %v3872 = vrot.slane %v3870, 4
      %v3873 = vshll.u32 %v3527, 16
      %v3875 = vrot.slane %v3873, 5
      %v3876 = vor.u32 %v3872, %v3875
      %v3877 = vrot.slane %v3876, 4
      %v3879 = vshll.u32 %v3528, 16
      %v3881 = vrot.slane %v3879, 5
      %v3882 = vsel %vm1729, %v3877, %v3881
      %v3883 = vshrl.u32 %v3528, 16
      %v3885 = vrot.slane %v3883, 4
      %v3886 = vor.u32 %v3885, %v3881
      %v3887 = vrot.slane %v3886, 4
      %v3889 = vshll.u32 %v3529, 16
      %v3891 = vrot.slane %v3889, 5
      %v3892 = vsel %vm1729, %v3887, %v3891
      %v3894 = vshrl.u32 %v3530, 16
      %v3896 = vrot.slane %v3894, 4
      %v3897 = vshll.u32 %v3530, 16
      %v3899 = vrot.slane %v3897, 5
      %v3900 = vor.u32 %v3896, %v3899
      %v3901 = vrot.slane %v3900, 4
      %v3903 = vshll.u32 %v3531, 16
      %v3905 = vrot.slane %v3903, 5
      %v3906 = vsel %vm1729, %v3901, %v3905
      %v3907 = vshrl.u32 %v3531, 16
      %v3909 = vrot.slane %v3907, 4
      %v3910 = vor.u32 %v3909, %v3905
      %v3911 = vrot.slane %v3910, 4
      %v3913 = vshll.u32 %v3532, 16
      %v3915 = vrot.slane %v3913, 5
      %v3916 = vsel %vm1729, %v3911, %v3915
      %s3917 = scalar_lea.vmem %s5, 16
      %v3918 = vld [vmem:[%s3917] sm:$0xf]
      %v3919 = vunpack.c.l.b16 %v3546
      %v3920 = vunpack.c.l.b16 %v3556
      %v3921 = vunpack.c.l.b16 %v3570
      %v3922 = vunpack.c.l.b16 %v3580
      %v3923 = vunpack.c.l.b16 %v3594
      %v3924 = vunpack.c.l.b16 %v3604
      %v3925 = vunpack.c.l.b16 %v3618
      %v3926 = vunpack.c.l.b16 %v3628
      %v3927 = vunpack.c.l.b16 %v3642
      %v3928 = vunpack.c.l.b16 %v3652
      %v3929 = vunpack.c.l.b16 %v3666
      %v3930 = vunpack.c.l.b16 %v3676
      %v3931 = vunpack.c.l.b16 %v3690
      %v3932 = vunpack.c.l.b16 %v3700
      %v3933 = vunpack.c.l.b16 %v3714
      %v3934 = vunpack.c.l.b16 %v3724
      %v3935 = vunpack.c.l.b16 %v3738
      %v3936 = vunpack.c.l.b16 %v3748
      %v3937 = vunpack.c.l.b16 %v3762
      %v3938 = vunpack.c.l.b16 %v3772
      %v3939 = vunpack.c.l.b16 %v3786
      %v3940 = vunpack.c.l.b16 %v3796
      %v3941 = vunpack.c.l.b16 %v3810
      %v3942 = vunpack.c.l.b16 %v3820
      %v3943 = vunpack.c.l.b16 %v3834
      %v3944 = vunpack.c.l.b16 %v3844
      %v3945 = vunpack.c.l.b16 %v3858
      %v3946 = vunpack.c.l.b16 %v3868
      %v3947 = vunpack.c.l.b16 %v3882
      %v3948 = vunpack.c.l.b16 %v3892
      %v3949 = vunpack.c.l.b16 %v3906
      %v3950 = vunpack.c.l.b16 %v3916
      %v3951 = vpack.c.b16 %v3920, %v3919
      %v3952 = vpack.c.b16 %v3922, %v3921
      %v3953 = vpack.c.b16 %v3924, %v3923
      %v3954 = vpack.c.b16 %v3926, %v3925
      %v3955 = vpack.c.b16 %v3928, %v3927
      %v3956 = vpack.c.b16 %v3930, %v3929
      %v3957 = vpack.c.b16 %v3932, %v3931
      %v3958 = vpack.c.b16 %v3934, %v3933
      %v3959 = vpack.c.b16 %v3936, %v3935
      %v3960 = vpack.c.b16 %v3938, %v3937
      %v3961 = vpack.c.b16 %v3940, %v3939
      %v3962 = vpack.c.b16 %v3942, %v3941
      %v3963 = vpack.c.b16 %v3944, %v3943
      %v3964 = vpack.c.b16 %v3946, %v3945
      %v3965 = vpack.c.b16 %v3948, %v3947
      %v3966 = vpack.c.b16 %v3950, %v3949
      %v3968 = vsel %vm2164, %v3951, 0
      %v3971 = vsel %vm2164, %v3952, 0
      %v3974 = vsel %vm2164, %v3953, 0
      %v3977 = vsel %vm2164, %v3954, 0
      %v3980 = vsel %vm2164, %v3955, 0
      %v3983 = vsel %vm2164, %v3956, 0
      %v3986 = vsel %vm2164, %v3957, 0
      %v3989 = vsel %vm2164, %v3958, 0
      %v3992 = vsel %vm2164, %v3959, 0
      %v3995 = vsel %vm2164, %v3960, 0
      %v3998 = vsel %vm2164, %v3961, 0
      %v4001 = vsel %vm2164, %v3962, 0
      %v4004 = vsel %vm2164, %v3963, 0
      %v4007 = vsel %vm2164, %v3964, 0
      %v4010 = vsel %vm2164, %v3965, 0
      %v4013 = vsel %vm2164, %v3966, 0
      %v4016 = vsel %vm2213, %v3918, 0
      %4018 = vmatprep.subr.bf16.mxu0 0
      %4019 = vmatpush1.bf16.msra.mxu0 %v4016
      %4020 = vmatprep.subr.bf16.mxu0 0
      %4021 = vmatpush1.bf16.msra.mxu0 0
      %4022 = vmatprep.subr.bf16.mxu0 0
      %4023 = vmatpush1.bf16.msra.mxu0 0
      %4024 = vmatprep.subr.bf16.mxu0 0
      %4025 = vmatpush1.bf16.msra.mxu0 0
      %4026 = vmatprep.subr.bf16.mxu0 0
      %4027 = vmatpush1.bf16.msra.mxu0 0
      %4028 = vmatprep.subr.bf16.mxu0 0
      %4029 = vmatpush1.bf16.msra.mxu0 0
      %4030 = vmatprep.subr.bf16.mxu0 0
      %4031 = vmatpush1.bf16.msra.mxu0 0
      %4032 = vmatprep.subr.bf16.mxu0 0
      %4033 = vmatpush1.bf16.msra.mxu0 0
      %4034 = vmatprep.subr.bf16.mxu0 0
      %4035 = vmatpush1.bf16.msra.mxu0 0
      %4036 = vmatprep.subr.bf16.mxu0 0
      %4037 = vmatpush1.bf16.msra.mxu0 0
      %4038 = vmatprep.subr.bf16.mxu0 0
      %4039 = vmatpush1.bf16.msra.mxu0 0
      %4040 = vmatprep.subr.bf16.mxu0 0
      %4041 = vmatpush1.bf16.msra.mxu0 0
      %4042 = vmatprep.subr.bf16.mxu0 0
      %4043 = vmatpush1.bf16.msra.mxu0 0
      %4044 = vmatprep.subr.bf16.mxu0 0
      %4045 = vmatpush1.bf16.msra.mxu0 0
      %4046 = vmatprep.subr.bf16.mxu0 0
      %4047 = vmatpush1.bf16.msra.mxu0 0
      %4048 = vmatprep.subr.bf16.mxu0 0
      %4049 = vmatpush1.bf16.msra.mxu0 0
      %4050 = vmatprep.mubr.bf16.mxu0 0
      %4051 = vmatmul.mubr.bf16.gmra.mrb[0].mxu0 %v3968
      %v4052 = vpop.f32.mrb[0].mxu0
      %v4053 = vadd.f32 0.0, %v4052
      %v4054 = vpop.f32.mrb[0].mxu0
      %v4055 = vpop.f32.mrb[0].mxu0
      %v4056 = vadd.f32 0.0, %v4055
      %v4057 = vpop.f32.mrb[0].mxu0
      %4058 = vmatprep.mubr.bf16.mxu0 0
      %4059 = vmatmul.mubr.bf16.gmra.mrb[0].mxu0 %v3971
      %v4060 = vpop.f32.mrb[0].mxu0
      %v4061 = vadd.f32 0.0, %v4060
      %v4062 = vpop.f32.mrb[0].mxu0
      %v4063 = vpop.f32.mrb[0].mxu0
      %v4064 = vadd.f32 0.0, %v4063
      %v4065 = vpop.f32.mrb[0].mxu0
      %4066 = vmatprep.mubr.bf16.mxu0 0
      %4067 = vmatmul.mubr.bf16.gmra.mrb[0].mxu0 %v3974
      %v4068 = vpop.f32.mrb[0].mxu0
      %v4069 = vadd.f32 0.0, %v4068
      %v4070 = vpop.f32.mrb[0].mxu0
      %v4071 = vpop.f32.mrb[0].mxu0
      %v4072 = vadd.f32 0.0, %v4071
      %v4073 = vpop.f32.mrb[0].mxu0
      %4074 = vmatprep.mubr.bf16.mxu0 0
      %4075 = vmatmul.mubr.bf16.gmra.mrb[0].mxu0 %v3977
      %v4076 = vpop.f32.mrb[0].mxu0
      %v4077 = vadd.f32 0.0, %v4076
      %v4078 = vpop.f32.mrb[0].mxu0
      %v4079 = vpop.f32.mrb[0].mxu0
      %v4080 = vadd.f32 0.0, %v4079
      %v4081 = vpop.f32.mrb[0].mxu0
      %4082 = vmatprep.mubr.bf16.mxu0 0
      %4083 = vmatmul.mubr.bf16.gmra.mrb[0].mxu0 %v3980
      %v4084 = vpop.f32.mrb[0].mxu0
      %v4085 = vadd.f32 0.0, %v4084
      %v4086 = vpop.f32.mrb[0].mxu0
      %v4087 = vpop.f32.mrb[0].mxu0
      %v4088 = vadd.f32 0.0, %v4087
      %v4089 = vpop.f32.mrb[0].mxu0
      %4090 = vmatprep.mubr.bf16.mxu0 0
      %4091 = vmatmul.mubr.bf16.gmra.mrb[0].mxu0 %v3983
      %v4092 = vpop.f32.mrb[0].mxu0
      %v4093 = vadd.f32 0.0, %v4092
      %v4094 = vpop.f32.mrb[0].mxu0
      %v4095 = vpop.f32.mrb[0].mxu0
      %v4096 = vadd.f32 0.0, %v4095
      %v4097 = vpop.f32.mrb[0].mxu0
      %4098 = vmatprep.mubr.bf16.mxu0 0
      %4099 = vmatmul.mubr.bf16.gmra.mrb[0].mxu0 %v3986
      %v4100 = vpop.f32.mrb[0].mxu0
      %v4101 = vadd.f32 0.0, %v4100
      %v4102 = vpop.f32.mrb[0].mxu0
      %v4103 = vpop.f32.mrb[0].mxu0
      %v4104 = vadd.f32 0.0, %v4103
      %v4105 = vpop.f32.mrb[0].mxu0
      %4106 = vmatprep.mubr.bf16.mxu0 0
      %4107 = vmatmul.mubr.bf16.gmra.mrb[0].mxu0 %v3989
      %v4108 = vpop.f32.mrb[0].mxu0
      %v4109 = vadd.f32 0.0, %v4108
      %v4110 = vpop.f32.mrb[0].mxu0
      %v4111 = vpop.f32.mrb[0].mxu0
      %v4112 = vadd.f32 0.0, %v4111
      %v4113 = vpop.f32.mrb[0].mxu0
      %4114 = vmatprep.mubr.bf16.mxu0 0
      %4115 = vmatmul.mubr.bf16.gmra.mrb[0].mxu0 %v3992
      %v4116 = vpop.f32.mrb[0].mxu0
      %v4117 = vadd.f32 0.0, %v4116
      %v4118 = vpop.f32.mrb[0].mxu0
      %v4119 = vpop.f32.mrb[0].mxu0
      %v4120 = vadd.f32 0.0, %v4119
      %v4121 = vpop.f32.mrb[0].mxu0
      %4122 = vmatprep.mubr.bf16.mxu0 0
      %4123 = vmatmul.mubr.bf16.gmra.mrb[0].mxu0 %v3995
      %v4124 = vpop.f32.mrb[0].mxu0
      %v4125 = vadd.f32 0.0, %v4124
      %v4126 = vpop.f32.mrb[0].mxu0
      %v4127 = vpop.f32.mrb[0].mxu0
      %v4128 = vadd.f32 0.0, %v4127
      %v4129 = vpop.f32.mrb[0].mxu0
      %4130 = vmatprep.mubr.bf16.mxu0 0
      %4131 = vmatmul.mubr.bf16.gmra.mrb[0].mxu0 %v3998
      %v4132 = vpop.f32.mrb[0].mxu0
      %v4133 = vadd.f32 0.0, %v4132
      %v4134 = vpop.f32.mrb[0].mxu0
      %v4135 = vpop.f32.mrb[0].mxu0
      %v4136 = vadd.f32 0.0, %v4135
      %v4137 = vpop.f32.mrb[0].mxu0
      %4138 = vmatprep.mubr.bf16.mxu0 0
      %4139 = vmatmul.mubr.bf16.gmra.mrb[0].mxu0 %v4001
      %v4140 = vpop.f32.mrb[0].mxu0
      %v4141 = vadd.f32 0.0, %v4140
      %v4142 = vpop.f32.mrb[0].mxu0
      %v4143 = vpop.f32.mrb[0].mxu0
      %v4144 = vadd.f32 0.0, %v4143
      %v4145 = vpop.f32.mrb[0].mxu0
      %4146 = vmatprep.mubr.bf16.mxu0 0
      %4147 = vmatmul.mubr.bf16.gmra.mrb[0].mxu0 %v4004
      %v4148 = vpop.f32.mrb[0].mxu0
      %v4149 = vadd.f32 0.0, %v4148
      %v4150 = vpop.f32.mrb[0].mxu0
      %v4151 = vpop.f32.mrb[0].mxu0
      %v4152 = vadd.f32 0.0, %v4151
      %v4153 = vpop.f32.mrb[0].mxu0
      %4154 = vmatprep.mubr.bf16.mxu0 0
      %4155 = vmatmul.mubr.bf16.gmra.mrb[0].mxu0 %v4007
      %v4156 = vpop.f32.mrb[0].mxu0
      %v4157 = vadd.f32 0.0, %v4156
      %v4158 = vpop.f32.mrb[0].mxu0
      %v4159 = vpop.f32.mrb[0].mxu0
      %v4160 = vadd.f32 0.0, %v4159
      %v4161 = vpop.f32.mrb[0].mxu0
      %4162 = vmatprep.mubr.bf16.mxu0 0
      %4163 = vmatmul.mubr.bf16.gmra.mrb[0].mxu0 %v4010
      %v4164 = vpop.f32.mrb[0].mxu0
      %v4165 = vadd.f32 0.0, %v4164
      %v4166 = vpop.f32.mrb[0].mxu0
      %v4167 = vpop.f32.mrb[0].mxu0
      %v4168 = vadd.f32 0.0, %v4167
      %v4169 = vpop.f32.mrb[0].mxu0
      %4170 = vmatprep.mubr.bf16.mxu0 0
      %4171 = vmatmul.mubr.bf16.gmra.mrb[0].mxu0 %v4013
      %v4172 = vpop.f32.mrb[0].mxu0
      %v4173 = vadd.f32 0.0, %v4172
      %v4174 = vpop.f32.mrb[0].mxu0
      %v4175 = vpop.f32.mrb[0].mxu0
      %v4176 = vadd.f32 0.0, %v4175
      %v4177 = vpop.f32.mrb[0].mxu0
      %4178 = vdwg.mxu0
      %v4179 = vadd.f32 %v3453, %v4053
      %v4180 = vadd.f32 %v3454, %v4056
      %v4181 = vadd.f32 %v3455, %v4061
      %v4182 = vadd.f32 %v3456, %v4064
      %v4183 = vadd.f32 %v3457, %v4069
      %v4184 = vadd.f32 %v3458, %v4072
      %v4185 = vadd.f32 %v3459, %v4077
      %v4186 = vadd.f32 %v3460, %v4080
      %v4187 = vadd.f32 %v3461, %v4085
      %v4188 = vadd.f32 %v3462, %v4088
      %v4189 = vadd.f32 %v3463, %v4093
      %v4190 = vadd.f32 %v3464, %v4096
      %v4191 = vadd.f32 %v3465, %v4101
      %v4192 = vadd.f32 %v3466, %v4104
      %v4193 = vadd.f32 %v3467, %v4109
      %v4194 = vadd.f32 %v3468, %v4112
      %v4195 = vadd.f32 %v3469, %v4117
      %v4196 = vadd.f32 %v3470, %v4120
      %v4197 = vadd.f32 %v3471, %v4125
      %v4198 = vadd.f32 %v3472, %v4128
      %v4199 = vadd.f32 %v3473, %v4133
      %v4200 = vadd.f32 %v3474, %v4136
      %v4201 = vadd.f32 %v3475, %v4141
      %v4202 = vadd.f32 %v3476, %v4144
      %v4203 = vadd.f32 %v3477, %v4149
      %v4204 = vadd.f32 %v3478, %v4152
      %v4205 = vadd.f32 %v3479, %v4157
      %v4206 = vadd.f32 %v3480, %v4160
      %v4207 = vadd.f32 %v3481, %v4165
      %v4208 = vadd.f32 %v3482, %v4168
      %v4209 = vadd.f32 %v3483, %v4173
      %v4210 = vadd.f32 %v3484, %v4176
      %v4211 = vld [vmem:[%s1563] sm:$0xe]
      %v4212 = vld [vmem:[%s1563 + $0xc] sm:$0xe]
      %v4213 = vld [vmem:[%s1563 + $0x18] sm:$0xe]
      %v4214 = vld [vmem:[%s1563 + $0x24] sm:$0xe]
      %v4215 = vld [vmem:[%s1563 + $0x30] sm:$0xe]
      %v4216 = vld [vmem:[%s1563 + $0x3c] sm:$0xe]
      %v4217 = vld [vmem:[%s1563 + $0x48] sm:$0xe]
      %v4218 = vld [vmem:[%s1563 + $0x54] sm:$0xe]
      %v4219 = vld [vmem:[%s1563 + $0x60] sm:$0xe]
      %v4220 = vld [vmem:[%s1563 + $0x6c] sm:$0xe]
      %v4221 = vld [vmem:[%s1563 + $0x78] sm:$0xe]
      %v4222 = vld [vmem:[%s1563 + $0x84] sm:$0xe]
      %v4223 = vld [vmem:[%s1563 + $0x90] sm:$0xe]
      %v4224 = vld [vmem:[%s1563 + $0x9c] sm:$0xe]
      %v4225 = vld [vmem:[%s1563 + $0xa8] sm:$0xe]
      %v4226 = vld [vmem:[%s1563 + $0xb4] sm:$0xe]
      %v4275 = vrot.slane %v4211, 5
      %v4276 = vrot.slane %v4275, 4
      %v4277 = vrot.slane %v3486, 5
      %v4278 = vsel %vm2720, %v4276, %v4277
      %v4279 = vrot.slane %v4277, 4
      %v4280 = vrot.slane %v3487, 5
      %v4281 = vsel %vm2720, %v4279, %v4280
      %v4282 = vrot.slane %v4212, 5
      %v4283 = vrot.slane %v4282, 4
      %v4284 = vrot.slane %v3489, 5
      %v4285 = vsel %vm2720, %v4283, %v4284
      %v4286 = vrot.slane %v4284, 4
      %v4287 = vrot.slane %v3490, 5
      %v4288 = vsel %vm2720, %v4286, %v4287
      %v4289 = vrot.slane %v4213, 5
      %v4290 = vrot.slane %v4289, 4
      %v4291 = vrot.slane %v3492, 5
      %v4292 = vsel %vm2720, %v4290, %v4291
      %v4293 = vrot.slane %v4291, 4
      %v4294 = vrot.slane %v3493, 5
      %v4295 = vsel %vm2720, %v4293, %v4294
      %v4296 = vrot.slane %v4214, 5
      %v4297 = vrot.slane %v4296, 4
      %v4298 = vrot.slane %v3495, 5
      %v4299 = vsel %vm2720, %v4297, %v4298
      %v4300 = vrot.slane %v4298, 4
      %v4301 = vrot.slane %v3496, 5
      %v4302 = vsel %vm2720, %v4300, %v4301
      %v4303 = vrot.slane %v4215, 5
      %v4304 = vrot.slane %v4303, 4
      %v4305 = vrot.slane %v3498, 5
      %v4306 = vsel %vm2720, %v4304, %v4305
      %v4307 = vrot.slane %v4305, 4
      %v4308 = vrot.slane %v3499, 5
      %v4309 = vsel %vm2720, %v4307, %v4308
      %v4310 = vrot.slane %v4216, 5
      %v4311 = vrot.slane %v4310, 4
      %v4312 = vrot.slane %v3501, 5
      %v4313 = vsel %vm2720, %v4311, %v4312
      %v4314 = vrot.slane %v4312, 4
      %v4315 = vrot.slane %v3502, 5
      %v4316 = vsel %vm2720, %v4314, %v4315
      %v4317 = vrot.slane %v4217, 5
      %v4318 = vrot.slane %v4317, 4
      %v4319 = vrot.slane %v3504, 5
      %v4320 = vsel %vm2720, %v4318, %v4319
      %v4321 = vrot.slane %v4319, 4
      %v4322 = vrot.slane %v3505, 5
      %v4323 = vsel %vm2720, %v4321, %v4322
      %v4324 = vrot.slane %v4218, 5
      %v4325 = vrot.slane %v4324, 4
      %v4326 = vrot.slane %v3507, 5
      %v4327 = vsel %vm2720, %v4325, %v4326
      %v4328 = vrot.slane %v4326, 4
      %v4329 = vrot.slane %v3508, 5
      %v4330 = vsel %vm2720, %v4328, %v4329
      %v4331 = vrot.slane %v4219, 5
      %v4332 = vrot.slane %v4331, 4
      %v4333 = vrot.slane %v3510, 5
      %v4334 = vsel %vm2720, %v4332, %v4333
      %v4335 = vrot.slane %v4333, 4
      %v4336 = vrot.slane %v3511, 5
      %v4337 = vsel %vm2720, %v4335, %v4336
      %v4338 = vrot.slane %v4220, 5
      %v4339 = vrot.slane %v4338, 4
      %v4340 = vrot.slane %v3513, 5
      %v4341 = vsel %vm2720, %v4339, %v4340
      %v4342 = vrot.slane %v4340, 4
      %v4343 = vrot.slane %v3514, 5
      %v4344 = vsel %vm2720, %v4342, %v4343
      %v4345 = vrot.slane %v4221, 5
      %v4346 = vrot.slane %v4345, 4
      %v4347 = vrot.slane %v3516, 5
      %v4348 = vsel %vm2720, %v4346, %v4347
      %v4349 = vrot.slane %v4347, 4
      %v4350 = vrot.slane %v3517, 5
      %v4351 = vsel %vm2720, %v4349, %v4350
      %v4352 = vrot.slane %v4222, 5
      %v4353 = vrot.slane %v4352, 4
      %v4354 = vrot.slane %v3519, 5
      %v4355 = vsel %vm2720, %v4353, %v4354
      %v4356 = vrot.slane %v4354, 4
      %v4357 = vrot.slane %v3520, 5
      %v4358 = vsel %vm2720, %v4356, %v4357
      %v4359 = vrot.slane %v4223, 5
      %v4360 = vrot.slane %v4359, 4
      %v4361 = vrot.slane %v3522, 5
      %v4362 = vsel %vm2720, %v4360, %v4361
      %v4363 = vrot.slane %v4361, 4
      %v4364 = vrot.slane %v3523, 5
      %v4365 = vsel %vm2720, %v4363, %v4364
      %v4366 = vrot.slane %v4224, 5
      %v4367 = vrot.slane %v4366, 4
      %v4368 = vrot.slane %v3525, 5
      %v4369 = vsel %vm2720, %v4367, %v4368
      %v4370 = vrot.slane %v4368, 4
      %v4371 = vrot.slane %v3526, 5
      %v4372 = vsel %vm2720, %v4370, %v4371
      %v4373 = vrot.slane %v4225, 5
      %v4374 = vrot.slane %v4373, 4
      %v4375 = vrot.slane %v3528, 5
      %v4376 = vsel %vm2720, %v4374, %v4375
      %v4377 = vrot.slane %v4375, 4
      %v4378 = vrot.slane %v3529, 5
      %v4379 = vsel %vm2720, %v4377, %v4378
      %v4380 = vrot.slane %v4226, 5
      %v4381 = vrot.slane %v4380, 4
      %v4382 = vrot.slane %v3531, 5
      %v4383 = vsel %vm2720, %v4381, %v4382
      %v4384 = vrot.slane %v4382, 4
      %v4385 = vrot.slane %v3532, 5
      %v4386 = vsel %vm2720, %v4384, %v4385
      %s4387 = scalar_lea.vmem %s5, 20
      %v4388 = vld [vmem:[%s4387] sm:$0xf]
      %v4389 = vunpack.c.l.b16 %v4278
      %v4390 = vunpack.c.l.b16 %v4281
      %v4391 = vunpack.c.l.b16 %v4285
      %v4392 = vunpack.c.l.b16 %v4288
      %v4393 = vunpack.c.l.b16 %v4292
      %v4394 = vunpack.c.l.b16 %v4295
      %v4395 = vunpack.c.l.b16 %v4299
      %v4396 = vunpack.c.l.b16 %v4302
      %v4397 = vunpack.c.l.b16 %v4306
      %v4398 = vunpack.c.l.b16 %v4309
      %v4399 = vunpack.c.l.b16 %v4313
      %v4400 = vunpack.c.l.b16 %v4316
      %v4401 = vunpack.c.l.b16 %v4320
      %v4402 = vunpack.c.l.b16 %v4323
      %v4403 = vunpack.c.l.b16 %v4327
      %v4404 = vunpack.c.l.b16 %v4330
      %v4405 = vunpack.c.l.b16 %v4334
      %v4406 = vunpack.c.l.b16 %v4337
      %v4407 = vunpack.c.l.b16 %v4341
      %v4408 = vunpack.c.l.b16 %v4344
      %v4409 = vunpack.c.l.b16 %v4348
      %v4410 = vunpack.c.l.b16 %v4351
      %v4411 = vunpack.c.l.b16 %v4355
      %v4412 = vunpack.c.l.b16 %v4358
      %v4413 = vunpack.c.l.b16 %v4362
      %v4414 = vunpack.c.l.b16 %v4365
      %v4415 = vunpack.c.l.b16 %v4369
      %v4416 = vunpack.c.l.b16 %v4372
      %v4417 = vunpack.c.l.b16 %v4376
      %v4418 = vunpack.c.l.b16 %v4379
      %v4419 = vunpack.c.l.b16 %v4383
      %v4420 = vunpack.c.l.b16 %v4386
      %v4421 = vpack.c.b16 %v4390, %v4389
      %v4422 = vpack.c.b16 %v4392, %v4391
      %v4423 = vpack.c.b16 %v4394, %v4393
      %v4424 = vpack.c.b16 %v4396, %v4395
      %v4425 = vpack.c.b16 %v4398, %v4397
      %v4426 = vpack.c.b16 %v4400, %v4399
      %v4427 = vpack.c.b16 %v4402, %v4401
      %v4428 = vpack.c.b16 %v4404, %v4403
      %v4429 = vpack.c.b16 %v4406, %v4405
      %v4430 = vpack.c.b16 %v4408, %v4407
      %v4431 = vpack.c.b16 %v4410, %v4409
      %v4432 = vpack.c.b16 %v4412, %v4411
      %v4433 = vpack.c.b16 %v4414, %v4413
      %v4434 = vpack.c.b16 %v4416, %v4415
      %v4435 = vpack.c.b16 %v4418, %v4417
      %v4436 = vpack.c.b16 %v4420, %v4419
      %v4438 = vsel %vm2164, %v4421, 0
      %v4441 = vsel %vm2164, %v4422, 0
      %v4444 = vsel %vm2164, %v4423, 0
      %v4447 = vsel %vm2164, %v4424, 0
      %v4450 = vsel %vm2164, %v4425, 0
      %v4453 = vsel %vm2164, %v4426, 0
      %v4456 = vsel %vm2164, %v4427, 0
      %v4459 = vsel %vm2164, %v4428, 0
      %v4462 = vsel %vm2164, %v4429, 0
      %v4465 = vsel %vm2164, %v4430, 0
      %v4468 = vsel %vm2164, %v4431, 0
      %v4471 = vsel %vm2164, %v4432, 0
      %v4474 = vsel %vm2164, %v4433, 0
      %v4477 = vsel %vm2164, %v4434, 0
      %v4480 = vsel %vm2164, %v4435, 0
      %v4483 = vsel %vm2164, %v4436, 0
      %v4486 = vsel %vm2213, %v4388, 0
      %4488 = vmatprep.subr.bf16.mxu0 0
      %4489 = vmatpush1.bf16.msra.mxu0 %v4486
      %4490 = vmatprep.subr.bf16.mxu0 0
      %4491 = vmatpush1.bf16.msra.mxu0 0
      %4492 = vmatprep.subr.bf16.mxu0 0
      %4493 = vmatpush1.bf16.msra.mxu0 0
      %4494 = vmatprep.subr.bf16.mxu0 0
      %4495 = vmatpush1.bf16.msra.mxu0 0
      %4496 = vmatprep.subr.bf16.mxu0 0
      %4497 = vmatpush1.bf16.msra.mxu0 0
      %4498 = vmatprep.subr.bf16.mxu0 0
      %4499 = vmatpush1.bf16.msra.mxu0 0
      %4500 = vmatprep.subr.bf16.mxu0 0
      %4501 = vmatpush1.bf16.msra.mxu0 0
      %4502 = vmatprep.subr.bf16.mxu0 0
      %4503 = vmatpush1.bf16.msra.mxu0 0
      %4504 = vmatprep.subr.bf16.mxu0 0
      %4505 = vmatpush1.bf16.msra.mxu0 0
      %4506 = vmatprep.subr.bf16.mxu0 0
      %4507 = vmatpush1.bf16.msra.mxu0 0
      %4508 = vmatprep.subr.bf16.mxu0 0
      %4509 = vmatpush1.bf16.msra.mxu0 0
      %4510 = vmatprep.subr.bf16.mxu0 0
      %4511 = vmatpush1.bf16.msra.mxu0 0
      %4512 = vmatprep.subr.bf16.mxu0 0
      %4513 = vmatpush1.bf16.msra.mxu0 0
      %4514 = vmatprep.subr.bf16.mxu0 0
      %4515 = vmatpush1.bf16.msra.mxu0 0
      %4516 = vmatprep.subr.bf16.mxu0 0
      %4517 = vmatpush1.bf16.msra.mxu0 0
      %4518 = vmatprep.subr.bf16.mxu0 0
      %4519 = vmatpush1.bf16.msra.mxu0 0
      %4520 = vmatprep.mubr.bf16.mxu0 0
      %4521 = vmatmul.mubr.bf16.gmra.mrb[0].mxu0 %v4438
      %v4522 = vpop.f32.mrb[0].mxu0
      %v4523 = vadd.f32 0.0, %v4522
      %v4524 = vpop.f32.mrb[0].mxu0
      %v4525 = vpop.f32.mrb[0].mxu0
      %v4526 = vadd.f32 0.0, %v4525
      %v4527 = vpop.f32.mrb[0].mxu0
      %4528 = vmatprep.mubr.bf16.mxu0 0
      %4529 = vmatmul.mubr.bf16.gmra.mrb[0].mxu0 %v4441
      %v4530 = vpop.f32.mrb[0].mxu0
      %v4531 = vadd.f32 0.0, %v4530
      %v4532 = vpop.f32.mrb[0].mxu0
      %v4533 = vpop.f32.mrb[0].mxu0
      %v4534 = vadd.f32 0.0, %v4533
      %v4535 = vpop.f32.mrb[0].mxu0
      %4536 = vmatprep.mubr.bf16.mxu0 0
      %4537 = vmatmul.mubr.bf16.gmra.mrb[0].mxu0 %v4444
      %v4538 = vpop.f32.mrb[0].mxu0
      %v4539 = vadd.f32 0.0, %v4538
      %v4540 = vpop.f32.mrb[0].mxu0
      %v4541 = vpop.f32.mrb[0].mxu0
      %v4542 = vadd.f32 0.0, %v4541
      %v4543 = vpop.f32.mrb[0].mxu0
      %4544 = vmatprep.mubr.bf16.mxu0 0
      %4545 = vmatmul.mubr.bf16.gmra.mrb[0].mxu0 %v4447
      %v4546 = vpop.f32.mrb[0].mxu0
      %v4547 = vadd.f32 0.0, %v4546
      %v4548 = vpop.f32.mrb[0].mxu0
      %v4549 = vpop.f32.mrb[0].mxu0
      %v4550 = vadd.f32 0.0, %v4549
      %v4551 = vpop.f32.mrb[0].mxu0
      %4552 = vmatprep.mubr.bf16.mxu0 0
      %4553 = vmatmul.mubr.bf16.gmra.mrb[0].mxu0 %v4450
      %v4554 = vpop.f32.mrb[0].mxu0
      %v4555 = vadd.f32 0.0, %v4554
      %v4556 = vpop.f32.mrb[0].mxu0
      %v4557 = vpop.f32.mrb[0].mxu0
      %v4558 = vadd.f32 0.0, %v4557
      %v4559 = vpop.f32.mrb[0].mxu0
      %4560 = vmatprep.mubr.bf16.mxu0 0
      %4561 = vmatmul.mubr.bf16.gmra.mrb[0].mxu0 %v4453
      %v4562 = vpop.f32.mrb[0].mxu0
      %v4563 = vadd.f32 0.0, %v4562
      %v4564 = vpop.f32.mrb[0].mxu0
      %v4565 = vpop.f32.mrb[0].mxu0
      %v4566 = vadd.f32 0.0, %v4565
      %v4567 = vpop.f32.mrb[0].mxu0
      %4568 = vmatprep.mubr.bf16.mxu0 0
      %4569 = vmatmul.mubr.bf16.gmra.mrb[0].mxu0 %v4456
      %v4570 = vpop.f32.mrb[0].mxu0
      %v4571 = vadd.f32 0.0, %v4570
      %v4572 = vpop.f32.mrb[0].mxu0
      %v4573 = vpop.f32.mrb[0].mxu0
      %v4574 = vadd.f32 0.0, %v4573
      %v4575 = vpop.f32.mrb[0].mxu0
      %4576 = vmatprep.mubr.bf16.mxu0 0
      %4577 = vmatmul.mubr.bf16.gmra.mrb[0].mxu0 %v4459
      %v4578 = vpop.f32.mrb[0].mxu0
      %v4579 = vadd.f32 0.0, %v4578
      %v4580 = vpop.f32.mrb[0].mxu0
      %v4581 = vpop.f32.mrb[0].mxu0
      %v4582 = vadd.f32 0.0, %v4581
      %v4583 = vpop.f32.mrb[0].mxu0
      %4584 = vmatprep.mubr.bf16.mxu0 0
      %4585 = vmatmul.mubr.bf16.gmra.mrb[0].mxu0 %v4462
      %v4586 = vpop.f32.mrb[0].mxu0
      %v4587 = vadd.f32 0.0, %v4586
      %v4588 = vpop.f32.mrb[0].mxu0
      %v4589 = vpop.f32.mrb[0].mxu0
      %v4590 = vadd.f32 0.0, %v4589
      %v4591 = vpop.f32.mrb[0].mxu0
      %4592 = vmatprep.mubr.bf16.mxu0 0
      %4593 = vmatmul.mubr.bf16.gmra.mrb[0].mxu0 %v4465
      %v4594 = vpop.f32.mrb[0].mxu0
      %v4595 = vadd.f32 0.0, %v4594
      %v4596 = vpop.f32.mrb[0].mxu0
      %v4597 = vpop.f32.mrb[0].mxu0
      %v4598 = vadd.f32 0.0, %v4597
      %v4599 = vpop.f32.mrb[0].mxu0
      %4600 = vmatprep.mubr.bf16.mxu0 0
      %4601 = vmatmul.mubr.bf16.gmra.mrb[0].mxu0 %v4468
      %v4602 = vpop.f32.mrb[0].mxu0
      %v4603 = vadd.f32 0.0, %v4602
      %v4604 = vpop.f32.mrb[0].mxu0
      %v4605 = vpop.f32.mrb[0].mxu0
      %v4606 = vadd.f32 0.0, %v4605
      %v4607 = vpop.f32.mrb[0].mxu0
      %4608 = vmatprep.mubr.bf16.mxu0 0
      %4609 = vmatmul.mubr.bf16.gmra.mrb[0].mxu0 %v4471
      %v4610 = vpop.f32.mrb[0].mxu0
      %v4611 = vadd.f32 0.0, %v4610
      %v4612 = vpop.f32.mrb[0].mxu0
      %v4613 = vpop.f32.mrb[0].mxu0
      %v4614 = vadd.f32 0.0, %v4613
      %v4615 = vpop.f32.mrb[0].mxu0
      %4616 = vmatprep.mubr.bf16.mxu0 0
      %4617 = vmatmul.mubr.bf16.gmra.mrb[0].mxu0 %v4474
      %v4618 = vpop.f32.mrb[0].mxu0
      %v4619 = vadd.f32 0.0, %v4618
      %v4620 = vpop.f32.mrb[0].mxu0
      %v4621 = vpop.f32.mrb[0].mxu0
      %v4622 = vadd.f32 0.0, %v4621
      %v4623 = vpop.f32.mrb[0].mxu0
      %4624 = vmatprep.mubr.bf16.mxu0 0
      %4625 = vmatmul.mubr.bf16.gmra.mrb[0].mxu0 %v4477
      %v4626 = vpop.f32.mrb[0].mxu0
      %v4627 = vadd.f32 0.0, %v4626
      %v4628 = vpop.f32.mrb[0].mxu0
      %v4629 = vpop.f32.mrb[0].mxu0
      %v4630 = vadd.f32 0.0, %v4629
      %v4631 = vpop.f32.mrb[0].mxu0
      %4632 = vmatprep.mubr.bf16.mxu0 0
      %4633 = vmatmul.mubr.bf16.gmra.mrb[0].mxu0 %v4480
      %v4634 = vpop.f32.mrb[0].mxu0
      %v4635 = vadd.f32 0.0, %v4634
      %v4636 = vpop.f32.mrb[0].mxu0
      %v4637 = vpop.f32.mrb[0].mxu0
      %v4638 = vadd.f32 0.0, %v4637
      %v4639 = vpop.f32.mrb[0].mxu0
      %4640 = vmatprep.mubr.bf16.mxu0 0
      %4641 = vmatmul.mubr.bf16.gmra.mrb[0].mxu0 %v4483
      %v4642 = vpop.f32.mrb[0].mxu0
      %v4643 = vadd.f32 0.0, %v4642
      %v4644 = vpop.f32.mrb[0].mxu0
      %v4645 = vpop.f32.mrb[0].mxu0
      %v4646 = vadd.f32 0.0, %v4645
      %v4647 = vpop.f32.mrb[0].mxu0
      %4648 = vdwg.mxu0
      %v4649 = vadd.f32 %v4179, %v4523
      %v4650 = vadd.f32 %v4180, %v4526
      %v4651 = vadd.f32 %v4181, %v4531
      %v4652 = vadd.f32 %v4182, %v4534
      %v4653 = vadd.f32 %v4183, %v4539
      %v4654 = vadd.f32 %v4184, %v4542
      %v4655 = vadd.f32 %v4185, %v4547
      %v4656 = vadd.f32 %v4186, %v4550
      %v4657 = vadd.f32 %v4187, %v4555
      %v4658 = vadd.f32 %v4188, %v4558
      %v4659 = vadd.f32 %v4189, %v4563
      %v4660 = vadd.f32 %v4190, %v4566
      %v4661 = vadd.f32 %v4191, %v4571
      %v4662 = vadd.f32 %v4192, %v4574
      %v4663 = vadd.f32 %v4193, %v4579
      %v4664 = vadd.f32 %v4194, %v4582
      %v4665 = vadd.f32 %v4195, %v4587
      %v4666 = vadd.f32 %v4196, %v4590
      %v4667 = vadd.f32 %v4197, %v4595
      %v4668 = vadd.f32 %v4198, %v4598
      %v4669 = vadd.f32 %v4199, %v4603
      %v4670 = vadd.f32 %v4200, %v4606
      %v4671 = vadd.f32 %v4201, %v4611
      %v4672 = vadd.f32 %v4202, %v4614
      %v4673 = vadd.f32 %v4203, %v4619
      %v4674 = vadd.f32 %v4204, %v4622
      %v4675 = vadd.f32 %v4205, %v4627
      %v4676 = vadd.f32 %v4206, %v4630
      %v4677 = vadd.f32 %v4207, %v4635
      %v4678 = vadd.f32 %v4208, %v4638
      %v4679 = vadd.f32 %v4209, %v4643
      %v4680 = vadd.f32 %v4210, %v4646
      %s4681 = scalar_lea.vmem [#allocation2], 24
      %v4682 = vld [vmem:[%s4681] sm:$0xf]
      %v4683 = vld [vmem:[%s4681 + $0x4] sm:$0xf]
      %v4684 = vld [vmem:[%s4681 + $0xc] sm:$0xf]
      %v4685 = vld [vmem:[%s4681 + $0x10] sm:$0xf]
      %v4686 = vld [vmem:[%s4681 + $0x18] sm:$0xf]
      %v4687 = vld [vmem:[%s4681 + $0x1c] sm:$0xf]
      %v4688 = vld [vmem:[%s4681 + $0x24] sm:$0xf]
      %v4689 = vld [vmem:[%s4681 + $0x28] sm:$0xf]
      %v4690 = vld [vmem:[%s4681 + $0x30] sm:$0xf]
      %v4691 = vld [vmem:[%s4681 + $0x34] sm:$0xf]
      %v4692 = vld [vmem:[%s4681 + $0x3c] sm:$0xf]
      %v4693 = vld [vmem:[%s4681 + $0x40] sm:$0xf]
      %v4694 = vld [vmem:[%s4681 + $0x48] sm:$0xf]
      %v4695 = vld [vmem:[%s4681 + $0x4c] sm:$0xf]
      %v4696 = vld [vmem:[%s4681 + $0x54] sm:$0xf]
      %v4697 = vld [vmem:[%s4681 + $0x58] sm:$0xf]
      %v4698 = vld [vmem:[%s4681 + $0x60] sm:$0xf]
      %v4699 = vld [vmem:[%s4681 + $0x64] sm:$0xf]
      %v4700 = vld [vmem:[%s4681 + $0x6c] sm:$0xf]
      %v4701 = vld [vmem:[%s4681 + $0x70] sm:$0xf]
      %v4702 = vld [vmem:[%s4681 + $0x78] sm:$0xf]
      %v4703 = vld [vmem:[%s4681 + $0x7c] sm:$0xf]
      %v4704 = vld [vmem:[%s4681 + $0x84] sm:$0xf]
      %v4705 = vld [vmem:[%s4681 + $0x88] sm:$0xf]
      %v4706 = vld [vmem:[%s4681 + $0x90] sm:$0xf]
      %v4707 = vld [vmem:[%s4681 + $0x94] sm:$0xf]
      %v4708 = vld [vmem:[%s4681 + $0x9c] sm:$0xf]
      %v4709 = vld [vmem:[%s4681 + $0xa0] sm:$0xf]
      %v4710 = vld [vmem:[%s4681 + $0xa8] sm:$0xf]
      %v4711 = vld [vmem:[%s4681 + $0xac] sm:$0xf]
      %v4712 = vld [vmem:[%s4681 + $0xb4] sm:$0xf]
      %v4713 = vld [vmem:[%s4681 + $0xb8] sm:$0xf]
      %s4714 = scalar_lea.vmem %s5, 24
      %v4715 = vld [vmem:[%s4714] sm:$0xf]
      %v4748 = vunpack.c.l.b16 %v4682
      %v4749 = vunpack.c.l.b16 %v4683
      %v4750 = vunpack.c.l.b16 %v4684
      %v4751 = vunpack.c.l.b16 %v4685
      %v4752 = vunpack.c.l.b16 %v4686
      %v4753 = vunpack.c.l.b16 %v4687
      %v4754 = vunpack.c.l.b16 %v4688
      %v4755 = vunpack.c.l.b16 %v4689
      %v4756 = vunpack.c.l.b16 %v4690
      %v4757 = vunpack.c.l.b16 %v4691
      %v4758 = vunpack.c.l.b16 %v4692
      %v4759 = vunpack.c.l.b16 %v4693
      %v4760 = vunpack.c.l.b16 %v4694
      %v4761 = vunpack.c.l.b16 %v4695
      %v4762 = vunpack.c.l.b16 %v4696
      %v4763 = vunpack.c.l.b16 %v4697
      %v4764 = vunpack.c.l.b16 %v4698
      %v4765 = vunpack.c.l.b16 %v4699
      %v4766 = vunpack.c.l.b16 %v4700
      %v4767 = vunpack.c.l.b16 %v4701
      %v4768 = vunpack.c.l.b16 %v4702
      %v4769 = vunpack.c.l.b16 %v4703
      %v4770 = vunpack.c.l.b16 %v4704
      %v4771 = vunpack.c.l.b16 %v4705
      %v4772 = vunpack.c.l.b16 %v4706
      %v4773 = vunpack.c.l.b16 %v4707
      %v4774 = vunpack.c.l.b16 %v4708
      %v4775 = vunpack.c.l.b16 %v4709
      %v4776 = vunpack.c.l.b16 %v4710
      %v4777 = vunpack.c.l.b16 %v4711
      %v4778 = vunpack.c.l.b16 %v4712
      %v4779 = vunpack.c.l.b16 %v4713
      %v4780 = vpack.c.b16 %v4749, %v4748
      %v4781 = vpack.c.b16 %v4751, %v4750
      %v4782 = vpack.c.b16 %v4753, %v4752
      %v4783 = vpack.c.b16 %v4755, %v4754
      %v4784 = vpack.c.b16 %v4757, %v4756
      %v4785 = vpack.c.b16 %v4759, %v4758
      %v4786 = vpack.c.b16 %v4761, %v4760
      %v4787 = vpack.c.b16 %v4763, %v4762
      %v4788 = vpack.c.b16 %v4765, %v4764
      %v4789 = vpack.c.b16 %v4767, %v4766
      %v4790 = vpack.c.b16 %v4769, %v4768
      %v4791 = vpack.c.b16 %v4771, %v4770
      %v4792 = vpack.c.b16 %v4773, %v4772
      %v4793 = vpack.c.b16 %v4775, %v4774
      %v4794 = vpack.c.b16 %v4777, %v4776
      %v4795 = vpack.c.b16 %v4779, %v4778
      %v4797 = vsel %vm2164, %v4780, 0
      %v4800 = vsel %vm2164, %v4781, 0
      %v4803 = vsel %vm2164, %v4782, 0
      %v4806 = vsel %vm2164, %v4783, 0
      %v4809 = vsel %vm2164, %v4784, 0
      %v4812 = vsel %vm2164, %v4785, 0
      %v4815 = vsel %vm2164, %v4786, 0
      %v4818 = vsel %vm2164, %v4787, 0
      %v4821 = vsel %vm2164, %v4788, 0
      %v4824 = vsel %vm2164, %v4789, 0
      %v4827 = vsel %vm2164, %v4790, 0
      %v4830 = vsel %vm2164, %v4791, 0
      %v4833 = vsel %vm2164, %v4792, 0
      %v4836 = vsel %vm2164, %v4793, 0
      %v4839 = vsel %vm2164, %v4794, 0
      %v4842 = vsel %vm2164, %v4795, 0
      %v4845 = vsel %vm2213, %v4715, 0
      %4847 = vmatprep.subr.bf16.mxu0 0
      %4848 = vmatpush1.bf16.msra.mxu0 %v4845
      %4849 = vmatprep.subr.bf16.mxu0 0
      %4850 = vmatpush1.bf16.msra.mxu0 0
      %4851 = vmatprep.subr.bf16.mxu0 0
      %4852 = vmatpush1.bf16.msra.mxu0 0
      %4853 = vmatprep.subr.bf16.mxu0 0
      %4854 = vmatpush1.bf16.msra.mxu0 0
      %4855 = vmatprep.subr.bf16.mxu0 0
      %4856 = vmatpush1.bf16.msra.mxu0 0
      %4857 = vmatprep.subr.bf16.mxu0 0
      %4858 = vmatpush1.bf16.msra.mxu0 0
      %4859 = vmatprep.subr.bf16.mxu0 0
      %4860 = vmatpush1.bf16.msra.mxu0 0
      %4861 = vmatprep.subr.bf16.mxu0 0
      %4862 = vmatpush1.bf16.msra.mxu0 0
      %4863 = vmatprep.subr.bf16.mxu0 0
      %4864 = vmatpush1.bf16.msra.mxu0 0
      %4865 = vmatprep.subr.bf16.mxu0 0
      %4866 = vmatpush1.bf16.msra.mxu0 0
      %4867 = vmatprep.subr.bf16.mxu0 0
      %4868 = vmatpush1.bf16.msra.mxu0 0
      %4869 = vmatprep.subr.bf16.mxu0 0
      %4870 = vmatpush1.bf16.msra.mxu0 0
      %4871 = vmatprep.subr.bf16.mxu0 0
      %4872 = vmatpush1.bf16.msra.mxu0 0
      %4873 = vmatprep.subr.bf16.mxu0 0
      %4874 = vmatpush1.bf16.msra.mxu0 0
      %4875 = vmatprep.subr.bf16.mxu0 0
      %4876 = vmatpush1.bf16.msra.mxu0 0
      %4877 = vmatprep.subr.bf16.mxu0 0
      %4878 = vmatpush1.bf16.msra.mxu0 0
      %4879 = vmatprep.mubr.bf16.mxu0 0
      %4880 = vmatmul.mubr.bf16.gmra.mrb[0].mxu0 %v4797
      %v4881 = vpop.f32.mrb[0].mxu0
      %v4882 = vadd.f32 0.0, %v4881
      %v4883 = vpop.f32.mrb[0].mxu0
      %v4884 = vpop.f32.mrb[0].mxu0
      %v4885 = vadd.f32 0.0, %v4884
      %v4886 = vpop.f32.mrb[0].mxu0
      %4887 = vmatprep.mubr.bf16.mxu0 0
      %4888 = vmatmul.mubr.bf16.gmra.mrb[0].mxu0 %v4800
      %v4889 = vpop.f32.mrb[0].mxu0
      %v4890 = vadd.f32 0.0, %v4889
      %v4891 = vpop.f32.mrb[0].mxu0
      %v4892 = vpop.f32.mrb[0].mxu0
      %v4893 = vadd.f32 0.0, %v4892
      %v4894 = vpop.f32.mrb[0].mxu0
      %4895 = vmatprep.mubr.bf16.mxu0 0
      %4896 = vmatmul.mubr.bf16.gmra.mrb[0].mxu0 %v4803
      %v4897 = vpop.f32.mrb[0].mxu0
      %v4898 = vadd.f32 0.0, %v4897
      %v4899 = vpop.f32.mrb[0].mxu0
      %v4900 = vpop.f32.mrb[0].mxu0
      %v4901 = vadd.f32 0.0, %v4900
      %v4902 = vpop.f32.mrb[0].mxu0
      %4903 = vmatprep.mubr.bf16.mxu0 0
      %4904 = vmatmul.mubr.bf16.gmra.mrb[0].mxu0 %v4806
      %v4905 = vpop.f32.mrb[0].mxu0
      %v4906 = vadd.f32 0.0, %v4905
      %v4907 = vpop.f32.mrb[0].mxu0
      %v4908 = vpop.f32.mrb[0].mxu0
      %v4909 = vadd.f32 0.0, %v4908
      %v4910 = vpop.f32.mrb[0].mxu0
      %4911 = vmatprep.mubr.bf16.mxu0 0
      %4912 = vmatmul.mubr.bf16.gmra.mrb[0].mxu0 %v4809
      %v4913 = vpop.f32.mrb[0].mxu0
      %v4914 = vadd.f32 0.0, %v4913
      %v4915 = vpop.f32.mrb[0].mxu0
      %v4916 = vpop.f32.mrb[0].mxu0
      %v4917 = vadd.f32 0.0, %v4916
      %v4918 = vpop.f32.mrb[0].mxu0
      %4919 = vmatprep.mubr.bf16.mxu0 0
      %4920 = vmatmul.mubr.bf16.gmra.mrb[0].mxu0 %v4812
      %v4921 = vpop.f32.mrb[0].mxu0
      %v4922 = vadd.f32 0.0, %v4921
      %v4923 = vpop.f32.mrb[0].mxu0
      %v4924 = vpop.f32.mrb[0].mxu0
      %v4925 = vadd.f32 0.0, %v4924
      %v4926 = vpop.f32.mrb[0].mxu0
      %4927 = vmatprep.mubr.bf16.mxu0 0
      %4928 = vmatmul.mubr.bf16.gmra.mrb[0].mxu0 %v4815
      %v4929 = vpop.f32.mrb[0].mxu0
      %v4930 = vadd.f32 0.0, %v4929
      %v4931 = vpop.f32.mrb[0].mxu0
      %v4932 = vpop.f32.mrb[0].mxu0
      %v4933 = vadd.f32 0.0, %v4932
      %v4934 = vpop.f32.mrb[0].mxu0
      %4935 = vmatprep.mubr.bf16.mxu0 0
      %4936 = vmatmul.mubr.bf16.gmra.mrb[0].mxu0 %v4818
      %v4937 = vpop.f32.mrb[0].mxu0
      %v4938 = vadd.f32 0.0, %v4937
      %v4939 = vpop.f32.mrb[0].mxu0
      %v4940 = vpop.f32.mrb[0].mxu0
      %v4941 = vadd.f32 0.0, %v4940
      %v4942 = vpop.f32.mrb[0].mxu0
      %4943 = vmatprep.mubr.bf16.mxu0 0
      %4944 = vmatmul.mubr.bf16.gmra.mrb[0].mxu0 %v4821
      %v4945 = vpop.f32.mrb[0].mxu0
      %v4946 = vadd.f32 0.0, %v4945
      %v4947 = vpop.f32.mrb[0].mxu0
      %v4948 = vpop.f32.mrb[0].mxu0
      %v4949 = vadd.f32 0.0, %v4948
      %v4950 = vpop.f32.mrb[0].mxu0
      %4951 = vmatprep.mubr.bf16.mxu0 0
      %4952 = vmatmul.mubr.bf16.gmra.mrb[0].mxu0 %v4824
      %v4953 = vpop.f32.mrb[0].mxu0
      %v4954 = vadd.f32 0.0, %v4953
      %v4955 = vpop.f32.mrb[0].mxu0
      %v4956 = vpop.f32.mrb[0].mxu0
      %v4957 = vadd.f32 0.0, %v4956
      %v4958 = vpop.f32.mrb[0].mxu0
      %4959 = vmatprep.mubr.bf16.mxu0 0
      %4960 = vmatmul.mubr.bf16.gmra.mrb[0].mxu0 %v4827
      %v4961 = vpop.f32.mrb[0].mxu0
      %v4962 = vadd.f32 0.0, %v4961
      %v4963 = vpop.f32.mrb[0].mxu0
      %v4964 = vpop.f32.mrb[0].mxu0
      %v4965 = vadd.f32 0.0, %v4964
      %v4966 = vpop.f32.mrb[0].mxu0
      %4967 = vmatprep.mubr.bf16.mxu0 0
      %4968 = vmatmul.mubr.bf16.gmra.mrb[0].mxu0 %v4830
      %v4969 = vpop.f32.mrb[0].mxu0
      %v4970 = vadd.f32 0.0, %v4969
      %v4971 = vpop.f32.mrb[0].mxu0
      %v4972 = vpop.f32.mrb[0].mxu0
      %v4973 = vadd.f32 0.0, %v4972
      %v4974 = vpop.f32.mrb[0].mxu0
      %4975 = vmatprep.mubr.bf16.mxu0 0
      %4976 = vmatmul.mubr.bf16.gmra.mrb[0].mxu0 %v4833
      %v4977 = vpop.f32.mrb[0].mxu0
      %v4978 = vadd.f32 0.0, %v4977
      %v4979 = vpop.f32.mrb[0].mxu0
      %v4980 = vpop.f32.mrb[0].mxu0
      %v4981 = vadd.f32 0.0, %v4980
      %v4982 = vpop.f32.mrb[0].mxu0
      %4983 = vmatprep.mubr.bf16.mxu0 0
      %4984 = vmatmul.mubr.bf16.gmra.mrb[0].mxu0 %v4836
      %v4985 = vpop.f32.mrb[0].mxu0
      %v4986 = vadd.f32 0.0, %v4985
      %v4987 = vpop.f32.mrb[0].mxu0
      %v4988 = vpop.f32.mrb[0].mxu0
      %v4989 = vadd.f32 0.0, %v4988
      %v4990 = vpop.f32.mrb[0].mxu0
      %4991 = vmatprep.mubr.bf16.mxu0 0
      %4992 = vmatmul.mubr.bf16.gmra.mrb[0].mxu0 %v4839
      %v4993 = vpop.f32.mrb[0].mxu0
      %v4994 = vadd.f32 0.0, %v4993
      %v4995 = vpop.f32.mrb[0].mxu0
      %v4996 = vpop.f32.mrb[0].mxu0
      %v4997 = vadd.f32 0.0, %v4996
      %v4998 = vpop.f32.mrb[0].mxu0
      %4999 = vmatprep.mubr.bf16.mxu0 0
      %5000 = vmatmul.mubr.bf16.gmra.mrb[0].mxu0 %v4842
      %v5001 = vpop.f32.mrb[0].mxu0
      %v5002 = vadd.f32 0.0, %v5001
      %v5003 = vpop.f32.mrb[0].mxu0
      %v5004 = vpop.f32.mrb[0].mxu0
      %v5005 = vadd.f32 0.0, %v5004
      %v5006 = vpop.f32.mrb[0].mxu0
      %5007 = vdwg.mxu0
      %v5008 = vadd.f32 %v4649, %v4882
      %v5009 = vadd.f32 %v4650, %v4885
      %v5010 = vadd.f32 %v4651, %v4890
      %v5011 = vadd.f32 %v4652, %v4893
      %v5012 = vadd.f32 %v4653, %v4898
      %v5013 = vadd.f32 %v4654, %v4901
      %v5014 = vadd.f32 %v4655, %v4906
      %v5015 = vadd.f32 %v4656, %v4909
      %v5016 = vadd.f32 %v4657, %v4914
      %v5017 = vadd.f32 %v4658, %v4917
      %v5018 = vadd.f32 %v4659, %v4922
      %v5019 = vadd.f32 %v4660, %v4925
      %v5020 = vadd.f32 %v4661, %v4930
      %v5021 = vadd.f32 %v4662, %v4933
      %v5022 = vadd.f32 %v4663, %v4938
      %v5023 = vadd.f32 %v4664, %v4941
      %v5024 = vadd.f32 %v4665, %v4946
      %v5025 = vadd.f32 %v4666, %v4949
      %v5026 = vadd.f32 %v4667, %v4954
      %v5027 = vadd.f32 %v4668, %v4957
      %v5028 = vadd.f32 %v4669, %v4962
      %v5029 = vadd.f32 %v4670, %v4965
      %v5030 = vadd.f32 %v4671, %v4970
      %v5031 = vadd.f32 %v4672, %v4973
      %v5032 = vadd.f32 %v4673, %v4978
      %v5033 = vadd.f32 %v4674, %v4981
      %v5034 = vadd.f32 %v4675, %v4986
      %v5035 = vadd.f32 %v4676, %v4989
      %v5036 = vadd.f32 %v4677, %v4994
      %v5037 = vadd.f32 %v4678, %v4997
      %v5038 = vadd.f32 %v4679, %v5002
      %v5039 = vadd.f32 %v4680, %v5005
      %v5040 = vld [vmem:[%s4681] sm:$0xf]
      %v5041 = vld [vmem:[%s4681 + $0x4] sm:$0xf]
      %v5042 = vld [vmem:[%s4681 + $0x8] sm:$0x1]
      %v5043 = vld [vmem:[%s4681 + $0xc] sm:$0xf]
      %v5044 = vld [vmem:[%s4681 + $0x10] sm:$0xf]
      %v5045 = vld [vmem:[%s4681 + $0x14] sm:$0x1]
      %v5046 = vld [vmem:[%s4681 + $0x18] sm:$0xf]
      %v5047 = vld [vmem:[%s4681 + $0x1c] sm:$0xf]
      %v5048 = vld [vmem:[%s4681 + $0x20] sm:$0x1]
      %v5049 = vld [vmem:[%s4681 + $0x24] sm:$0xf]
      %v5050 = vld [vmem:[%s4681 + $0x28] sm:$0xf]
      %v5051 = vld [vmem:[%s4681 + $0x2c] sm:$0x1]
      %v5052 = vld [vmem:[%s4681 + $0x30] sm:$0xf]
      %v5053 = vld [vmem:[%s4681 + $0x34] sm:$0xf]
      %v5054 = vld [vmem:[%s4681 + $0x38] sm:$0x1]
      %v5055 = vld [vmem:[%s4681 + $0x3c] sm:$0xf]
      %v5056 = vld [vmem:[%s4681 + $0x40] sm:$0xf]
      %v5057 = vld [vmem:[%s4681 + $0x44] sm:$0x1]
      %v5058 = vld [vmem:[%s4681 + $0x48] sm:$0xf]
      %v5059 = vld [vmem:[%s4681 + $0x4c] sm:$0xf]
      %v5060 = vld [vmem:[%s4681 + $0x50] sm:$0x1]
      %v5061 = vld [vmem:[%s4681 + $0x54] sm:$0xf]
      %v5062 = vld [vmem:[%s4681 + $0x58] sm:$0xf]
      %v5063 = vld [vmem:[%s4681 + $0x5c] sm:$0x1]
      %v5064 = vld [vmem:[%s4681 + $0x60] sm:$0xf]
      %v5065 = vld [vmem:[%s4681 + $0x64] sm:$0xf]
      %v5066 = vld [vmem:[%s4681 + $0x68] sm:$0x1]
      %v5067 = vld [vmem:[%s4681 + $0x6c] sm:$0xf]
      %v5068 = vld [vmem:[%s4681 + $0x70] sm:$0xf]
      %v5069 = vld [vmem:[%s4681 + $0x74] sm:$0x1]
      %v5070 = vld [vmem:[%s4681 + $0x78] sm:$0xf]
      %v5071 = vld [vmem:[%s4681 + $0x7c] sm:$0xf]
      %v5072 = vld [vmem:[%s4681 + $0x80] sm:$0x1]
      %v5073 = vld [vmem:[%s4681 + $0x84] sm:$0xf]
      %v5074 = vld [vmem:[%s4681 + $0x88] sm:$0xf]
      %v5075 = vld [vmem:[%s4681 + $0x8c] sm:$0x1]
      %v5076 = vld [vmem:[%s4681 + $0x90] sm:$0xf]
      %v5077 = vld [vmem:[%s4681 + $0x94] sm:$0xf]
      %v5078 = vld [vmem:[%s4681 + $0x98] sm:$0x1]
      %v5079 = vld [vmem:[%s4681 + $0x9c] sm:$0xf]
      %v5080 = vld [vmem:[%s4681 + $0xa0] sm:$0xf]
      %v5081 = vld [vmem:[%s4681 + $0xa4] sm:$0x1]
      %v5082 = vld [vmem:[%s4681 + $0xa8] sm:$0xf]
      %v5083 = vld [vmem:[%s4681 + $0xac] sm:$0xf]
      %v5084 = vld [vmem:[%s4681 + $0xb0] sm:$0x1]
      %v5085 = vld [vmem:[%s4681 + $0xb4] sm:$0xf]
      %v5086 = vld [vmem:[%s4681 + $0xb8] sm:$0xf]
      %v5087 = vld [vmem:[%s4681 + $0xbc] sm:$0x1]
      %v5089 = vshrl.u32 %v5040, 16
      %v5091 = vrot.slane %v5089, 4
      %v5092 = vshll.u32 %v5040, 16
      %v5094 = vrot.slane %v5092, 5
      %v5095 = vor.u32 %v5091, %v5094
      %v5096 = vrot.slane %v5095, 4
      %v5098 = vshll.u32 %v5041, 16
      %v5100 = vrot.slane %v5098, 5
      %v5101 = vsel %vm1729, %v5096, %v5100
      %v5102 = vshrl.u32 %v5041, 16
      %v5104 = vrot.slane %v5102, 4
      %v5105 = vor.u32 %v5104, %v5100
      %v5106 = vrot.slane %v5105, 4
      %v5108 = vshll.u32 %v5042, 16
      %v5110 = vrot.slane %v5108, 5
      %v5111 = vsel %vm1729, %v5106, %v5110
      %v5113 = vshrl.u32 %v5043, 16
      %v5115 = vrot.slane %v5113, 4
      %v5116 = vshll.u32 %v5043, 16
      %v5118 = vrot.slane %v5116, 5
      %v5119 = vor.u32 %v5115, %v5118
      %v5120 = vrot.slane %v5119, 4
      %v5122 = vshll.u32 %v5044, 16
      %v5124 = vrot.slane %v5122, 5
      %v5125 = vsel %vm1729, %v5120, %v5124
      %v5126 = vshrl.u32 %v5044, 16
      %v5128 = vrot.slane %v5126, 4
      %v5129 = vor.u32 %v5128, %v5124
      %v5130 = vrot.slane %v5129, 4
      %v5132 = vshll.u32 %v5045, 16
      %v5134 = vrot.slane %v5132, 5
      %v5135 = vsel %vm1729, %v5130, %v5134
      %v5137 = vshrl.u32 %v5046, 16
      %v5139 = vrot.slane %v5137, 4
      %v5140 = vshll.u32 %v5046, 16
      %v5142 = vrot.slane %v5140, 5
      %v5143 = vor.u32 %v5139, %v5142
      %v5144 = vrot.slane %v5143, 4
      %v5146 = vshll.u32 %v5047, 16
      %v5148 = vrot.slane %v5146, 5
      %v5149 = vsel %vm1729, %v5144, %v5148
      %v5150 = vshrl.u32 %v5047, 16
      %v5152 = vrot.slane %v5150, 4
      %v5153 = vor.u32 %v5152, %v5148
      %v5154 = vrot.slane %v5153, 4
      %v5156 = vshll.u32 %v5048, 16
      %v5158 = vrot.slane %v5156, 5
      %v5159 = vsel %vm1729, %v5154, %v5158
      %v5161 = vshrl.u32 %v5049, 16
      %v5163 = vrot.slane %v5161, 4
      %v5164 = vshll.u32 %v5049, 16
      %v5166 = vrot.slane %v5164, 5
      %v5167 = vor.u32 %v5163, %v5166
      %v5168 = vrot.slane %v5167, 4
      %v5170 = vshll.u32 %v5050, 16
      %v5172 = vrot.slane %v5170, 5
      %v5173 = vsel %vm1729, %v5168, %v5172
      %v5174 = vshrl.u32 %v5050, 16
      %v5176 = vrot.slane %v5174, 4
      %v5177 = vor.u32 %v5176, %v5172
      %v5178 = vrot.slane %v5177, 4
      %v5180 = vshll.u32 %v5051, 16
      %v5182 = vrot.slane %v5180, 5
      %v5183 = vsel %vm1729, %v5178, %v5182
      %v5185 = vshrl.u32 %v5052, 16
      %v5187 = vrot.slane %v5185, 4
      %v5188 = vshll.u32 %v5052, 16
      %v5190 = vrot.slane %v5188, 5
      %v5191 = vor.u32 %v5187, %v5190
      %v5192 = vrot.slane %v5191, 4
      %v5194 = vshll.u32 %v5053, 16
      %v5196 = vrot.slane %v5194, 5
      %v5197 = vsel %vm1729, %v5192, %v5196
      %v5198 = vshrl.u32 %v5053, 16
      %v5200 = vrot.slane %v5198, 4
      %v5201 = vor.u32 %v5200, %v5196
      %v5202 = vrot.slane %v5201, 4
      %v5204 = vshll.u32 %v5054, 16
      %v5206 = vrot.slane %v5204, 5
      %v5207 = vsel %vm1729, %v5202, %v5206
      %v5209 = vshrl.u32 %v5055, 16
      %v5211 = vrot.slane %v5209, 4
      %v5212 = vshll.u32 %v5055, 16
      %v5214 = vrot.slane %v5212, 5
      %v5215 = vor.u32 %v5211, %v5214
      %v5216 = vrot.slane %v5215, 4
      %v5218 = vshll.u32 %v5056, 16
      %v5220 = vrot.slane %v5218, 5
      %v5221 = vsel %vm1729, %v5216, %v5220
      %v5222 = vshrl.u32 %v5056, 16
      %v5224 = vrot.slane %v5222, 4
      %v5225 = vor.u32 %v5224, %v5220
      %v5226 = vrot.slane %v5225, 4
      %v5228 = vshll.u32 %v5057, 16
      %v5230 = vrot.slane %v5228, 5
      %v5231 = vsel %vm1729, %v5226, %v5230
      %v5233 = vshrl.u32 %v5058, 16
      %v5235 = vrot.slane %v5233, 4
      %v5236 = vshll.u32 %v5058, 16
      %v5238 = vrot.slane %v5236, 5
      %v5239 = vor.u32 %v5235, %v5238
      %v5240 = vrot.slane %v5239, 4
      %v5242 = vshll.u32 %v5059, 16
      %v5244 = vrot.slane %v5242, 5
      %v5245 = vsel %vm1729, %v5240, %v5244
      %v5246 = vshrl.u32 %v5059, 16
      %v5248 = vrot.slane %v5246, 4
      %v5249 = vor.u32 %v5248, %v5244
      %v5250 = vrot.slane %v5249, 4
      %v5252 = vshll.u32 %v5060, 16
      %v5254 = vrot.slane %v5252, 5
      %v5255 = vsel %vm1729, %v5250, %v5254
      %v5257 = vshrl.u32 %v5061, 16
      %v5259 = vrot.slane %v5257, 4
      %v5260 = vshll.u32 %v5061, 16
      %v5262 = vrot.slane %v5260, 5
      %v5263 = vor.u32 %v5259, %v5262
      %v5264 = vrot.slane %v5263, 4
      %v5266 = vshll.u32 %v5062, 16
      %v5268 = vrot.slane %v5266, 5
      %v5269 = vsel %vm1729, %v5264, %v5268
      %v5270 = vshrl.u32 %v5062, 16
      %v5272 = vrot.slane %v5270, 4
      %v5273 = vor.u32 %v5272, %v5268
      %v5274 = vrot.slane %v5273, 4
      %v5276 = vshll.u32 %v5063, 16
      %v5278 = vrot.slane %v5276, 5
      %v5279 = vsel %vm1729, %v5274, %v5278
      %v5281 = vshrl.u32 %v5064, 16
      %v5283 = vrot.slane %v5281, 4
      %v5284 = vshll.u32 %v5064, 16
      %v5286 = vrot.slane %v5284, 5
      %v5287 = vor.u32 %v5283, %v5286
      %v5288 = vrot.slane %v5287, 4
      %v5290 = vshll.u32 %v5065, 16
      %v5292 = vrot.slane %v5290, 5
      %v5293 = vsel %vm1729, %v5288, %v5292
      %v5294 = vshrl.u32 %v5065, 16
      %v5296 = vrot.slane %v5294, 4
      %v5297 = vor.u32 %v5296, %v5292
      %v5298 = vrot.slane %v5297, 4
      %v5300 = vshll.u32 %v5066, 16
      %v5302 = vrot.slane %v5300, 5
      %v5303 = vsel %vm1729, %v5298, %v5302
      %v5305 = vshrl.u32 %v5067, 16
      %v5307 = vrot.slane %v5305, 4
      %v5308 = vshll.u32 %v5067, 16
      %v5310 = vrot.slane %v5308, 5
      %v5311 = vor.u32 %v5307, %v5310
      %v5312 = vrot.slane %v5311, 4
      %v5314 = vshll.u32 %v5068, 16
      %v5316 = vrot.slane %v5314, 5
      %v5317 = vsel %vm1729, %v5312, %v5316
      %v5318 = vshrl.u32 %v5068, 16
      %v5320 = vrot.slane %v5318, 4
      %v5321 = vor.u32 %v5320, %v5316
      %v5322 = vrot.slane %v5321, 4
      %v5324 = vshll.u32 %v5069, 16
      %v5326 = vrot.slane %v5324, 5
      %v5327 = vsel %vm1729, %v5322, %v5326
      %v5329 = vshrl.u32 %v5070, 16
      %v5331 = vrot.slane %v5329, 4
      %v5332 = vshll.u32 %v5070, 16
      %v5334 = vrot.slane %v5332, 5
      %v5335 = vor.u32 %v5331, %v5334
      %v5336 = vrot.slane %v5335, 4
      %v5338 = vshll.u32 %v5071, 16
      %v5340 = vrot.slane %v5338, 5
      %v5341 = vsel %vm1729, %v5336, %v5340
      %v5342 = vshrl.u32 %v5071, 16
      %v5344 = vrot.slane %v5342, 4
      %v5345 = vor.u32 %v5344, %v5340
      %v5346 = vrot.slane %v5345, 4
      %v5348 = vshll.u32 %v5072, 16
      %v5350 = vrot.slane %v5348, 5
      %v5351 = vsel %vm1729, %v5346, %v5350
      %v5353 = vshrl.u32 %v5073, 16
      %v5355 = vrot.slane %v5353, 4
      %v5356 = vshll.u32 %v5073, 16
      %v5358 = vrot.slane %v5356, 5
      %v5359 = vor.u32 %v5355, %v5358
      %v5360 = vrot.slane %v5359, 4
      %v5362 = vshll.u32 %v5074, 16
      %v5364 = vrot.slane %v5362, 5
      %v5365 = vsel %vm1729, %v5360, %v5364
      %v5366 = vshrl.u32 %v5074, 16
      %v5368 = vrot.slane %v5366, 4
      %v5369 = vor.u32 %v5368, %v5364
      %v5370 = vrot.slane %v5369, 4
      %v5372 = vshll.u32 %v5075, 16
      %v5374 = vrot.slane %v5372, 5
      %v5375 = vsel %vm1729, %v5370, %v5374
      %v5377 = vshrl.u32 %v5076, 16
      %v5379 = vrot.slane %v5377, 4
      %v5380 = vshll.u32 %v5076, 16
      %v5382 = vrot.slane %v5380, 5
      %v5383 = vor.u32 %v5379, %v5382
      %v5384 = vrot.slane %v5383, 4
      %v5386 = vshll.u32 %v5077, 16
      %v5388 = vrot.slane %v5386, 5
      %v5389 = vsel %vm1729, %v5384, %v5388
      %v5390 = vshrl.u32 %v5077, 16
      %v5392 = vrot.slane %v5390, 4
      %v5393 = vor.u32 %v5392, %v5388
      %v5394 = vrot.slane %v5393, 4
      %v5396 = vshll.u32 %v5078, 16
      %v5398 = vrot.slane %v5396, 5
      %v5399 = vsel %vm1729, %v5394, %v5398
      %v5401 = vshrl.u32 %v5079, 16
      %v5403 = vrot.slane %v5401, 4
      %v5404 = vshll.u32 %v5079, 16
      %v5406 = vrot.slane %v5404, 5
      %v5407 = vor.u32 %v5403, %v5406
      %v5408 = vrot.slane %v5407, 4
      %v5410 = vshll.u32 %v5080, 16
      %v5412 = vrot.slane %v5410, 5
      %v5413 = vsel %vm1729, %v5408, %v5412
      %v5414 = vshrl.u32 %v5080, 16
      %v5416 = vrot.slane %v5414, 4
      %v5417 = vor.u32 %v5416, %v5412
      %v5418 = vrot.slane %v5417, 4
      %v5420 = vshll.u32 %v5081, 16
      %v5422 = vrot.slane %v5420, 5
      %v5423 = vsel %vm1729, %v5418, %v5422
      %v5425 = vshrl.u32 %v5082, 16
      %v5427 = vrot.slane %v5425, 4
      %v5428 = vshll.u32 %v5082, 16
      %v5430 = vrot.slane %v5428, 5
      %v5431 = vor.u32 %v5427, %v5430
      %v5432 = vrot.slane %v5431, 4
      %v5434 = vshll.u32 %v5083, 16
      %v5436 = vrot.slane %v5434, 5
      %v5437 = vsel %vm1729, %v5432, %v5436
      %v5438 = vshrl.u32 %v5083, 16
      %v5440 = vrot.slane %v5438, 4
      %v5441 = vor.u32 %v5440, %v5436
      %v5442 = vrot.slane %v5441, 4
      %v5444 = vshll.u32 %v5084, 16
      %v5446 = vrot.slane %v5444, 5
      %v5447 = vsel %vm1729, %v5442, %v5446
      %v5449 = vshrl.u32 %v5085, 16
      %v5451 = vrot.slane %v5449, 4
      %v5452 = vshll.u32 %v5085, 16
      %v5454 = vrot.slane %v5452, 5
      %v5455 = vor.u32 %v5451, %v5454
      %v5456 = vrot.slane %v5455, 4
      %v5458 = vshll.u32 %v5086, 16
      %v5460 = vrot.slane %v5458, 5
      %v5461 = vsel %vm1729, %v5456, %v5460
      %v5462 = vshrl.u32 %v5086, 16
      %v5464 = vrot.slane %v5462, 4
      %v5465 = vor.u32 %v5464, %v5460
      %v5466 = vrot.slane %v5465, 4
      %v5468 = vshll.u32 %v5087, 16
      %v5470 = vrot.slane %v5468, 5
      %v5471 = vsel %vm1729, %v5466, %v5470
      %s5472 = scalar_lea.vmem %s5, 28
      %v5473 = vld [vmem:[%s5472] sm:$0xf]
      %v5474 = vunpack.c.l.b16 %v5101
      %v5475 = vunpack.c.l.b16 %v5111
      %v5476 = vunpack.c.l.b16 %v5125
      %v5477 = vunpack.c.l.b16 %v5135
      %v5478 = vunpack.c.l.b16 %v5149
      %v5479 = vunpack.c.l.b16 %v5159
      %v5480 = vunpack.c.l.b16 %v5173
      %v5481 = vunpack.c.l.b16 %v5183
      %v5482 = vunpack.c.l.b16 %v5197
      %v5483 = vunpack.c.l.b16 %v5207
      %v5484 = vunpack.c.l.b16 %v5221
      %v5485 = vunpack.c.l.b16 %v5231
      %v5486 = vunpack.c.l.b16 %v5245
      %v5487 = vunpack.c.l.b16 %v5255
      %v5488 = vunpack.c.l.b16 %v5269
      %v5489 = vunpack.c.l.b16 %v5279
      %v5490 = vunpack.c.l.b16 %v5293
      %v5491 = vunpack.c.l.b16 %v5303
      %v5492 = vunpack.c.l.b16 %v5317
      %v5493 = vunpack.c.l.b16 %v5327
      %v5494 = vunpack.c.l.b16 %v5341
      %v5495 = vunpack.c.l.b16 %v5351
      %v5496 = vunpack.c.l.b16 %v5365
      %v5497 = vunpack.c.l.b16 %v5375
      %v5498 = vunpack.c.l.b16 %v5389
      %v5499 = vunpack.c.l.b16 %v5399
      %v5500 = vunpack.c.l.b16 %v5413
      %v5501 = vunpack.c.l.b16 %v5423
      %v5502 = vunpack.c.l.b16 %v5437
      %v5503 = vunpack.c.l.b16 %v5447
      %v5504 = vunpack.c.l.b16 %v5461
      %v5505 = vunpack.c.l.b16 %v5471
      %v5506 = vpack.c.b16 %v5475, %v5474
      %v5507 = vpack.c.b16 %v5477, %v5476
      %v5508 = vpack.c.b16 %v5479, %v5478
      %v5509 = vpack.c.b16 %v5481, %v5480
      %v5510 = vpack.c.b16 %v5483, %v5482
      %v5511 = vpack.c.b16 %v5485, %v5484
      %v5512 = vpack.c.b16 %v5487, %v5486
      %v5513 = vpack.c.b16 %v5489, %v5488
      %v5514 = vpack.c.b16 %v5491, %v5490
      %v5515 = vpack.c.b16 %v5493, %v5492
      %v5516 = vpack.c.b16 %v5495, %v5494
      %v5517 = vpack.c.b16 %v5497, %v5496
      %v5518 = vpack.c.b16 %v5499, %v5498
      %v5519 = vpack.c.b16 %v5501, %v5500
      %v5520 = vpack.c.b16 %v5503, %v5502
      %v5521 = vpack.c.b16 %v5505, %v5504
      %v5523 = vsel %vm2164, %v5506, 0
      %v5526 = vsel %vm2164, %v5507, 0
      %v5529 = vsel %vm2164, %v5508, 0
      %v5532 = vsel %vm2164, %v5509, 0
      %v5535 = vsel %vm2164, %v5510, 0
      %v5538 = vsel %vm2164, %v5511, 0
      %v5541 = vsel %vm2164, %v5512, 0
      %v5544 = vsel %vm2164, %v5513, 0
      %v5547 = vsel %vm2164, %v5514, 0
      %v5550 = vsel %vm2164, %v5515, 0
      %v5553 = vsel %vm2164, %v5516, 0
      %v5556 = vsel %vm2164, %v5517, 0
      %v5559 = vsel %vm2164, %v5518, 0
      %v5562 = vsel %vm2164, %v5519, 0
      %v5565 = vsel %vm2164, %v5520, 0
      %v5568 = vsel %vm2164, %v5521, 0
      %v5571 = vsel %vm2213, %v5473, 0
      %5573 = vmatprep.subr.bf16.mxu0 0
      %5574 = vmatpush1.bf16.msra.mxu0 %v5571
      %5575 = vmatprep.subr.bf16.mxu0 0
      %5576 = vmatpush1.bf16.msra.mxu0 0
      %5577 = vmatprep.subr.bf16.mxu0 0
      %5578 = vmatpush1.bf16.msra.mxu0 0
      %5579 = vmatprep.subr.bf16.mxu0 0
      %5580 = vmatpush1.bf16.msra.mxu0 0
      %5581 = vmatprep.subr.bf16.mxu0 0
      %5582 = vmatpush1.bf16.msra.mxu0 0
      %5583 = vmatprep.subr.bf16.mxu0 0
      %5584 = vmatpush1.bf16.msra.mxu0 0
      %5585 = vmatprep.subr.bf16.mxu0 0
      %5586 = vmatpush1.bf16.msra.mxu0 0
      %5587 = vmatprep.subr.bf16.mxu0 0
      %5588 = vmatpush1.bf16.msra.mxu0 0
      %5589 = vmatprep.subr.bf16.mxu0 0
      %5590 = vmatpush1.bf16.msra.mxu0 0
      %5591 = vmatprep.subr.bf16.mxu0 0
      %5592 = vmatpush1.bf16.msra.mxu0 0
      %5593 = vmatprep.subr.bf16.mxu0 0
      %5594 = vmatpush1.bf16.msra.mxu0 0
      %5595 = vmatprep.subr.bf16.mxu0 0
      %5596 = vmatpush1.bf16.msra.mxu0 0
      %5597 = vmatprep.subr.bf16.mxu0 0
      %5598 = vmatpush1.bf16.msra.mxu0 0
      %5599 = vmatprep.subr.bf16.mxu0 0
      %5600 = vmatpush1.bf16.msra.mxu0 0
      %5601 = vmatprep.subr.bf16.mxu0 0
      %5602 = vmatpush1.bf16.msra.mxu0 0
      %5603 = vmatprep.subr.bf16.mxu0 0
      %5604 = vmatpush1.bf16.msra.mxu0 0
      %5605 = vmatprep.mubr.bf16.mxu0 0
      %5606 = vmatmul.mubr.bf16.gmra.mrb[0].mxu0 %v5523
      %v5607 = vpop.f32.mrb[0].mxu0
      %v5608 = vadd.f32 0.0, %v5607
      %v5609 = vpop.f32.mrb[0].mxu0
      %v5610 = vpop.f32.mrb[0].mxu0
      %v5611 = vadd.f32 0.0, %v5610
      %v5612 = vpop.f32.mrb[0].mxu0
      %5613 = vmatprep.mubr.bf16.mxu0 0
      %5614 = vmatmul.mubr.bf16.gmra.mrb[0].mxu0 %v5526
      %v5615 = vpop.f32.mrb[0].mxu0
      %v5616 = vadd.f32 0.0, %v5615
      %v5617 = vpop.f32.mrb[0].mxu0
      %v5618 = vpop.f32.mrb[0].mxu0
      %v5619 = vadd.f32 0.0, %v5618
      %v5620 = vpop.f32.mrb[0].mxu0
      %5621 = vmatprep.mubr.bf16.mxu0 0
      %5622 = vmatmul.mubr.bf16.gmra.mrb[0].mxu0 %v5529
      %v5623 = vpop.f32.mrb[0].mxu0
      %v5624 = vadd.f32 0.0, %v5623
      %v5625 = vpop.f32.mrb[0].mxu0
      %v5626 = vpop.f32.mrb[0].mxu0
      %v5627 = vadd.f32 0.0, %v5626
      %v5628 = vpop.f32.mrb[0].mxu0
      %5629 = vmatprep.mubr.bf16.mxu0 0
      %5630 = vmatmul.mubr.bf16.gmra.mrb[0].mxu0 %v5532
      %v5631 = vpop.f32.mrb[0].mxu0
      %v5632 = vadd.f32 0.0, %v5631
      %v5633 = vpop.f32.mrb[0].mxu0
      %v5634 = vpop.f32.mrb[0].mxu0
      %v5635 = vadd.f32 0.0, %v5634
      %v5636 = vpop.f32.mrb[0].mxu0
      %5637 = vmatprep.mubr.bf16.mxu0 0
      %5638 = vmatmul.mubr.bf16.gmra.mrb[0].mxu0 %v5535
      %v5639 = vpop.f32.mrb[0].mxu0
      %v5640 = vadd.f32 0.0, %v5639
      %v5641 = vpop.f32.mrb[0].mxu0
      %v5642 = vpop.f32.mrb[0].mxu0
      %v5643 = vadd.f32 0.0, %v5642
      %v5644 = vpop.f32.mrb[0].mxu0
      %5645 = vmatprep.mubr.bf16.mxu0 0
      %5646 = vmatmul.mubr.bf16.gmra.mrb[0].mxu0 %v5538
      %v5647 = vpop.f32.mrb[0].mxu0
      %v5648 = vadd.f32 0.0, %v5647
      %v5649 = vpop.f32.mrb[0].mxu0
      %v5650 = vpop.f32.mrb[0].mxu0
      %v5651 = vadd.f32 0.0, %v5650
      %v5652 = vpop.f32.mrb[0].mxu0
      %5653 = vmatprep.mubr.bf16.mxu0 0
      %5654 = vmatmul.mubr.bf16.gmra.mrb[0].mxu0 %v5541
      %v5655 = vpop.f32.mrb[0].mxu0
      %v5656 = vadd.f32 0.0, %v5655
      %v5657 = vpop.f32.mrb[0].mxu0
      %v5658 = vpop.f32.mrb[0].mxu0
      %v5659 = vadd.f32 0.0, %v5658
      %v5660 = vpop.f32.mrb[0].mxu0
      %5661 = vmatprep.mubr.bf16.mxu0 0
      %5662 = vmatmul.mubr.bf16.gmra.mrb[0].mxu0 %v5544
      %v5663 = vpop.f32.mrb[0].mxu0
      %v5664 = vadd.f32 0.0, %v5663
      %v5665 = vpop.f32.mrb[0].mxu0
      %v5666 = vpop.f32.mrb[0].mxu0
      %v5667 = vadd.f32 0.0, %v5666
      %v5668 = vpop.f32.mrb[0].mxu0
      %5669 = vmatprep.mubr.bf16.mxu0 0
      %5670 = vmatmul.mubr.bf16.gmra.mrb[0].mxu0 %v5547
      %v5671 = vpop.f32.mrb[0].mxu0
      %v5672 = vadd.f32 0.0, %v5671
      %v5673 = vpop.f32.mrb[0].mxu0
      %v5674 = vpop.f32.mrb[0].mxu0
      %v5675 = vadd.f32 0.0, %v5674
      %v5676 = vpop.f32.mrb[0].mxu0
      %5677 = vmatprep.mubr.bf16.mxu0 0
      %5678 = vmatmul.mubr.bf16.gmra.mrb[0].mxu0 %v5550
      %v5679 = vpop.f32.mrb[0].mxu0
      %v5680 = vadd.f32 0.0, %v5679
      %v5681 = vpop.f32.mrb[0].mxu0
      %v5682 = vpop.f32.mrb[0].mxu0
      %v5683 = vadd.f32 0.0, %v5682
      %v5684 = vpop.f32.mrb[0].mxu0
      %5685 = vmatprep.mubr.bf16.mxu0 0
      %5686 = vmatmul.mubr.bf16.gmra.mrb[0].mxu0 %v5553
      %v5687 = vpop.f32.mrb[0].mxu0
      %v5688 = vadd.f32 0.0, %v5687
      %v5689 = vpop.f32.mrb[0].mxu0
      %v5690 = vpop.f32.mrb[0].mxu0
      %v5691 = vadd.f32 0.0, %v5690
      %v5692 = vpop.f32.mrb[0].mxu0
      %5693 = vmatprep.mubr.bf16.mxu0 0
      %5694 = vmatmul.mubr.bf16.gmra.mrb[0].mxu0 %v5556
      %v5695 = vpop.f32.mrb[0].mxu0
      %v5696 = vadd.f32 0.0, %v5695
      %v5697 = vpop.f32.mrb[0].mxu0
      %v5698 = vpop.f32.mrb[0].mxu0
      %v5699 = vadd.f32 0.0, %v5698
      %v5700 = vpop.f32.mrb[0].mxu0
      %5701 = vmatprep.mubr.bf16.mxu0 0
      %5702 = vmatmul.mubr.bf16.gmra.mrb[0].mxu0 %v5559
      %v5703 = vpop.f32.mrb[0].mxu0
      %v5704 = vadd.f32 0.0, %v5703
      %v5705 = vpop.f32.mrb[0].mxu0
      %v5706 = vpop.f32.mrb[0].mxu0
      %v5707 = vadd.f32 0.0, %v5706
      %v5708 = vpop.f32.mrb[0].mxu0
      %5709 = vmatprep.mubr.bf16.mxu0 0
      %5710 = vmatmul.mubr.bf16.gmra.mrb[0].mxu0 %v5562
      %v5711 = vpop.f32.mrb[0].mxu0
      %v5712 = vadd.f32 0.0, %v5711
      %v5713 = vpop.f32.mrb[0].mxu0
      %v5714 = vpop.f32.mrb[0].mxu0
      %v5715 = vadd.f32 0.0, %v5714
      %v5716 = vpop.f32.mrb[0].mxu0
      %5717 = vmatprep.mubr.bf16.mxu0 0
      %5718 = vmatmul.mubr.bf16.gmra.mrb[0].mxu0 %v5565
      %v5719 = vpop.f32.mrb[0].mxu0
      %v5720 = vadd.f32 0.0, %v5719
      %v5721 = vpop.f32.mrb[0].mxu0
      %v5722 = vpop.f32.mrb[0].mxu0
      %v5723 = vadd.f32 0.0, %v5722
      %v5724 = vpop.f32.mrb[0].mxu0
      %5725 = vmatprep.mubr.bf16.mxu0 0
      %5726 = vmatmul.mubr.bf16.gmra.mrb[0].mxu0 %v5568
      %v5727 = vpop.f32.mrb[0].mxu0
      %v5728 = vadd.f32 0.0, %v5727
      %v5729 = vpop.f32.mrb[0].mxu0
      %v5730 = vpop.f32.mrb[0].mxu0
      %v5731 = vadd.f32 0.0, %v5730
      %v5732 = vpop.f32.mrb[0].mxu0
      %5733 = vdwg.mxu0
      %v5734 = vadd.f32 %v5008, %v5608
      %v5735 = vadd.f32 %v5009, %v5611
      %v5736 = vadd.f32 %v5010, %v5616
      %v5737 = vadd.f32 %v5011, %v5619
      %v5738 = vadd.f32 %v5012, %v5624
      %v5739 = vadd.f32 %v5013, %v5627
      %v5740 = vadd.f32 %v5014, %v5632
      %v5741 = vadd.f32 %v5015, %v5635
      %v5742 = vadd.f32 %v5016, %v5640
      %v5743 = vadd.f32 %v5017, %v5643
      %v5744 = vadd.f32 %v5018, %v5648
      %v5745 = vadd.f32 %v5019, %v5651
      %v5746 = vadd.f32 %v5020, %v5656
      %v5747 = vadd.f32 %v5021, %v5659
      %v5748 = vadd.f32 %v5022, %v5664
      %v5749 = vadd.f32 %v5023, %v5667
      %v5750 = vadd.f32 %v5024, %v5672
      %v5751 = vadd.f32 %v5025, %v5675
      %v5752 = vadd.f32 %v5026, %v5680
      %v5753 = vadd.f32 %v5027, %v5683
      %v5754 = vadd.f32 %v5028, %v5688
      %v5755 = vadd.f32 %v5029, %v5691
      %v5756 = vadd.f32 %v5030, %v5696
      %v5757 = vadd.f32 %v5031, %v5699
      %v5758 = vadd.f32 %v5032, %v5704
      %v5759 = vadd.f32 %v5033, %v5707
      %v5760 = vadd.f32 %v5034, %v5712
      %v5761 = vadd.f32 %v5035, %v5715
      %v5762 = vadd.f32 %v5036, %v5720
      %v5763 = vadd.f32 %v5037, %v5723
      %v5764 = vadd.f32 %v5038, %v5728
      %v5765 = vadd.f32 %v5039, %v5731
      %v5766 = vld [vmem:[%s4681] sm:$0xe]
      %v5767 = vld [vmem:[%s4681 + $0xc] sm:$0xe]
      %v5768 = vld [vmem:[%s4681 + $0x18] sm:$0xe]
      %v5769 = vld [vmem:[%s4681 + $0x24] sm:$0xe]
      %v5770 = vld [vmem:[%s4681 + $0x30] sm:$0xe]
      %v5771 = vld [vmem:[%s4681 + $0x3c] sm:$0xe]
      %v5772 = vld [vmem:[%s4681 + $0x48] sm:$0xe]
      %v5773 = vld [vmem:[%s4681 + $0x54] sm:$0xe]
      %v5774 = vld [vmem:[%s4681 + $0x60] sm:$0xe]
      %v5775 = vld [vmem:[%s4681 + $0x6c] sm:$0xe]
      %v5776 = vld [vmem:[%s4681 + $0x78] sm:$0xe]
      %v5777 = vld [vmem:[%s4681 + $0x84] sm:$0xe]
      %v5778 = vld [vmem:[%s4681 + $0x90] sm:$0xe]
      %v5779 = vld [vmem:[%s4681 + $0x9c] sm:$0xe]
      %v5780 = vld [vmem:[%s4681 + $0xa8] sm:$0xe]
      %v5781 = vld [vmem:[%s4681 + $0xb4] sm:$0xe]
      %v5830 = vrot.slane %v5766, 5
      %v5831 = vrot.slane %v5830, 4
      %v5832 = vrot.slane %v5041, 5
      %v5833 = vsel %vm2720, %v5831, %v5832
      %v5834 = vrot.slane %v5832, 4
      %v5835 = vrot.slane %v5042, 5
      %v5836 = vsel %vm2720, %v5834, %v5835
      %v5837 = vrot.slane %v5767, 5
      %v5838 = vrot.slane %v5837, 4
      %v5839 = vrot.slane %v5044, 5
      %v5840 = vsel %vm2720, %v5838, %v5839
      %v5841 = vrot.slane %v5839, 4
      %v5842 = vrot.slane %v5045, 5
      %v5843 = vsel %vm2720, %v5841, %v5842
      %v5844 = vrot.slane %v5768, 5
      %v5845 = vrot.slane %v5844, 4
      %v5846 = vrot.slane %v5047, 5
      %v5847 = vsel %vm2720, %v5845, %v5846
      %v5848 = vrot.slane %v5846, 4
      %v5849 = vrot.slane %v5048, 5
      %v5850 = vsel %vm2720, %v5848, %v5849
      %v5851 = vrot.slane %v5769, 5
      %v5852 = vrot.slane %v5851, 4
      %v5853 = vrot.slane %v5050, 5
      %v5854 = vsel %vm2720, %v5852, %v5853
      %v5855 = vrot.slane %v5853, 4
      %v5856 = vrot.slane %v5051, 5
      %v5857 = vsel %vm2720, %v5855, %v5856
      %v5858 = vrot.slane %v5770, 5
      %v5859 = vrot.slane %v5858, 4
      %v5860 = vrot.slane %v5053, 5
      %v5861 = vsel %vm2720, %v5859, %v5860
      %v5862 = vrot.slane %v5860, 4
      %v5863 = vrot.slane %v5054, 5
      %v5864 = vsel %vm2720, %v5862, %v5863
      %v5865 = vrot.slane %v5771, 5
      %v5866 = vrot.slane %v5865, 4
      %v5867 = vrot.slane %v5056, 5
      %v5868 = vsel %vm2720, %v5866, %v5867
      %v5869 = vrot.slane %v5867, 4
      %v5870 = vrot.slane %v5057, 5
      %v5871 = vsel %vm2720, %v5869, %v5870
      %v5872 = vrot.slane %v5772, 5
      %v5873 = vrot.slane %v5872, 4
      %v5874 = vrot.slane %v5059, 5
      %v5875 = vsel %vm2720, %v5873, %v5874
      %v5876 = vrot.slane %v5874, 4
      %v5877 = vrot.slane %v5060, 5
      %v5878 = vsel %vm2720, %v5876, %v5877
      %v5879 = vrot.slane %v5773, 5
      %v5880 = vrot.slane %v5879, 4
      %v5881 = vrot.slane %v5062, 5
      %v5882 = vsel %vm2720, %v5880, %v5881
      %v5883 = vrot.slane %v5881, 4
      %v5884 = vrot.slane %v5063, 5
      %v5885 = vsel %vm2720, %v5883, %v5884
      %v5886 = vrot.slane %v5774, 5
      %v5887 = vrot.slane %v5886, 4
      %v5888 = vrot.slane %v5065, 5
      %v5889 = vsel %vm2720, %v5887, %v5888
      %v5890 = vrot.slane %v5888, 4
      %v5891 = vrot.slane %v5066, 5
      %v5892 = vsel %vm2720, %v5890, %v5891
      %v5893 = vrot.slane %v5775, 5
      %v5894 = vrot.slane %v5893, 4
      %v5895 = vrot.slane %v5068, 5
      %v5896 = vsel %vm2720, %v5894, %v5895
      %v5897 = vrot.slane %v5895, 4
      %v5898 = vrot.slane %v5069, 5
      %v5899 = vsel %vm2720, %v5897, %v5898
      %v5900 = vrot.slane %v5776, 5
      %v5901 = vrot.slane %v5900, 4
      %v5902 = vrot.slane %v5071, 5
      %v5903 = vsel %vm2720, %v5901, %v5902
      %v5904 = vrot.slane %v5902, 4
      %v5905 = vrot.slane %v5072, 5
      %v5906 = vsel %vm2720, %v5904, %v5905
      %v5907 = vrot.slane %v5777, 5
      %v5908 = vrot.slane %v5907, 4
      %v5909 = vrot.slane %v5074, 5
      %v5910 = vsel %vm2720, %v5908, %v5909
      %v5911 = vrot.slane %v5909, 4
      %v5912 = vrot.slane %v5075, 5
      %v5913 = vsel %vm2720, %v5911, %v5912
      %v5914 = vrot.slane %v5778, 5
      %v5915 = vrot.slane %v5914, 4
      %v5916 = vrot.slane %v5077, 5
      %v5917 = vsel %vm2720, %v5915, %v5916
      %v5918 = vrot.slane %v5916, 4
      %v5919 = vrot.slane %v5078, 5
      %v5920 = vsel %vm2720, %v5918, %v5919
      %v5921 = vrot.slane %v5779, 5
      %v5922 = vrot.slane %v5921, 4
      %v5923 = vrot.slane %v5080, 5
      %v5924 = vsel %vm2720, %v5922, %v5923
      %v5925 = vrot.slane %v5923, 4
      %v5926 = vrot.slane %v5081, 5
      %v5927 = vsel %vm2720, %v5925, %v5926
      %v5928 = vrot.slane %v5780, 5
      %v5929 = vrot.slane %v5928, 4
      %v5930 = vrot.slane %v5083, 5
      %v5931 = vsel %vm2720, %v5929, %v5930
      %v5932 = vrot.slane %v5930, 4
      %v5933 = vrot.slane %v5084, 5
      %v5934 = vsel %vm2720, %v5932, %v5933
      %v5935 = vrot.slane %v5781, 5
      %v5936 = vrot.slane %v5935, 4
      %v5937 = vrot.slane %v5086, 5
      %v5938 = vsel %vm2720, %v5936, %v5937
      %v5939 = vrot.slane %v5937, 4
      %v5940 = vrot.slane %v5087, 5
      %v5941 = vsel %vm2720, %v5939, %v5940
      %s5942 = scalar_lea.vmem %s5, 32
      %v5943 = vld [vmem:[%s5942] sm:$0xf]
      %v5944 = vunpack.c.l.b16 %v5833
      %v5945 = vunpack.c.l.b16 %v5836
      %v5946 = vunpack.c.l.b16 %v5840
      %v5947 = vunpack.c.l.b16 %v5843
      %v5948 = vunpack.c.l.b16 %v5847
      %v5949 = vunpack.c.l.b16 %v5850
      %v5950 = vunpack.c.l.b16 %v5854
      %v5951 = vunpack.c.l.b16 %v5857
      %v5952 = vunpack.c.l.b16 %v5861
      %v5953 = vunpack.c.l.b16 %v5864
      %v5954 = vunpack.c.l.b16 %v5868
      %v5955 = vunpack.c.l.b16 %v5871
      %v5956 = vunpack.c.l.b16 %v5875
      %v5957 = vunpack.c.l.b16 %v5878
      %v5958 = vunpack.c.l.b16 %v5882
      %v5959 = vunpack.c.l.b16 %v5885
      %v5960 = vunpack.c.l.b16 %v5889
      %v5961 = vunpack.c.l.b16 %v5892
      %v5962 = vunpack.c.l.b16 %v5896
      %v5963 = vunpack.c.l.b16 %v5899
      %v5964 = vunpack.c.l.b16 %v5903
      %v5965 = vunpack.c.l.b16 %v5906
      %v5966 = vunpack.c.l.b16 %v5910
      %v5967 = vunpack.c.l.b16 %v5913
      %v5968 = vunpack.c.l.b16 %v5917
      %v5969 = vunpack.c.l.b16 %v5920
      %v5970 = vunpack.c.l.b16 %v5924
      %v5971 = vunpack.c.l.b16 %v5927
      %v5972 = vunpack.c.l.b16 %v5931
      %v5973 = vunpack.c.l.b16 %v5934
      %v5974 = vunpack.c.l.b16 %v5938
      %v5975 = vunpack.c.l.b16 %v5941
      %v5976 = vpack.c.b16 %v5945, %v5944
      %v5977 = vpack.c.b16 %v5947, %v5946
      %v5978 = vpack.c.b16 %v5949, %v5948
      %v5979 = vpack.c.b16 %v5951, %v5950
      %v5980 = vpack.c.b16 %v5953, %v5952
      %v5981 = vpack.c.b16 %v5955, %v5954
      %v5982 = vpack.c.b16 %v5957, %v5956
      %v5983 = vpack.c.b16 %v5959, %v5958
      %v5984 = vpack.c.b16 %v5961, %v5960
      %v5985 = vpack.c.b16 %v5963, %v5962
      %v5986 = vpack.c.b16 %v5965, %v5964
      %v5987 = vpack.c.b16 %v5967, %v5966
      %v5988 = vpack.c.b16 %v5969, %v5968
      %v5989 = vpack.c.b16 %v5971, %v5970
      %v5990 = vpack.c.b16 %v5973, %v5972
      %v5991 = vpack.c.b16 %v5975, %v5974
      %v5993 = vsel %vm2164, %v5976, 0
      %v5996 = vsel %vm2164, %v5977, 0
      %v5999 = vsel %vm2164, %v5978, 0
      %v6002 = vsel %vm2164, %v5979, 0
      %v6005 = vsel %vm2164, %v5980, 0
      %v6008 = vsel %vm2164, %v5981, 0
      %v6011 = vsel %vm2164, %v5982, 0
      %v6014 = vsel %vm2164, %v5983, 0
      %v6017 = vsel %vm2164, %v5984, 0
      %v6020 = vsel %vm2164, %v5985, 0
      %v6023 = vsel %vm2164, %v5986, 0
      %v6026 = vsel %vm2164, %v5987, 0
      %v6029 = vsel %vm2164, %v5988, 0
      %v6032 = vsel %vm2164, %v5989, 0
      %v6035 = vsel %vm2164, %v5990, 0
      %v6038 = vsel %vm2164, %v5991, 0
      %v6041 = vsel %vm2213, %v5943, 0
      %6043 = vmatprep.subr.bf16.mxu0 0
      %6044 = vmatpush1.bf16.msra.mxu0 %v6041
      %6045 = vmatprep.subr.bf16.mxu0 0
      %6046 = vmatpush1.bf16.msra.mxu0 0
      %6047 = vmatprep.subr.bf16.mxu0 0
      %6048 = vmatpush1.bf16.msra.mxu0 0
      %6049 = vmatprep.subr.bf16.mxu0 0
      %6050 = vmatpush1.bf16.msra.mxu0 0
      %6051 = vmatprep.subr.bf16.mxu0 0
      %6052 = vmatpush1.bf16.msra.mxu0 0
      %6053 = vmatprep.subr.bf16.mxu0 0
      %6054 = vmatpush1.bf16.msra.mxu0 0
      %6055 = vmatprep.subr.bf16.mxu0 0
      %6056 = vmatpush1.bf16.msra.mxu0 0
      %6057 = vmatprep.subr.bf16.mxu0 0
      %6058 = vmatpush1.bf16.msra.mxu0 0
      %6059 = vmatprep.subr.bf16.mxu0 0
      %6060 = vmatpush1.bf16.msra.mxu0 0
      %6061 = vmatprep.subr.bf16.mxu0 0
      %6062 = vmatpush1.bf16.msra.mxu0 0
      %6063 = vmatprep.subr.bf16.mxu0 0
      %6064 = vmatpush1.bf16.msra.mxu0 0
      %6065 = vmatprep.subr.bf16.mxu0 0
      %6066 = vmatpush1.bf16.msra.mxu0 0
      %6067 = vmatprep.subr.bf16.mxu0 0
      %6068 = vmatpush1.bf16.msra.mxu0 0
      %6069 = vmatprep.subr.bf16.mxu0 0
      %6070 = vmatpush1.bf16.msra.mxu0 0
      %6071 = vmatprep.subr.bf16.mxu0 0
      %6072 = vmatpush1.bf16.msra.mxu0 0
      %6073 = vmatprep.subr.bf16.mxu0 0
      %6074 = vmatpush1.bf16.msra.mxu0 0
      %6075 = vmatprep.mubr.bf16.mxu0 0
      %6076 = vmatmul.mubr.bf16.gmra.mrb[0].mxu0 %v5993
      %v6077 = vpop.f32.mrb[0].mxu0
      %v6078 = vadd.f32 0.0, %v6077
      %v6079 = vpop.f32.mrb[0].mxu0
      %v6080 = vpop.f32.mrb[0].mxu0
      %v6081 = vadd.f32 0.0, %v6080
      %v6082 = vpop.f32.mrb[0].mxu0
      %6083 = vmatprep.mubr.bf16.mxu0 0
      %6084 = vmatmul.mubr.bf16.gmra.mrb[0].mxu0 %v5996
      %v6085 = vpop.f32.mrb[0].mxu0
      %v6086 = vadd.f32 0.0, %v6085
      %v6087 = vpop.f32.mrb[0].mxu0
      %v6088 = vpop.f32.mrb[0].mxu0
      %v6089 = vadd.f32 0.0, %v6088
      %v6090 = vpop.f32.mrb[0].mxu0
      %6091 = vmatprep.mubr.bf16.mxu0 0
      %6092 = vmatmul.mubr.bf16.gmra.mrb[0].mxu0 %v5999
      %v6093 = vpop.f32.mrb[0].mxu0
      %v6094 = vadd.f32 0.0, %v6093
      %v6095 = vpop.f32.mrb[0].mxu0
      %v6096 = vpop.f32.mrb[0].mxu0
      %v6097 = vadd.f32 0.0, %v6096
      %v6098 = vpop.f32.mrb[0].mxu0
      %6099 = vmatprep.mubr.bf16.mxu0 0
      %6100 = vmatmul.mubr.bf16.gmra.mrb[0].mxu0 %v6002
      %v6101 = vpop.f32.mrb[0].mxu0
      %v6102 = vadd.f32 0.0, %v6101
      %v6103 = vpop.f32.mrb[0].mxu0
      %v6104 = vpop.f32.mrb[0].mxu0
      %v6105 = vadd.f32 0.0, %v6104
      %v6106 = vpop.f32.mrb[0].mxu0
      %6107 = vmatprep.mubr.bf16.mxu0 0
      %6108 = vmatmul.mubr.bf16.gmra.mrb[0].mxu0 %v6005
      %v6109 = vpop.f32.mrb[0].mxu0
      %v6110 = vadd.f32 0.0, %v6109
      %v6111 = vpop.f32.mrb[0].mxu0
      %v6112 = vpop.f32.mrb[0].mxu0
      %v6113 = vadd.f32 0.0, %v6112
      %v6114 = vpop.f32.mrb[0].mxu0
      %6115 = vmatprep.mubr.bf16.mxu0 0
      %6116 = vmatmul.mubr.bf16.gmra.mrb[0].mxu0 %v6008
      %v6117 = vpop.f32.mrb[0].mxu0
      %v6118 = vadd.f32 0.0, %v6117
      %v6119 = vpop.f32.mrb[0].mxu0
      %v6120 = vpop.f32.mrb[0].mxu0
      %v6121 = vadd.f32 0.0, %v6120
      %v6122 = vpop.f32.mrb[0].mxu0
      %6123 = vmatprep.mubr.bf16.mxu0 0
      %6124 = vmatmul.mubr.bf16.gmra.mrb[0].mxu0 %v6011
      %v6125 = vpop.f32.mrb[0].mxu0
      %v6126 = vadd.f32 0.0, %v6125
      %v6127 = vpop.f32.mrb[0].mxu0
      %v6128 = vpop.f32.mrb[0].mxu0
      %v6129 = vadd.f32 0.0, %v6128
      %v6130 = vpop.f32.mrb[0].mxu0
      %6131 = vmatprep.mubr.bf16.mxu0 0
      %6132 = vmatmul.mubr.bf16.gmra.mrb[0].mxu0 %v6014
      %v6133 = vpop.f32.mrb[0].mxu0
      %v6134 = vadd.f32 0.0, %v6133
      %v6135 = vpop.f32.mrb[0].mxu0
      %v6136 = vpop.f32.mrb[0].mxu0
      %v6137 = vadd.f32 0.0, %v6136
      %v6138 = vpop.f32.mrb[0].mxu0
      %6139 = vmatprep.mubr.bf16.mxu0 0
      %6140 = vmatmul.mubr.bf16.gmra.mrb[0].mxu0 %v6017
      %v6141 = vpop.f32.mrb[0].mxu0
      %v6142 = vadd.f32 0.0, %v6141
      %v6143 = vpop.f32.mrb[0].mxu0
      %v6144 = vpop.f32.mrb[0].mxu0
      %v6145 = vadd.f32 0.0, %v6144
      %v6146 = vpop.f32.mrb[0].mxu0
      %6147 = vmatprep.mubr.bf16.mxu0 0
      %6148 = vmatmul.mubr.bf16.gmra.mrb[0].mxu0 %v6020
      %v6149 = vpop.f32.mrb[0].mxu0
      %v6150 = vadd.f32 0.0, %v6149
      %v6151 = vpop.f32.mrb[0].mxu0
      %v6152 = vpop.f32.mrb[0].mxu0
      %v6153 = vadd.f32 0.0, %v6152
      %v6154 = vpop.f32.mrb[0].mxu0
      %6155 = vmatprep.mubr.bf16.mxu0 0
      %6156 = vmatmul.mubr.bf16.gmra.mrb[0].mxu0 %v6023
      %v6157 = vpop.f32.mrb[0].mxu0
      %v6158 = vadd.f32 0.0, %v6157
      %v6159 = vpop.f32.mrb[0].mxu0
      %v6160 = vpop.f32.mrb[0].mxu0
      %v6161 = vadd.f32 0.0, %v6160
      %v6162 = vpop.f32.mrb[0].mxu0
      %6163 = vmatprep.mubr.bf16.mxu0 0
      %6164 = vmatmul.mubr.bf16.gmra.mrb[0].mxu0 %v6026
      %v6165 = vpop.f32.mrb[0].mxu0
      %v6166 = vadd.f32 0.0, %v6165
      %v6167 = vpop.f32.mrb[0].mxu0
      %v6168 = vpop.f32.mrb[0].mxu0
      %v6169 = vadd.f32 0.0, %v6168
      %v6170 = vpop.f32.mrb[0].mxu0
      %6171 = vmatprep.mubr.bf16.mxu0 0
      %6172 = vmatmul.mubr.bf16.gmra.mrb[0].mxu0 %v6029
      %v6173 = vpop.f32.mrb[0].mxu0
      %v6174 = vadd.f32 0.0, %v6173
      %v6175 = vpop.f32.mrb[0].mxu0
      %v6176 = vpop.f32.mrb[0].mxu0
      %v6177 = vadd.f32 0.0, %v6176
      %v6178 = vpop.f32.mrb[0].mxu0
      %6179 = vmatprep.mubr.bf16.mxu0 0
      %6180 = vmatmul.mubr.bf16.gmra.mrb[0].mxu0 %v6032
      %v6181 = vpop.f32.mrb[0].mxu0
      %v6182 = vadd.f32 0.0, %v6181
      %v6183 = vpop.f32.mrb[0].mxu0
      %v6184 = vpop.f32.mrb[0].mxu0
      %v6185 = vadd.f32 0.0, %v6184
      %v6186 = vpop.f32.mrb[0].mxu0
      %6187 = vmatprep.mubr.bf16.mxu0 0
      %6188 = vmatmul.mubr.bf16.gmra.mrb[0].mxu0 %v6035
      %v6189 = vpop.f32.mrb[0].mxu0
      %v6190 = vadd.f32 0.0, %v6189
      %v6191 = vpop.f32.mrb[0].mxu0
      %v6192 = vpop.f32.mrb[0].mxu0
      %v6193 = vadd.f32 0.0, %v6192
      %v6194 = vpop.f32.mrb[0].mxu0
      %6195 = vmatprep.mubr.bf16.mxu0 0
      %6196 = vmatmul.mubr.bf16.gmra.mrb[0].mxu0 %v6038
      %v6197 = vpop.f32.mrb[0].mxu0
      %v6198 = vadd.f32 0.0, %v6197
      %v6199 = vpop.f32.mrb[0].mxu0
      %v6200 = vpop.f32.mrb[0].mxu0
      %v6201 = vadd.f32 0.0, %v6200
      %v6202 = vpop.f32.mrb[0].mxu0
      %6203 = vdwg.mxu0
      %v6204 = vadd.f32 %v5734, %v6078
      %v6205 = vadd.f32 %v5735, %v6081
      %v6206 = vadd.f32 %v5736, %v6086
      %v6207 = vadd.f32 %v5737, %v6089
      %v6208 = vadd.f32 %v5738, %v6094
      %v6209 = vadd.f32 %v5739, %v6097
      %v6210 = vadd.f32 %v5740, %v6102
      %v6211 = vadd.f32 %v5741, %v6105
      %v6212 = vadd.f32 %v5742, %v6110
      %v6213 = vadd.f32 %v5743, %v6113
      %v6214 = vadd.f32 %v5744, %v6118
      %v6215 = vadd.f32 %v5745, %v6121
      %v6216 = vadd.f32 %v5746, %v6126
      %v6217 = vadd.f32 %v5747, %v6129
      %v6218 = vadd.f32 %v5748, %v6134
      %v6219 = vadd.f32 %v5749, %v6137
      %v6220 = vadd.f32 %v5750, %v6142
      %v6221 = vadd.f32 %v5751, %v6145
      %v6222 = vadd.f32 %v5752, %v6150
      %v6223 = vadd.f32 %v5753, %v6153
      %v6224 = vadd.f32 %v5754, %v6158
      %v6225 = vadd.f32 %v5755, %v6161
      %v6226 = vadd.f32 %v5756, %v6166
      %v6227 = vadd.f32 %v5757, %v6169
      %v6228 = vadd.f32 %v5758, %v6174
      %v6229 = vadd.f32 %v5759, %v6177
      %v6230 = vadd.f32 %v5760, %v6182
      %v6231 = vadd.f32 %v5761, %v6185
      %v6232 = vadd.f32 %v5762, %v6190
      %v6233 = vadd.f32 %v5763, %v6193
      %v6234 = vadd.f32 %v5764, %v6198
      %v6235 = vadd.f32 %v5765, %v6201
      %v6236 = vld [vmem:[%s6] sm:$0x1]
      %v6238 = vlaneseq
      %v6239 = vshrl.u32 %v6238, 7
      %v6240 = vsub.s32 0, %v6239
      %v6241 = vrot.slane %v6236, %v6240
      %v6243 = vadd.f32 %v6204, %v6241
      %v6244 = vadd.f32 %v6205, %v6241
      %v6245 = vadd.f32 %v6206, %v6241
      %v6246 = vadd.f32 %v6207, %v6241
      %v6247 = vadd.f32 %v6208, %v6241
      %v6248 = vadd.f32 %v6209, %v6241
      %v6249 = vadd.f32 %v6210, %v6241
      %v6250 = vadd.f32 %v6211, %v6241
      %v6251 = vadd.f32 %v6212, %v6241
      %v6252 = vadd.f32 %v6213, %v6241
      %v6253 = vadd.f32 %v6214, %v6241
      %v6254 = vadd.f32 %v6215, %v6241
      %v6255 = vadd.f32 %v6216, %v6241
      %v6256 = vadd.f32 %v6217, %v6241
      %v6257 = vadd.f32 %v6218, %v6241
      %v6258 = vadd.f32 %v6219, %v6241
      %v6259 = vadd.f32 %v6220, %v6241
      %v6260 = vadd.f32 %v6221, %v6241
      %v6261 = vadd.f32 %v6222, %v6241
      %v6262 = vadd.f32 %v6223, %v6241
      %v6263 = vadd.f32 %v6224, %v6241
      %v6264 = vadd.f32 %v6225, %v6241
      %v6265 = vadd.f32 %v6226, %v6241
      %v6266 = vadd.f32 %v6227, %v6241
      %v6267 = vadd.f32 %v6228, %v6241
      %v6268 = vadd.f32 %v6229, %v6241
      %v6269 = vadd.f32 %v6230, %v6241
      %v6270 = vadd.f32 %v6231, %v6241
      %v6271 = vadd.f32 %v6232, %v6241
      %v6272 = vadd.f32 %v6233, %v6241
      %v6273 = vadd.f32 %v6234, %v6241
      %v6274 = vadd.f32 %v6235, %v6241
      %v6275 = vmax.f32 %v6243, 0.0
      %v6276 = vmax.f32 %v6244, 0.0
      %v6277 = vmax.f32 %v6245, 0.0
      %v6278 = vmax.f32 %v6246, 0.0
      %v6279 = vmax.f32 %v6247, 0.0
      %v6280 = vmax.f32 %v6248, 0.0
      %v6281 = vmax.f32 %v6249, 0.0
      %v6282 = vmax.f32 %v6250, 0.0
      %v6283 = vmax.f32 %v6251, 0.0
      %v6284 = vmax.f32 %v6252, 0.0
      %v6285 = vmax.f32 %v6253, 0.0
      %v6286 = vmax.f32 %v6254, 0.0
      %v6287 = vmax.f32 %v6255, 0.0
      %v6288 = vmax.f32 %v6256, 0.0
      %v6289 = vmax.f32 %v6257, 0.0
      %v6290 = vmax.f32 %v6258, 0.0
      %v6291 = vmax.f32 %v6259, 0.0
      %v6292 = vmax.f32 %v6260, 0.0
      %v6293 = vmax.f32 %v6261, 0.0
      %v6294 = vmax.f32 %v6262, 0.0
      %v6295 = vmax.f32 %v6263, 0.0
      %v6296 = vmax.f32 %v6264, 0.0
      %v6297 = vmax.f32 %v6265, 0.0
      %v6298 = vmax.f32 %v6266, 0.0
      %v6299 = vmax.f32 %v6267, 0.0
      %v6300 = vmax.f32 %v6268, 0.0
      %v6301 = vmax.f32 %v6269, 0.0
      %v6302 = vmax.f32 %v6270, 0.0
      %v6303 = vmax.f32 %v6271, 0.0
      %v6304 = vmax.f32 %v6272, 0.0
      %v6305 = vmax.f32 %v6273, 0.0
      %v6306 = vmax.f32 %v6274, 0.0
      %6307 = vst.msk [vmem:[%s298] sm:$0xff] %vm2164, %v6275
      %6308 = vst.msk [vmem:[%s298 + $0x8] sm:$0xff] %vm2164, %v6276
      %6309 = vst.msk [vmem:[%s298 + $0x10] sm:$0xff] %vm2164, %v6277
      %6310 = vst.msk [vmem:[%s298 + $0x18] sm:$0xff] %vm2164, %v6278
      %6311 = vst.msk [vmem:[%s298 + $0x20] sm:$0xff] %vm2164, %v6279
      %6312 = vst.msk [vmem:[%s298 + $0x28] sm:$0xff] %vm2164, %v6280
      %6313 = vst.msk [vmem:[%s298 + $0x30] sm:$0xff] %vm2164, %v6281
      %6314 = vst.msk [vmem:[%s298 + $0x38] sm:$0xff] %vm2164, %v6282
      %6315 = vst.msk [vmem:[%s298 + $0x40] sm:$0xff] %vm2164, %v6283
      %6316 = vst.msk [vmem:[%s298 + $0x48] sm:$0xff] %vm2164, %v6284
      %6317 = vst.msk [vmem:[%s298 + $0x50] sm:$0xff] %vm2164, %v6285
      %6318 = vst.msk [vmem:[%s298 + $0x58] sm:$0xff] %vm2164, %v6286
      %6319 = vst.msk [vmem:[%s298 + $0x60] sm:$0xff] %vm2164, %v6287
      %6320 = vst.msk [vmem:[%s298 + $0x68] sm:$0xff] %vm2164, %v6288
      %6321 = vst.msk [vmem:[%s298 + $0x70] sm:$0xff] %vm2164, %v6289
      %6322 = vst.msk [vmem:[%s298 + $0x78] sm:$0xff] %vm2164, %v6290
      %6323 = vst.msk [vmem:[%s298 + $0x80] sm:$0xff] %vm2164, %v6291
      %6324 = vst.msk [vmem:[%s298 + $0x88] sm:$0xff] %vm2164, %v6292
      %6325 = vst.msk [vmem:[%s298 + $0x90] sm:$0xff] %vm2164, %v6293
      %6326 = vst.msk [vmem:[%s298 + $0x98] sm:$0xff] %vm2164, %v6294
      %6327 = vst.msk [vmem:[%s298 + $0xa0] sm:$0xff] %vm2164, %v6295
      %6328 = vst.msk [vmem:[%s298 + $0xa8] sm:$0xff] %vm2164, %v6296
      %6329 = vst.msk [vmem:[%s298 + $0xb0] sm:$0xff] %vm2164, %v6297
      %6330 = vst.msk [vmem:[%s298 + $0xb8] sm:$0xff] %vm2164, %v6298
      %6331 = vst.msk [vmem:[%s298 + $0xc0] sm:$0xff] %vm2164, %v6299
      %6332 = vst.msk [vmem:[%s298 + $0xc8] sm:$0xff] %vm2164, %v6300
      %6333 = vst.msk [vmem:[%s298 + $0xd0] sm:$0xff] %vm2164, %v6301
      %6334 = vst.msk [vmem:[%s298 + $0xd8] sm:$0xff] %vm2164, %v6302
      %6335 = vst.msk [vmem:[%s298 + $0xe0] sm:$0xff] %vm2164, %v6303
      %6336 = vst.msk [vmem:[%s298 + $0xe8] sm:$0xff] %vm2164, %v6304
      %6337 = vst.msk [vmem:[%s298 + $0xf0] sm:$0xff] %vm2164, %v6305
      %6338 = vst.msk [vmem:[%s298 + $0xf8] sm:$0xff] %vm2164, %v6306
      %p6339 = scmp.lt.s32.totalorder %s18, 1
      %s6340 = scalar_select %p6339, %s18, 1
      %s6341 = smul.addr %s6340, 32
      %s6342 = smul.addr %s6341, 8
      %s6343 = scalar_lea.vmem %s7, %s6342
      // Predicated region
      $region49: #{hlayer_forward.1} parent=47 // pred_check
        %p6344 = pneg %p193
      $region50: #{hlayer_forward.1} parent=47 // pred_check_branch
        %6346 = sbr.rel (%p6344) target = $region52
      $region51: #{hlayer_forward.1} parent=47 // pred_region
        _
      $region52: #{hlayer_forward.1} parent=47 // pred_fallthru
        _
    $region48: #{hlayer_forward.1} parent=5 // pred_fallthru
      _
    %p6347 = scmp.le.s32.totalorder 2, %s13
    // Predicated region
    $region53: #{hlayer_forward.1} parent=5 // pred_check
      %p6348 = pneg %p6347
    $region54: #{hlayer_forward.1} parent=5 // pred_check_branch
      %6350 = sbr.rel (%p6348) target = $region56
    $region55: #{hlayer_forward.1} parent=5 // pred_region
      %s6351 = ssub.s32 %s13, 2
      // Predicated region
      $region57: #{hlayer_forward.1} parent=55 // pred_check
        %p6352 = pneg %p199
      $region58: #{hlayer_forward.1} parent=55 // pred_check_branch
        %6354 = sbr.rel (%p6352) target = $region60
      $region59: #{hlayer_forward.1} parent=55 // pred_region
        %p6355 = scmp.lt.s32.totalorder %s19, 1
        %s6356 = scalar_select %p6355, %s19, 1
        %s6357 = smul.addr %s6356, 32
        %s6358 = smul.addr %s6357, 8
        %s6359 = scalar_lea.vmem %s7, %s6358
      $region60: #{hlayer_forward.1} parent=55 // pred_fallthru
        _
    $region56: #{hlayer_forward.1} parent=5 // pred_fallthru
      _
  $region6: #{hlayer_forward.1} parent=0 // loop_footer
    %s17 = sadd.s32 1, %s13
  $region7: #{hlayer_forward.1} parent=0 // loop_footer_branch
    %12 = sbr.rel target = $region3
  $region8: #{hlayer_forward.1} parent=0 // loop_exit
    _

</llo_original>
